<compile_context>
chip_gen: v7x
topology: tpu7x:2x2x1
jax: 0.10.0
libtpu: 0.0.40
codegen_flags: <defaults>
</compile_context>

<pallas_src>
import functools
import math

import jax
import jax.numpy as jnp
from jax.experimental import pallas as pl
from jax.experimental.pallas import tpu as pltpu

NEG_INF = -1e30          # finite "minus infinity": no NaN for fully padded key rows
APPROX_RECIPROCAL = True  # EUP approximate reciprocal in softmax (set False for exact)


# ----------------------------------------------------------------------------
# Shared math helpers
# ----------------------------------------------------------------------------
def _layer_norm(y, gamma, beta, eps=1e-5):
    mean = jnp.mean(y, axis=-1, keepdims=True)
    var = jnp.mean((y - mean) ** 2, axis=-1, keepdims=True)
    return (y - mean) * jax.lax.rsqrt(var + eps) * gamma + beta


def _round_up(x, m):
    return ((x + m - 1) // m) * m


# Order in which the stacked per-layer weights are passed to the kernel.
_W_KEYS = (
    "s_wqkv", "s_bqkv", "s_wo", "s_bo", "s_g", "s_b",                 # self-attention
    "e_wq", "e_bq", "e_wkv", "e_bkv", "e_wo", "e_bo", "e_g", "e_b",   # enc-dec attn
    "f_w1", "f_b1", "f_w2", "f_b2", "f_g", "f_b",                     # position-wise FFN
)


# ----------------------------------------------------------------------------
# In-kernel attention sub-layer (residual + post-LayerNorm + non-pad mask)
#   q    : (Bt, Lq, H*dk) f32, already scaled by 1/sqrt(dk) via folded Q weights
#   k    : (Bt, Lk, H*dk) f32,  v: (Bt, Lk, H*dv) f32
#   kbias: (Bt, 1,  Lk)  f32 additive key-pad bias (0 or NEG_INF, pre-scaled)
#   resid: (Bt, Lq, D)   f32,  npm: (Bt, Lq, 1) f32 non-pad mask
# ----------------------------------------------------------------------------
def _attention(q, k, v, kbias, resid, npm, wo, bo, g, b, *, n_head, d_k, d_v):
    bf = jnp.bfloat16
    Bt, Lq, _ = q.shape
    qb, kb, vb = q.astype(bf), k.astype(bf), v.astype(bf)
    outs = []
    for h in range(n_head):                        # static unroll over heads
        qh = qb[..., h * d_k:(h + 1) * d_k]
        kh = kb[..., h * d_k:(h + 1) * d_k]
        vh = vb[..., h * d_v:(h + 1) * d_v]
        # Batch(Bt)-vectorized scores; contraction on the last dim (no k.T).
        s = jnp.einsum("bqd,bkd->bqk", qh, kh, preferred_element_type=jnp.float32)
        s = s + kbias                              # additive key-pad bias (finite)
        s = s - jnp.max(s, axis=-1, keepdims=True)
        p = jnp.exp(s)
        denom = jnp.sum(p, axis=-1, keepdims=True)
        if APPROX_RECIPROCAL:
            p = p * pl.reciprocal(denom, approx=True)
        else:
            p = p / denom
        outs.append(jnp.einsum("bqk,bkd->bqd", p.astype(bf), vh,
                               preferred_element_type=jnp.float32))
    cat = jnp.concatenate(outs, axis=-1)           # (Bt, Lq, H*dv)
    o = jnp.dot(cat.reshape(Bt * Lq, n_head * d_v).astype(bf), wo,
                preferred_element_type=jnp.float32) + bo
    o = o.reshape(Bt, Lq, -1)
    return _layer_norm(o + resid, g, b) * npm


# ----------------------------------------------------------------------------
# Fused decoder kernel: one grid step = (one batch tile, one decoder layer).
# out_ref doubles as the VMEM-resident layer carry.
# ----------------------------------------------------------------------------
def decoder_stack_kernel(x_ref, enc_ref, tkp_ref, skp_ref, npm_ref,
                         s_wqkv, s_bqkv, s_wo, s_bo, s_g, s_b,
                         e_wq, e_bq, e_wkv, e_bkv, e_wo, e_bo, e_g, e_b,
                         f_w1, f_b1, f_w2, f_b2, f_g, f_b,
                         out_ref, *, n_head, d_k, d_v):
    l = pl.program_id(1)
    bf = jnp.bfloat16
    H, Dk = n_head, d_k
    Bt, Lq, D = out_ref.shape
    Lk = enc_ref.shape[1]

    @pl.when(l == 0)
    def _():                                       # first layer of this batch tile
        out_ref[...] = x_ref[...]

    # out_ref's block index is constant over the layer axis -> it stays resident
    # in VMEM across all layers and is only DMA'd to HBM once per batch tile.
    x = out_ref[...]                               # (Bt, Lq, D) f32
    npm = npm_ref[...]                             # (Bt, Lq, 1)
    tkb = tkp_ref[...]                             # (Bt, 1, Lq) additive bias
    skb = skp_ref[...]                             # (Bt, 1, Lk) additive bias

    # ---- self-attention: fused Q|K|V projection over all Bt*Lq rows ----
    xf = x.reshape(Bt * Lq, D)
    qkv = (jnp.dot(xf.astype(bf), s_wqkv[0],
                   preferred_element_type=jnp.float32) + s_bqkv[0])
    qkv = qkv.reshape(Bt, Lq, 3 * H * Dk)
    x = _attention(qkv[..., :H * Dk], qkv[..., H * Dk:2 * H * Dk],
                   qkv[..., 2 * H * Dk:], tkb, x, npm,
                   s_wo[0], s_bo[0], s_g[0], s_b[0],
                   n_head=n_head, d_k=d_k, d_v=d_v)

    # ---- encoder-decoder attention: fused K|V projection of enc_output ----
    xf = x.reshape(Bt * Lq, D)
    q = (jnp.dot(xf.astype(bf), e_wq[0],
                 preferred_element_type=jnp.float32) + e_bq[0]).reshape(Bt, Lq, H * Dk)
    encf = enc_ref[...].reshape(Bt * Lk, D)
    kv = (jnp.dot(encf.astype(bf), e_wkv[0],
                  preferred_element_type=jnp.float32) + e_bkv[0]).reshape(Bt, Lk, -1)
    x = _attention(q, kv[..., :H * Dk], kv[..., H * Dk:], skb, x, npm,
                   e_wo[0], e_bo[0], e_g[0], e_b[0],
                   n_head=n_head, d_k=d_k, d_v=d_v)

    # ---- position-wise FFN (Conv1d(kernel_size=1) == matmul over features) ----
    xf = x.reshape(Bt * Lq, D)
    hid = jnp.maximum(jnp.dot(xf.astype(bf), f_w1[0],
                              preferred_element_type=jnp.float32) + f_b1[0], 0.0)
    o = jnp.dot(hid.astype(bf), f_w2[0],
                preferred_element_type=jnp.float32) + f_b2[0]
    x = _layer_norm(o.reshape(Bt, Lq, D) + x, f_g[0], f_b[0]) * npm

    out_ref[...] = x.astype(out_ref.dtype)         # carry to the next layer in VMEM


# ----------------------------------------------------------------------------
# Tiling / VMEM heuristics
# ----------------------------------------------------------------------------
def _pick_batch_tile(B, lt_padded):
    # Fill an MXU pass: target ~256 activation rows per projection matmul
    # (two 128-row passes on v5e's 128-wide MXU).
    bt = max(1, min(B, 256 // max(lt_padded, 1)))
    # Keep at least two batch tiles (when B allows) so the "parallel" batch
    # axis can load-balance v7x's two TensorCores; on 1-TC chips this only
    # costs one extra streaming of the weight stack.
    if bt == B and B > 1:
        bt = (B + 1) // 2
    return bt


def _pick_vmem_limit():
    # ~3/4 of the chip's VMEM: ~96 MiB on v5e/v6e (128 MiB), ~48 MiB on v7x (64 MiB).
    try:
        cap = int(pltpu.get_tpu_info().vmem_capacity_bytes)
    except Exception:
        cap = 64 * 1024 * 1024
    return max(16 * 1024 * 1024, min(cap * 3 // 4, 100 * 1024 * 1024))


# ----------------------------------------------------------------------------
# Wrapper: single pallas_call for the whole decoder stack
# ----------------------------------------------------------------------------
def decoder_forward(prep, tgt_seq, tgt_pos, src_seq, enc_output, *,
                    n_head, d_k, d_v, block_b=None):
    # tgt_pos is unused (the PositionalEncoding module ignores it in forward)
    del tgt_pos
    B, Lt = tgt_seq.shape
    Ls = src_seq.shape[1]
    D = prep["emb"].shape[1]
    n_layers = prep["s_wqkv"].shape[0]

    # Sublane-friendly padding: sequence lengths to multiples of 8.  Padded
    # positions are PAD tokens handled by the masks, so real outputs are
    # unchanged.  (Feature dims are left as-is: for realistic d_model >= 512
    # they are already lane-dense; padding them here would require a masked
    # LayerNorm.)  TODO(synk): lane-pad feature dims + masked LayerNorm for
    # small d_model.
    Ltp, Lsp = _round_up(Lt, 8), _round_up(Ls, 8)
    bt = block_b if block_b is not None else _pick_batch_tile(B, Ltp)
    Bp = _round_up(B, bt)

    tgt_p = jnp.pad(tgt_seq, ((0, Bp - B), (0, Ltp - Lt)))            # PAD = 0
    src_p = jnp.pad(src_seq, ((0, Bp - B), (0, Lsp - Ls)))
    enc_p = jnp.pad(enc_output, ((0, Bp - B), (0, Lsp - Ls), (0, 0))).astype(jnp.float32)

    # Key-pad masks pre-scaled by NEG_INF (additive biases) + non-pad mask.
    tkb = (tgt_p == 0).astype(jnp.float32)[:, None, :] * NEG_INF      # (Bp, 1, Ltp)
    skb = (src_p == 0).astype(jnp.float32)[:, None, :] * NEG_INF      # (Bp, 1, Lsp)
    npm = (tgt_p != 0).astype(jnp.float32)[:, :, None]                # (Bp, Ltp, 1)

    # Embedding * sqrt(d_model) + sinusoidal positional encoding (gather glue in JAX).
    pe = prep["pe"][:Lt]
    if Ltp > Lt:
        pe = jnp.pad(pe, ((0, Ltp - Lt), (0, 0)))
    x = prep["emb"][tgt_p] * math.sqrt(D) + pe[None, :, :]

    kern = functools.partial(decoder_stack_kernel, n_head=n_head, d_k=d_k, d_v=d_v)

    def act_spec(a):     # batch-tiled activation block, constant over the layer axis
        return pl.BlockSpec((bt,) + a.shape[1:],
                            lambda b, l, _nd=a.ndim: (b,) + (0,) * (_nd - 1))

    def layer_spec(w):   # stacked per-layer weights, selected by the layer grid index
        return pl.BlockSpec((1,) + w.shape[1:],
                            lambda b, l, _nd=w.ndim: (l,) + (0,) * (_nd - 1))

    weights = [prep[name] for name in _W_KEYS]
    in_specs = ([act_spec(x), act_spec(enc_p), act_spec(tkb), act_spec(skb), act_spec(npm)]
                + [layer_spec(w) for w in weights])

    out = pl.pallas_call(
        kern,
        out_shape=jax.ShapeDtypeStruct((Bp, Ltp, D), jnp.float32),
        grid=(Bp // bt, n_layers),
        in_specs=in_specs,
        out_specs=pl.BlockSpec((bt, Ltp, D), lambda b, l: (b, 0, 0)),
        compiler_params=pltpu.CompilerParams(
            dimension_semantics=("parallel", "arbitrary"),
            vmem_limit_bytes=_pick_vmem_limit()),
    )(x, enc_p, tkb, skb, npm, *weights)
    return (out[:B, :Lt, :],)


# ----------------------------------------------------------------------------
# Parameter construction (deterministic, synthetic, PyTorch-shaped) + prepare
# ----------------------------------------------------------------------------
def sinusoid_table(n_position, d_model):
    pos = jnp.arange(n_position, dtype=jnp.float32)[:, None]
    i = jnp.arange(0, d_model, 2, dtype=jnp.float32)
    div = jnp.exp(i * (-math.log(10000.0) / d_model))
    pe = jnp.zeros((n_position, d_model), jnp.float32)
    pe = pe.at[:, 0::2].set(jnp.sin(pos * div))
    pe = pe.at[:, 1::2].set(jnp.cos(pos * div))
    return pe


def init_decoder_params(key, *, n_vocab, len_max_seq, d_model, d_inner,
                        n_layers, n_head, d_k, d_v):
    keys = jax.random.split(key, 1 + n_layers)
    emb = 0.1 * jax.random.normal(keys[0], (n_vocab, d_model), jnp.float32)
    emb = emb.at[0].set(0.0)  # padding_idx = 0

    def attn_params(k):
        ks = jax.random.split(k, 10)
        return dict(
            wq=0.1 * jax.random.normal(ks[0], (d_model, n_head * d_k), jnp.float32),
            wk=0.1 * jax.random.normal(ks[1], (d_model, n_head * d_k), jnp.float32),
            wv=0.1 * jax.random.normal(ks[2], (d_model, n_head * d_v), jnp.float32),
            wo=0.1 * jax.random.normal(ks[3], (n_head * d_v, d_model), jnp.float32),
            bq=0.05 * jax.random.normal(ks[4], (1, n_head * d_k), jnp.float32),
            bk=0.05 * jax.random.normal(ks[5], (1, n_head * d_k), jnp.float32),
            bv=0.05 * jax.random.normal(ks[6], (1, n_head * d_v), jnp.float32),
            bo=0.05 * jax.random.normal(ks[7], (1, d_model), jnp.float32),
            g=1.0 + 0.1 * jax.random.normal(ks[8], (1, d_model), jnp.float32),
            b=0.1 * jax.random.normal(ks[9], (1, d_model), jnp.float32))

    def ffn_params(k):
        ks = jax.random.split(k, 6)
        return dict(
            w1=0.1 * jax.random.normal(ks[0], (d_model, d_inner), jnp.float32),
            w2=0.1 * jax.random.normal(ks[1], (d_inner, d_model), jnp.float32),
            b1=0.05 * jax.random.normal(ks[2], (1, d_inner), jnp.float32),
            b2=0.05 * jax.random.normal(ks[3], (1, d_model), jnp.float32),
            g=1.0 + 0.1 * jax.random.normal(ks[4], (1, d_model), jnp.float32),
            b=0.1 * jax.random.normal(ks[5], (1, d_model), jnp.float32))

    layers = []
    for li in range(n_layers):
        lk = jax.random.split(keys[1 + li], 3)
        layers.append({"slf": attn_params(lk[0]), "enc": attn_params(lk[1]),
                       "ffn": ffn_params(lk[2])})
    return {"emb": emb, "pe": sinusoid_table(len_max_seq + 1, d_model), "layers": layers}


def prepare_params(raw, *, n_head, d_k, d_v):
    """Fuse / stack / cast the per-layer weights for the fused decoder kernel.

    - self-attn Q|K|V (and enc-dec K|V) weights/biases are concatenated so the
      kernel does one wide matmul + one bias add per projection group;
    - the 1/sqrt(d_k) attention temperature is folded into the Q weights/biases;
    - everything is stacked on a leading `layer` axis (selected via index_map);
    - matmul weights are bfloat16 (f32 MXU accumulation in-kernel), biases and
      LayerNorm parameters stay float32.
    """
    del d_v
    inv_t = 1.0 / math.sqrt(d_k)
    bf = jnp.bfloat16
    f32 = jnp.float32

    def stack(fn, dtype):
        return jnp.stack([fn(L) for L in raw["layers"]], axis=0).astype(dtype)

    return {
        "emb": raw["emb"], "pe": raw["pe"],
        # self-attention
        "s_wqkv": stack(lambda L: jnp.concatenate(
            [L["slf"]["wq"] * inv_t, L["slf"]["wk"], L["slf"]["wv"]], axis=1), bf),
        "s_bqkv": stack(lambda L: jnp.concatenate(
            [L["slf"]["bq"] * inv_t, L["slf"]["bk"], L["slf"]["bv"]], axis=1), f32),
        "s_wo": stack(lambda L: L["slf"]["wo"], bf),
        "s_bo": stack(lambda L: L["slf"]["bo"], f32),
        "s_g": stack(lambda L: L["slf"]["g"], f32),
        "s_b": stack(lambda L: L["slf"]["b"], f32),
        # encoder-decoder attention
        "e_wq": stack(lambda L: L["enc"]["wq"] * inv_t, bf),
        "e_bq": stack(lambda L: L["enc"]["bq"] * inv_t, f32),
        "e_wkv": stack(lambda L: jnp.concatenate(
            [L["enc"]["wk"], L["enc"]["wv"]], axis=1), bf),
        "e_bkv": stack(lambda L: jnp.concatenate(
            [L["enc"]["bk"], L["enc"]["bv"]], axis=1), f32),
        "e_wo": stack(lambda L: L["enc"]["wo"], bf),
        "e_bo": stack(lambda L: L["enc"]["bo"], f32),
        "e_g": stack(lambda L: L["enc"]["g"], f32),
        "e_b": stack(lambda L: L["enc"]["b"], f32),
        # position-wise FFN
        "f_w1": stack(lambda L: L["ffn"]["w1"], bf),
        "f_b1": stack(lambda L: L["ffn"]["b1"], f32),
        "f_w2": stack(lambda L: L["ffn"]["w2"], bf),
        "f_b2": stack(lambda L: L["ffn"]["b2"], f32),
        "f_g": stack(lambda L: L["ffn"]["g"], f32),
        "f_b": stack(lambda L: L["ffn"]["b"], f32),
    }


# ----------------------------------------------------------------------------
# Pure-JAX reference (same prepared params, same bf16 matmul casts) for checking
# ----------------------------------------------------------------------------
def decoder_forward_ref(prep, tgt_seq, src_seq, enc_output, *, n_head, d_k, d_v):
    B, Lt = tgt_seq.shape
    D = prep["emb"].shape[1]
    H, dk, dv = n_head, d_k, d_v
    bf = jnp.bfloat16

    tkp = (tgt_seq == 0).astype(jnp.float32)[:, None, :]
    skp = (src_seq == 0).astype(jnp.float32)[:, None, :]
    npm = (tgt_seq != 0).astype(jnp.float32)[:, :, None]

    def heads(m, d):   # (B, L, H*d) -> (B, H, L, d)
        return m.reshape(B, -1, H, d).transpose(0, 2, 1, 3)

    def proj(x, w, bias):
        return jnp.einsum("bld,de->ble", x.astype(bf), w,
                          preferred_element_type=jnp.float32) + bias

    def attn_core(q, k, v, kpad, x_res, wo, bo, g, b):
        s = jnp.einsum("bhqd,bhkd->bhqk", heads(q, dk).astype(bf),
                       heads(k, dk).astype(bf), preferred_element_type=jnp.float32)
        s = s + kpad[:, None, :, :] * NEG_INF
        p = jax.nn.softmax(s, axis=-1)
        o = jnp.einsum("bhqk,bhkd->bhqd", p.astype(bf), heads(v, dv).astype(bf),
                       preferred_element_type=jnp.float32)
        o = o.transpose(0, 2, 1, 3).reshape(B, -1, H * dv)
        o = jnp.einsum("ble,ed->bld", o.astype(bf), wo,
                       preferred_element_type=jnp.float32) + bo
        return _layer_norm(o + x_res, g, b) * npm

    x = prep["emb"][tgt_seq] * math.sqrt(D) + prep["pe"][:Lt][None, :, :]
    for l in range(prep["s_wqkv"].shape[0]):
        qkv = proj(x, prep["s_wqkv"][l], prep["s_bqkv"][l])
        x = attn_core(qkv[..., :H * dk], qkv[..., H * dk:2 * H * dk], qkv[..., 2 * H * dk:],
                      tkp, x, prep["s_wo"][l], prep["s_bo"][l], prep["s_g"][l], prep["s_b"][l])
        q = proj(x, prep["e_wq"][l], prep["e_bq"][l])
        kv = proj(enc_output, prep["e_wkv"][l], prep["e_bkv"][l])
        x = attn_core(q, kv[..., :H * dk], kv[..., H * dk:],
                      skp, x, prep["e_wo"][l], prep["e_bo"][l], prep["e_g"][l], prep["e_b"][l])
        hid = jnp.maximum(proj(x, prep["f_w1"][l], prep["f_b1"][l]), 0.0)
        o = proj(hid, prep["f_w2"][l], prep["f_b2"][l])
        x = _layer_norm(o + x, prep["f_g"][l], prep["f_b"][l]) * npm
    return x


# ----------------------------------------------------------------------------
if __name__ == "__main__":
    # Small, forward-consistent shapes
    n_tgt_vocab, len_max_seq = 50, 16
    d_model = 32
    n_layers, n_head, d_k, d_v, d_inner = 2, 2, 16, 16, 64
    B, Lt, Ls = 2, 8, 10

    key = jax.random.PRNGKey(0)
    kp, kt, ks, ke = jax.random.split(key, 4)

    raw = init_decoder_params(kp, n_vocab=n_tgt_vocab, len_max_seq=len_max_seq,
                              d_model=d_model, d_inner=d_inner, n_layers=n_layers,
                              n_head=n_head, d_k=d_k, d_v=d_v)
    prep = prepare_params(raw, n_head=n_head, d_k=d_k, d_v=d_v)

    tgt_seq = jax.random.randint(kt, (B, Lt), 1, n_tgt_vocab)
    tgt_seq = tgt_seq.at[1, -3:].set(0)            # some PAD tokens in batch row 1
    src_seq = jax.random.randint(ks, (B, Ls), 1, n_tgt_vocab)
    src_seq = src_seq.at[1, -2:].set(0)
    tgt_pos = jnp.broadcast_to(jnp.arange(1, Lt + 1), (B, Lt))   # module ignores it
    enc_output = 0.5 * jax.random.normal(ke, (B, Ls, d_model), jnp.float32)

    fwd = jax.jit(functools.partial(decoder_forward, n_head=n_head, d_k=d_k, d_v=d_v))
    (dec_out,) = fwd(prep, tgt_seq, tgt_pos, src_seq, enc_output)
    dec_out = jax.block_until_ready(dec_out)

    ref = decoder_forward_ref(prep, tgt_seq, src_seq, enc_output,
                              n_head=n_head, d_k=d_k, d_v=d_v)
    assert dec_out.shape == (B, Lt, d_model)
    max_err = float(jnp.max(jnp.abs(dec_out - ref)))
    assert jnp.allclose(dec_out, ref, atol=2e-2, rtol=2e-2), max_err

    # TODO(synk): dropout is treated as identity (inference/eval semantics).
    print("KERNEL_OK")
</pallas_src>

<mosaic_0001>
module attributes {stable_mosaic.version = 11 : i64} {
  func.func @decoder_stack_kernel(%arg0: i32, %arg1: i32, %arg2: memref<1x8x32xf32, #tpu.memory_space<vmem>>, %arg3: memref<1x16x32xf32, #tpu.memory_space<vmem>>, %arg4: memref<1x1x8xf32, #tpu.memory_space<vmem>>, %arg5: memref<1x1x16xf32, #tpu.memory_space<vmem>>, %arg6: memref<1x8x1xf32, #tpu.memory_space<vmem>>, %arg7: memref<1x32x96xbf16, #tpu.memory_space<vmem>>, %arg8: memref<1x1x96xf32, #tpu.memory_space<vmem>>, %arg9: memref<1x32x32xbf16, #tpu.memory_space<vmem>>, %arg10: memref<1x1x32xf32, #tpu.memory_space<vmem>>, %arg11: memref<1x1x32xf32, #tpu.memory_space<vmem>>, %arg12: memref<1x1x32xf32, #tpu.memory_space<vmem>>, %arg13: memref<1x32x32xbf16, #tpu.memory_space<vmem>>, %arg14: memref<1x1x32xf32, #tpu.memory_space<vmem>>, %arg15: memref<1x32x64xbf16, #tpu.memory_space<vmem>>, %arg16: memref<1x1x64xf32, #tpu.memory_space<vmem>>, %arg17: memref<1x32x32xbf16, #tpu.memory_space<vmem>>, %arg18: memref<1x1x32xf32, #tpu.memory_space<vmem>>, %arg19: memref<1x1x32xf32, #tpu.memory_space<vmem>>, %arg20: memref<1x1x32xf32, #tpu.memory_space<vmem>>, %arg21: memref<1x32x64xbf16, #tpu.memory_space<vmem>>, %arg22: memref<1x1x64xf32, #tpu.memory_space<vmem>>, %arg23: memref<1x64x32xbf16, #tpu.memory_space<vmem>>, %arg24: memref<1x1x32xf32, #tpu.memory_space<vmem>>, %arg25: memref<1x1x32xf32, #tpu.memory_space<vmem>>, %arg26: memref<1x1x32xf32, #tpu.memory_space<vmem>>, %arg27: memref<1x8x32xf32, #tpu.memory_space<vmem>>) attributes {dimension_semantics = [#tpu.dimension_semantics<parallel>, #tpu.dimension_semantics<arbitrary>], iteration_bounds = array<i64: 2, 2>, scalar_prefetch = 0 : i64, scratch_operands = 0 : i64, tpu.core_type = #tpu.core_type<tc>, window_params = [{transform_indices = @transform_0, window_bounds = array<i64: 1, 8, 32>}, {transform_indices = @transform_1, window_bounds = array<i64: 1, 16, 32>}, {transform_indices = @transform_2, window_bounds = array<i64: 1, 1, 8>}, {transform_indices = @transform_3, window_bounds = array<i64: 1, 1, 16>}, {transform_indices = @transform_4, window_bounds = array<i64: 1, 8, 1>}, {transform_indices = @transform_5, window_bounds = array<i64: 1, 32, 96>}, {transform_indices = @transform_6, window_bounds = array<i64: 1, 1, 96>}, {transform_indices = @transform_7, window_bounds = array<i64: 1, 32, 32>}, {transform_indices = @transform_8, window_bounds = array<i64: 1, 1, 32>}, {transform_indices = @transform_9, window_bounds = array<i64: 1, 1, 32>}, {transform_indices = @transform_10, window_bounds = array<i64: 1, 1, 32>}, {transform_indices = @transform_11, window_bounds = array<i64: 1, 32, 32>}, {transform_indices = @transform_12, window_bounds = array<i64: 1, 1, 32>}, {transform_indices = @transform_13, window_bounds = array<i64: 1, 32, 64>}, {transform_indices = @transform_14, window_bounds = array<i64: 1, 1, 64>}, {transform_indices = @transform_15, window_bounds = array<i64: 1, 32, 32>}, {transform_indices = @transform_16, window_bounds = array<i64: 1, 1, 32>}, {transform_indices = @transform_17, window_bounds = array<i64: 1, 1, 32>}, {transform_indices = @transform_18, window_bounds = array<i64: 1, 1, 32>}, {transform_indices = @transform_19, window_bounds = array<i64: 1, 32, 64>}, {transform_indices = @transform_20, window_bounds = array<i64: 1, 1, 64>}, {transform_indices = @transform_21, window_bounds = array<i64: 1, 64, 32>}, {transform_indices = @transform_22, window_bounds = array<i64: 1, 1, 32>}, {transform_indices = @transform_23, window_bounds = array<i64: 1, 1, 32>}, {transform_indices = @transform_24, window_bounds = array<i64: 1, 1, 32>}, {transform_indices = @transform_25, window_bounds = array<i64: 1, 8, 32>}]} {
    %c0_i32 = arith.constant 0 : i32
    %0 = arith.cmpi eq, %arg1, %c0_i32 : i32
    %1 = arith.extui %0 : i1 to i32
    %c0_i32_0 = arith.constant 0 : i32
    %2 = arith.cmpi ne, %1, %c0_i32_0 : i32
    scf.if %2 {
      %c0_116 = arith.constant 0 : index
      %c0_117 = arith.constant 0 : index
      %c0_118 = arith.constant 0 : index
      %257 = vector.load %arg2[%c0_116, %c0_117, %c0_118] : memref<1x8x32xf32, #tpu.memory_space<vmem>>, vector<1x8x32xf32>
      %c0_119 = arith.constant 0 : index
      %c0_120 = arith.constant 0 : index
      %c0_121 = arith.constant 0 : index
      %258 = vector.load %arg27[%c0_119, %c0_120, %c0_121] : memref<1x8x32xf32, #tpu.memory_space<vmem>>, vector<1x8x32xf32>
      tpu.vector_store %arg27[%c0_119, %c0_120, %c0_121], %257 {strides = array<i32>} : memref<1x8x32xf32, #tpu.memory_space<vmem>>, vector<1x8x32xf32>,
    } else {
    }
    %c0 = arith.constant 0 : index
    %c0_1 = arith.constant 0 : index
    %c0_2 = arith.constant 0 : index
    %3 = vector.load %arg27[%c0, %c0_1, %c0_2] : memref<1x8x32xf32, #tpu.memory_space<vmem>>, vector<1x8x32xf32>
    %c0_3 = arith.constant 0 : index
    %c0_4 = arith.constant 0 : index
    %c0_5 = arith.constant 0 : index
    %4 = vector.load %arg6[%c0_3, %c0_4, %c0_5] : memref<1x8x1xf32, #tpu.memory_space<vmem>>, vector<1x8x1xf32>
    %c0_6 = arith.constant 0 : index
    %c0_7 = arith.constant 0 : index
    %c0_8 = arith.constant 0 : index
    %5 = vector.load %arg4[%c0_6, %c0_7, %c0_8] : memref<1x1x8xf32, #tpu.memory_space<vmem>>, vector<1x1x8xf32>
    %c0_9 = arith.constant 0 : index
    %c0_10 = arith.constant 0 : index
    %c0_11 = arith.constant 0 : index
    %6 = vector.load %arg5[%c0_9, %c0_10, %c0_11] : memref<1x1x16xf32, #tpu.memory_space<vmem>>, vector<1x1x16xf32>
    %7 = vector.shape_cast %3 : vector<1x8x32xf32> to vector<8x32xf32>
    %8 = arith.truncf %7 : vector<8x32xf32> to vector<8x32xbf16>
    %c0_12 = arith.constant 0 : index
    %c0_13 = arith.constant 0 : index
    %c0_14 = arith.constant 0 : index
    %9 = vector.load %arg7[%c0_12, %c0_13, %c0_14] : memref<1x32x96xbf16, #tpu.memory_space<vmem>>, vector<1x32x96xbf16>
    %10 = vector.shape_cast %9 : vector<1x32x96xbf16> to vector<32x96xbf16>
    %cst = arith.constant dense<0.000000e+00> : vector<8x96xf32>
    %11 = tpu.matmul %8, %10, %cst {dimension_numbers = #tpu.dot_dimension_numbers<[1], [0], [0], [1], [0, 0, 1, 1], [], []>} : vector<8x32xbf16>, vector<32x96xbf16>, vector<8x96xf32> -> vector<8x96xf32>
    %c0_15 = arith.constant 0 : index
    %c0_16 = arith.constant 0 : index
    %c0_17 = arith.constant 0 : index
    %12 = vector.load %arg8[%c0_15, %c0_16, %c0_17] : memref<1x1x96xf32, #tpu.memory_space<vmem>>, vector<1x1x96xf32>
    %13 = vector.shape_cast %12 : vector<1x1x96xf32> to vector<1x96xf32>
    %14 = vector.broadcast %13 : vector<1x96xf32> to vector<8x96xf32>
    %15 = arith.addf %11, %14 : vector<8x96xf32>
    %16 = vector.shape_cast %15 : vector<8x96xf32> to vector<1x8x96xf32>
    %17 = vector.extract_strided_slice %16 {offsets = [0, 0, 0], sizes = [1, 8, 32], strides = [1, 1, 1]} : vector<1x8x96xf32> to vector<1x8x32xf32>
    %18 = vector.extract_strided_slice %16 {offsets = [0, 0, 32], sizes = [1, 8, 32], strides = [1, 1, 1]} : vector<1x8x96xf32> to vector<1x8x32xf32>
    %19 = vector.extract_strided_slice %16 {offsets = [0, 0, 64], sizes = [1, 8, 32], strides = [1, 1, 1]} : vector<1x8x96xf32> to vector<1x8x32xf32>
    %c0_18 = arith.constant 0 : index
    %c0_19 = arith.constant 0 : index
    %c0_20 = arith.constant 0 : index
    %20 = vector.load %arg9[%c0_18, %c0_19, %c0_20] : memref<1x32x32xbf16, #tpu.memory_space<vmem>>, vector<1x32x32xbf16>
    %21 = vector.shape_cast %20 : vector<1x32x32xbf16> to vector<32x32xbf16>
    %c0_21 = arith.constant 0 : index
    %c0_22 = arith.constant 0 : index
    %c0_23 = arith.constant 0 : index
    %22 = vector.load %arg10[%c0_21, %c0_22, %c0_23] : memref<1x1x32xf32, #tpu.memory_space<vmem>>, vector<1x1x32xf32>
    %23 = vector.shape_cast %22 : vector<1x1x32xf32> to vector<1x32xf32>
    %c0_24 = arith.constant 0 : index
    %c0_25 = arith.constant 0 : index
    %c0_26 = arith.constant 0 : index
    %24 = vector.load %arg11[%c0_24, %c0_25, %c0_26] : memref<1x1x32xf32, #tpu.memory_space<vmem>>, vector<1x1x32xf32>
    %25 = vector.shape_cast %24 : vector<1x1x32xf32> to vector<1x32xf32>
    %c0_27 = arith.constant 0 : index
    %c0_28 = arith.constant 0 : index
    %c0_29 = arith.constant 0 : index
    %26 = vector.load %arg12[%c0_27, %c0_28, %c0_29] : memref<1x1x32xf32, #tpu.memory_space<vmem>>, vector<1x1x32xf32>
    %27 = vector.shape_cast %26 : vector<1x1x32xf32> to vector<1x32xf32>
    %28 = arith.truncf %17 : vector<1x8x32xf32> to vector<1x8x32xbf16>
    %29 = arith.truncf %18 : vector<1x8x32xf32> to vector<1x8x32xbf16>
    %30 = arith.truncf %19 : vector<1x8x32xf32> to vector<1x8x32xbf16>
    %31 = vector.extract_strided_slice %28 {offsets = [0, 0, 0], sizes = [1, 8, 16], strides = [1, 1, 1]} : vector<1x8x32xbf16> to vector<1x8x16xbf16>
    %32 = vector.extract_strided_slice %29 {offsets = [0, 0, 0], sizes = [1, 8, 16], strides = [1, 1, 1]} : vector<1x8x32xbf16> to vector<1x8x16xbf16>
    %33 = vector.extract_strided_slice %30 {offsets = [0, 0, 0], sizes = [1, 8, 16], strides = [1, 1, 1]} : vector<1x8x32xbf16> to vector<1x8x16xbf16>
    "tpu.trace_start"() <{level = 10 : i32, message = "bqd,bkd->bqk"}> : () -> ()
    %cst_30 = arith.constant dense<0.000000e+00> : vector<1x8x8xf32>
    %34 = tpu.matmul %31, %32, %cst_30 {dimension_numbers = #tpu.dot_dimension_numbers<[2], [2], [1], [1], [0, 0, 0, 1, 1, 1], [0], [0]>} : vector<1x8x16xbf16>, vector<1x8x16xbf16>, vector<1x8x8xf32> -> vector<1x8x8xf32>
    "tpu.trace_stop"() : () -> ()
    %35 = vector.broadcast %5 : vector<1x1x8xf32> to vector<1x8x8xf32>
    %36 = arith.addf %34, %35 : vector<1x8x8xf32>
    %cst_31 = arith.constant dense<0xFF800000> : vector<1x8xf32>
    %37 = vector.multi_reduction <maximumf>, %36, %cst_31 [2] : vector<1x8x8xf32> to vector<1x8xf32>
    %38 = vector.shape_cast %37 : vector<1x8xf32> to vector<1x8x1xf32>
    %39 = vector.broadcast %38 : vector<1x8x1xf32> to vector<1x8x8xf32>
    %40 = arith.subf %36, %39 : vector<1x8x8xf32>
    %41 = math.exp %40 : vector<1x8x8xf32>
    %cst_32 = arith.constant dense<0.000000e+00> : vector<1x8xf32>
    %42 = vector.multi_reduction <add>, %41, %cst_32 [2] : vector<1x8x8xf32> to vector<1x8xf32>
    %43 = vector.shape_cast %42 : vector<1x8xf32> to vector<1x8x1xf32>
    %44 = tpu.reciprocal %43 {approx = true} : vector<1x8x1xf32> -> vector<1x8x1xf32>
    %45 = vector.broadcast %44 : vector<1x8x1xf32> to vector<1x8x8xf32>
    %46 = arith.mulf %41, %45 : vector<1x8x8xf32>
    %47 = arith.truncf %46 : vector<1x8x8xf32> to vector<1x8x8xbf16>
    "tpu.trace_start"() <{level = 10 : i32, message = "bqk,bkd->bqd"}> : () -> ()
    %cst_33 = arith.constant dense<0.000000e+00> : vector<1x8x16xf32>
    %48 = tpu.matmul %47, %33, %cst_33 {dimension_numbers = #tpu.dot_dimension_numbers<[2], [1], [1], [2], [0, 0, 0, 1, 1, 2], [0], [0]>} : vector<1x8x8xbf16>, vector<1x8x16xbf16>, vector<1x8x16xf32> -> vector<1x8x16xf32>
    "tpu.trace_stop"() : () -> ()
    %49 = vector.extract_strided_slice %28 {offsets = [0, 0, 16], sizes = [1, 8, 16], strides = [1, 1, 1]} : vector<1x8x32xbf16> to vector<1x8x16xbf16>
    %50 = vector.extract_strided_slice %29 {offsets = [0, 0, 16], sizes = [1, 8, 16], strides = [1, 1, 1]} : vector<1x8x32xbf16> to vector<1x8x16xbf16>
    %51 = vector.extract_strided_slice %30 {offsets = [0, 0, 16], sizes = [1, 8, 16], strides = [1, 1, 1]} : vector<1x8x32xbf16> to vector<1x8x16xbf16>
    "tpu.trace_start"() <{level = 10 : i32, message = "bqd,bkd->bqk"}> : () -> ()
    %cst_34 = arith.constant dense<0.000000e+00> : vector<1x8x8xf32>
    %52 = tpu.matmul %49, %50, %cst_34 {dimension_numbers = #tpu.dot_dimension_numbers<[2], [2], [1], [1], [0, 0, 0, 1, 1, 1], [0], [0]>} : vector<1x8x16xbf16>, vector<1x8x16xbf16>, vector<1x8x8xf32> -> vector<1x8x8xf32>
    "tpu.trace_stop"() : () -> ()
    %53 = vector.broadcast %5 : vector<1x1x8xf32> to vector<1x8x8xf32>
    %54 = arith.addf %52, %53 : vector<1x8x8xf32>
    %cst_35 = arith.constant dense<0xFF800000> : vector<1x8xf32>
    %55 = vector.multi_reduction <maximumf>, %54, %cst_35 [2] : vector<1x8x8xf32> to vector<1x8xf32>
    %56 = vector.shape_cast %55 : vector<1x8xf32> to vector<1x8x1xf32>
    %57 = vector.broadcast %56 : vector<1x8x1xf32> to vector<1x8x8xf32>
    %58 = arith.subf %54, %57 : vector<1x8x8xf32>
    %59 = math.exp %58 : vector<1x8x8xf32>
    %cst_36 = arith.constant dense<0.000000e+00> : vector<1x8xf32>
    %60 = vector.multi_reduction <add>, %59, %cst_36 [2] : vector<1x8x8xf32> to vector<1x8xf32>
    %61 = vector.shape_cast %60 : vector<1x8xf32> to vector<1x8x1xf32>
    %62 = tpu.reciprocal %61 {approx = true} : vector<1x8x1xf32> -> vector<1x8x1xf32>
    %63 = vector.broadcast %62 : vector<1x8x1xf32> to vector<1x8x8xf32>
    %64 = arith.mulf %59, %63 : vector<1x8x8xf32>
    %65 = arith.truncf %64 : vector<1x8x8xf32> to vector<1x8x8xbf16>
    "tpu.trace_start"() <{level = 10 : i32, message = "bqk,bkd->bqd"}> : () -> ()
    %cst_37 = arith.constant dense<0.000000e+00> : vector<1x8x16xf32>
    %66 = tpu.matmul %65, %51, %cst_37 {dimension_numbers = #tpu.dot_dimension_numbers<[2], [1], [1], [2], [0, 0, 0, 1, 1, 2], [0], [0]>} : vector<1x8x8xbf16>, vector<1x8x16xbf16>, vector<1x8x16xf32> -> vector<1x8x16xf32>
    "tpu.trace_stop"() : () -> ()
    %67 = tpu.concatenate %48, %66 in 2 : vector<1x8x16xf32>, vector<1x8x16xf32> -> vector<1x8x32xf32>
    %68 = vector.shape_cast %67 : vector<1x8x32xf32> to vector<8x32xf32>
    %69 = arith.truncf %68 : vector<8x32xf32> to vector<8x32xbf16>
    %cst_38 = arith.constant dense<0.000000e+00> : vector<8x32xf32>
    %70 = tpu.matmul %69, %21, %cst_38 {dimension_numbers = #tpu.dot_dimension_numbers<[1], [0], [0], [1], [0, 0, 1, 1], [], []>} : vector<8x32xbf16>, vector<32x32xbf16>, vector<8x32xf32> -> vector<8x32xf32>
    %71 = vector.broadcast %23 : vector<1x32xf32> to vector<8x32xf32>
    %72 = arith.addf %70, %71 : vector<8x32xf32>
    %73 = vector.shape_cast %72 : vector<8x32xf32> to vector<1x8x32xf32>
    %74 = arith.addf %73, %3 : vector<1x8x32xf32>
    %cst_39 = arith.constant dense<0.000000e+00> : vector<1x8xf32>
    %75 = vector.multi_reduction <add>, %74, %cst_39 [2] : vector<1x8x32xf32> to vector<1x8xf32>
    %76 = vector.shape_cast %75 : vector<1x8xf32> to vector<1x8x1xf32>
    %cst_40 = arith.constant 3.200000e+01 : f32
    %77 = vector.broadcast %cst_40 : f32 to vector<1x8x1xf32>
    %78 = arith.divf %76, %77 : vector<1x8x1xf32>
    %79 = vector.broadcast %78 : vector<1x8x1xf32> to vector<1x8x32xf32>
    %80 = arith.subf %74, %79 : vector<1x8x32xf32>
    %81 = arith.mulf %80, %80 : vector<1x8x32xf32>
    %cst_41 = arith.constant dense<0.000000e+00> : vector<1x8xf32>
    %82 = vector.multi_reduction <add>, %81, %cst_41 [2] : vector<1x8x32xf32> to vector<1x8xf32>
    %83 = vector.shape_cast %82 : vector<1x8xf32> to vector<1x8x1xf32>
    %cst_42 = arith.constant 3.200000e+01 : f32
    %84 = vector.broadcast %cst_42 : f32 to vector<1x8x1xf32>
    %85 = arith.divf %83, %84 : vector<1x8x1xf32>
    %86 = vector.broadcast %78 : vector<1x8x1xf32> to vector<1x8x32xf32>
    %87 = arith.subf %74, %86 : vector<1x8x32xf32>
    %cst_43 = arith.constant 9.99999974E-6 : f32
    %88 = vector.broadcast %cst_43 : f32 to vector<1x8x1xf32>
    %89 = arith.addf %85, %88 : vector<1x8x1xf32>
    %90 = math.rsqrt %89 : vector<1x8x1xf32>
    %91 = vector.broadcast %90 : vector<1x8x1xf32> to vector<1x8x32xf32>
    %92 = arith.mulf %87, %91 : vector<1x8x32xf32>
    %93 = vector.shape_cast %25 : vector<1x32xf32> to vector<1x1x32xf32>
    %94 = vector.broadcast %93 : vector<1x1x32xf32> to vector<1x8x32xf32>
    %95 = arith.mulf %92, %94 : vector<1x8x32xf32>
    %96 = vector.shape_cast %27 : vector<1x32xf32> to vector<1x1x32xf32>
    %97 = vector.broadcast %96 : vector<1x1x32xf32> to vector<1x8x32xf32>
    %98 = arith.addf %95, %97 : vector<1x8x32xf32>
    %99 = vector.broadcast %4 : vector<1x8x1xf32> to vector<1x8x32xf32>
    %100 = arith.mulf %98, %99 : vector<1x8x32xf32>
    %101 = vector.shape_cast %100 : vector<1x8x32xf32> to vector<8x32xf32>
    %102 = arith.truncf %101 : vector<8x32xf32> to vector<8x32xbf16>
    %c0_44 = arith.constant 0 : index
    %c0_45 = arith.constant 0 : index
    %c0_46 = arith.constant 0 : index
    %103 = vector.load %arg13[%c0_44, %c0_45, %c0_46] : memref<1x32x32xbf16, #tpu.memory_space<vmem>>, vector<1x32x32xbf16>
    %104 = vector.shape_cast %103 : vector<1x32x32xbf16> to vector<32x32xbf16>
    %cst_47 = arith.constant dense<0.000000e+00> : vector<8x32xf32>
    %105 = tpu.matmul %102, %104, %cst_47 {dimension_numbers = #tpu.dot_dimension_numbers<[1], [0], [0], [1], [0, 0, 1, 1], [], []>} : vector<8x32xbf16>, vector<32x32xbf16>, vector<8x32xf32> -> vector<8x32xf32>
    %c0_48 = arith.constant 0 : index
    %c0_49 = arith.constant 0 : index
    %c0_50 = arith.constant 0 : index
    %106 = vector.load %arg14[%c0_48, %c0_49, %c0_50] : memref<1x1x32xf32, #tpu.memory_space<vmem>>, vector<1x1x32xf32>
    %107 = vector.shape_cast %106 : vector<1x1x32xf32> to vector<1x32xf32>
    %108 = vector.broadcast %107 : vector<1x32xf32> to vector<8x32xf32>
    %109 = arith.addf %105, %108 : vector<8x32xf32>
    %110 = vector.shape_cast %109 : vector<8x32xf32> to vector<1x8x32xf32>
    %c0_51 = arith.constant 0 : index
    %c0_52 = arith.constant 0 : index
    %c0_53 = arith.constant 0 : index
    %111 = vector.load %arg3[%c0_51, %c0_52, %c0_53] : memref<1x16x32xf32, #tpu.memory_space<vmem>>, vector<1x16x32xf32>
    %112 = vector.shape_cast %111 : vector<1x16x32xf32> to vector<16x32xf32>
    %113 = arith.truncf %112 : vector<16x32xf32> to vector<16x32xbf16>
    %c0_54 = arith.constant 0 : index
    %c0_55 = arith.constant 0 : index
    %c0_56 = arith.constant 0 : index
    %114 = vector.load %arg15[%c0_54, %c0_55, %c0_56] : memref<1x32x64xbf16, #tpu.memory_space<vmem>>, vector<1x32x64xbf16>
    %115 = vector.shape_cast %114 : vector<1x32x64xbf16> to vector<32x64xbf16>
    %cst_57 = arith.constant dense<0.000000e+00> : vector<16x64xf32>
    %116 = tpu.matmul %113, %115, %cst_57 {dimension_numbers = #tpu.dot_dimension_numbers<[1], [0], [0], [1], [0, 0, 1, 1], [], []>} : vector<16x32xbf16>, vector<32x64xbf16>, vector<16x64xf32> -> vector<16x64xf32>
    %c0_58 = arith.constant 0 : index
    %c0_59 = arith.constant 0 : index
    %c0_60 = arith.constant 0 : index
    %117 = vector.load %arg16[%c0_58, %c0_59, %c0_60] : memref<1x1x64xf32, #tpu.memory_space<vmem>>, vector<1x1x64xf32>
    %118 = vector.shape_cast %117 : vector<1x1x64xf32> to vector<1x64xf32>
    %119 = vector.broadcast %118 : vector<1x64xf32> to vector<16x64xf32>
    %120 = arith.addf %116, %119 : vector<16x64xf32>
    %121 = vector.shape_cast %120 : vector<16x64xf32> to vector<1x16x64xf32>
    %122 = vector.extract_strided_slice %121 {offsets = [0, 0, 0], sizes = [1, 16, 32], strides = [1, 1, 1]} : vector<1x16x64xf32> to vector<1x16x32xf32>
    %123 = vector.extract_strided_slice %121 {offsets = [0, 0, 32], sizes = [1, 16, 32], strides = [1, 1, 1]} : vector<1x16x64xf32> to vector<1x16x32xf32>
    %c0_61 = arith.constant 0 : index
    %c0_62 = arith.constant 0 : index
    %c0_63 = arith.constant 0 : index
    %124 = vector.load %arg17[%c0_61, %c0_62, %c0_63] : memref<1x32x32xbf16, #tpu.memory_space<vmem>>, vector<1x32x32xbf16>
    %125 = vector.shape_cast %124 : vector<1x32x32xbf16> to vector<32x32xbf16>
    %c0_64 = arith.constant 0 : index
    %c0_65 = arith.constant 0 : index
    %c0_66 = arith.constant 0 : index
    %126 = vector.load %arg18[%c0_64, %c0_65, %c0_66] : memref<1x1x32xf32, #tpu.memory_space<vmem>>, vector<1x1x32xf32>
    %127 = vector.shape_cast %126 : vector<1x1x32xf32> to vector<1x32xf32>
    %c0_67 = arith.constant 0 : index
    %c0_68 = arith.constant 0 : index
    %c0_69 = arith.constant 0 : index
    %128 = vector.load %arg19[%c0_67, %c0_68, %c0_69] : memref<1x1x32xf32, #tpu.memory_space<vmem>>, vector<1x1x32xf32>
    %129 = vector.shape_cast %128 : vector<1x1x32xf32> to vector<1x32xf32>
    %c0_70 = arith.constant 0 : index
    %c0_71 = arith.constant 0 : index
    %c0_72 = arith.constant 0 : index
    %130 = vector.load %arg20[%c0_70, %c0_71, %c0_72] : memref<1x1x32xf32, #tpu.memory_space<vmem>>, vector<1x1x32xf32>
    %131 = vector.shape_cast %130 : vector<1x1x32xf32> to vector<1x32xf32>
    %132 = arith.truncf %110 : vector<1x8x32xf32> to vector<1x8x32xbf16>
    %133 = arith.truncf %122 : vector<1x16x32xf32> to vector<1x16x32xbf16>
    %134 = arith.truncf %123 : vector<1x16x32xf32> to vector<1x16x32xbf16>
    %135 = vector.extract_strided_slice %132 {offsets = [0, 0, 0], sizes = [1, 8, 16], strides = [1, 1, 1]} : vector<1x8x32xbf16> to vector<1x8x16xbf16>
    %136 = vector.extract_strided_slice %133 {offsets = [0, 0, 0], sizes = [1, 16, 16], strides = [1, 1, 1]} : vector<1x16x32xbf16> to vector<1x16x16xbf16>
    %137 = vector.extract_strided_slice %134 {offsets = [0, 0, 0], sizes = [1, 16, 16], strides = [1, 1, 1]} : vector<1x16x32xbf16> to vector<1x16x16xbf16>
    "tpu.trace_start"() <{level = 10 : i32, message = "bqd,bkd->bqk"}> : () -> ()
    %cst_73 = arith.constant dense<0.000000e+00> : vector<1x8x16xf32>
    %138 = tpu.matmul %135, %136, %cst_73 {dimension_numbers = #tpu.dot_dimension_numbers<[2], [2], [1], [1], [0, 0, 0, 1, 1, 1], [0], [0]>} : vector<1x8x16xbf16>, vector<1x16x16xbf16>, vector<1x8x16xf32> -> vector<1x8x16xf32>
    "tpu.trace_stop"() : () -> ()
    %139 = vector.broadcast %6 : vector<1x1x16xf32> to vector<1x8x16xf32>
    %140 = arith.addf %138, %139 : vector<1x8x16xf32>
    %cst_74 = arith.constant dense<0xFF800000> : vector<1x8xf32>
    %141 = vector.multi_reduction <maximumf>, %140, %cst_74 [2] : vector<1x8x16xf32> to vector<1x8xf32>
    %142 = vector.shape_cast %141 : vector<1x8xf32> to vector<1x8x1xf32>
    %143 = vector.broadcast %142 : vector<1x8x1xf32> to vector<1x8x16xf32>
    %144 = arith.subf %140, %143 : vector<1x8x16xf32>
    %145 = math.exp %144 : vector<1x8x16xf32>
    %cst_75 = arith.constant dense<0.000000e+00> : vector<1x8xf32>
    %146 = vector.multi_reduction <add>, %145, %cst_75 [2] : vector<1x8x16xf32> to vector<1x8xf32>
    %147 = vector.shape_cast %146 : vector<1x8xf32> to vector<1x8x1xf32>
    %148 = tpu.reciprocal %147 {approx = true} : vector<1x8x1xf32> -> vector<1x8x1xf32>
    %149 = vector.broadcast %148 : vector<1x8x1xf32> to vector<1x8x16xf32>
    %150 = arith.mulf %145, %149 : vector<1x8x16xf32>
    %151 = arith.truncf %150 : vector<1x8x16xf32> to vector<1x8x16xbf16>
    "tpu.trace_start"() <{level = 10 : i32, message = "bqk,bkd->bqd"}> : () -> ()
    %cst_76 = arith.constant dense<0.000000e+00> : vector<1x8x16xf32>
    %152 = tpu.matmul %151, %137, %cst_76 {dimension_numbers = #tpu.dot_dimension_numbers<[2], [1], [1], [2], [0, 0, 0, 1, 1, 2], [0], [0]>} : vector<1x8x16xbf16>, vector<1x16x16xbf16>, vector<1x8x16xf32> -> vector<1x8x16xf32>
    "tpu.trace_stop"() : () -> ()
    %153 = vector.extract_strided_slice %132 {offsets = [0, 0, 16], sizes = [1, 8, 16], strides = [1, 1, 1]} : vector<1x8x32xbf16> to vector<1x8x16xbf16>
    %154 = vector.extract_strided_slice %133 {offsets = [0, 0, 16], sizes = [1, 16, 16], strides = [1, 1, 1]} : vector<1x16x32xbf16> to vector<1x16x16xbf16>
    %155 = vector.extract_strided_slice %134 {offsets = [0, 0, 16], sizes = [1, 16, 16], strides = [1, 1, 1]} : vector<1x16x32xbf16> to vector<1x16x16xbf16>
    "tpu.trace_start"() <{level = 10 : i32, message = "bqd,bkd->bqk"}> : () -> ()
    %cst_77 = arith.constant dense<0.000000e+00> : vector<1x8x16xf32>
    %156 = tpu.matmul %153, %154, %cst_77 {dimension_numbers = #tpu.dot_dimension_numbers<[2], [2], [1], [1], [0, 0, 0, 1, 1, 1], [0], [0]>} : vector<1x8x16xbf16>, vector<1x16x16xbf16>, vector<1x8x16xf32> -> vector<1x8x16xf32>
    "tpu.trace_stop"() : () -> ()
    %157 = vector.broadcast %6 : vector<1x1x16xf32> to vector<1x8x16xf32>
    %158 = arith.addf %156, %157 : vector<1x8x16xf32>
    %cst_78 = arith.constant dense<0xFF800000> : vector<1x8xf32>
    %159 = vector.multi_reduction <maximumf>, %158, %cst_78 [2] : vector<1x8x16xf32> to vector<1x8xf32>
    %160 = vector.shape_cast %159 : vector<1x8xf32> to vector<1x8x1xf32>
    %161 = vector.broadcast %160 : vector<1x8x1xf32> to vector<1x8x16xf32>
    %162 = arith.subf %158, %161 : vector<1x8x16xf32>
    %163 = math.exp %162 : vector<1x8x16xf32>
    %cst_79 = arith.constant dense<0.000000e+00> : vector<1x8xf32>
    %164 = vector.multi_reduction <add>, %163, %cst_79 [2] : vector<1x8x16xf32> to vector<1x8xf32>
    %165 = vector.shape_cast %164 : vector<1x8xf32> to vector<1x8x1xf32>
    %166 = tpu.reciprocal %165 {approx = true} : vector<1x8x1xf32> -> vector<1x8x1xf32>
    %167 = vector.broadcast %166 : vector<1x8x1xf32> to vector<1x8x16xf32>
    %168 = arith.mulf %163, %167 : vector<1x8x16xf32>
    %169 = arith.truncf %168 : vector<1x8x16xf32> to vector<1x8x16xbf16>
    "tpu.trace_start"() <{level = 10 : i32, message = "bqk,bkd->bqd"}> : () -> ()
    %cst_80 = arith.constant dense<0.000000e+00> : vector<1x8x16xf32>
    %170 = tpu.matmul %169, %155, %cst_80 {dimension_numbers = #tpu.dot_dimension_numbers<[2], [1], [1], [2], [0, 0, 0, 1, 1, 2], [0], [0]>} : vector<1x8x16xbf16>, vector<1x16x16xbf16>, vector<1x8x16xf32> -> vector<1x8x16xf32>
    "tpu.trace_stop"() : () -> ()
    %171 = tpu.concatenate %152, %170 in 2 : vector<1x8x16xf32>, vector<1x8x16xf32> -> vector<1x8x32xf32>
    %172 = vector.shape_cast %171 : vector<1x8x32xf32> to vector<8x32xf32>
    %173 = arith.truncf %172 : vector<8x32xf32> to vector<8x32xbf16>
    %cst_81 = arith.constant dense<0.000000e+00> : vector<8x32xf32>
    %174 = tpu.matmul %173, %125, %cst_81 {dimension_numbers = #tpu.dot_dimension_numbers<[1], [0], [0], [1], [0, 0, 1, 1], [], []>} : vector<8x32xbf16>, vector<32x32xbf16>, vector<8x32xf32> -> vector<8x32xf32>
    %175 = vector.broadcast %127 : vector<1x32xf32> to vector<8x32xf32>
    %176 = arith.addf %174, %175 : vector<8x32xf32>
    %177 = vector.shape_cast %176 : vector<8x32xf32> to vector<1x8x32xf32>
    %178 = arith.addf %177, %100 : vector<1x8x32xf32>
    %cst_82 = arith.constant dense<0.000000e+00> : vector<1x8xf32>
    %179 = vector.multi_reduction <add>, %178, %cst_82 [2] : vector<1x8x32xf32> to vector<1x8xf32>
    %180 = vector.shape_cast %179 : vector<1x8xf32> to vector<1x8x1xf32>
    %cst_83 = arith.constant 3.200000e+01 : f32
    %181 = vector.broadcast %cst_83 : f32 to vector<1x8x1xf32>
    %182 = arith.divf %180, %181 : vector<1x8x1xf32>
    %183 = vector.broadcast %182 : vector<1x8x1xf32> to vector<1x8x32xf32>
    %184 = arith.subf %178, %183 : vector<1x8x32xf32>
    %185 = arith.mulf %184, %184 : vector<1x8x32xf32>
    %cst_84 = arith.constant dense<0.000000e+00> : vector<1x8xf32>
    %186 = vector.multi_reduction <add>, %185, %cst_84 [2] : vector<1x8x32xf32> to vector<1x8xf32>
    %187 = vector.shape_cast %186 : vector<1x8xf32> to vector<1x8x1xf32>
    %cst_85 = arith.constant 3.200000e+01 : f32
    %188 = vector.broadcast %cst_85 : f32 to vector<1x8x1xf32>
    %189 = arith.divf %187, %188 : vector<1x8x1xf32>
    %190 = vector.broadcast %182 : vector<1x8x1xf32> to vector<1x8x32xf32>
    %191 = arith.subf %178, %190 : vector<1x8x32xf32>
    %cst_86 = arith.constant 9.99999974E-6 : f32
    %192 = vector.broadcast %cst_86 : f32 to vector<1x8x1xf32>
    %193 = arith.addf %189, %192 : vector<1x8x1xf32>
    %194 = math.rsqrt %193 : vector<1x8x1xf32>
    %195 = vector.broadcast %194 : vector<1x8x1xf32> to vector<1x8x32xf32>
    %196 = arith.mulf %191, %195 : vector<1x8x32xf32>
    %197 = vector.shape_cast %129 : vector<1x32xf32> to vector<1x1x32xf32>
    %198 = vector.broadcast %197 : vector<1x1x32xf32> to vector<1x8x32xf32>
    %199 = arith.mulf %196, %198 : vector<1x8x32xf32>
    %200 = vector.shape_cast %131 : vector<1x32xf32> to vector<1x1x32xf32>
    %201 = vector.broadcast %200 : vector<1x1x32xf32> to vector<1x8x32xf32>
    %202 = arith.addf %199, %201 : vector<1x8x32xf32>
    %203 = vector.broadcast %4 : vector<1x8x1xf32> to vector<1x8x32xf32>
    %204 = arith.mulf %202, %203 : vector<1x8x32xf32>
    %205 = vector.shape_cast %204 : vector<1x8x32xf32> to vector<8x32xf32>
    %206 = arith.truncf %205 : vector<8x32xf32> to vector<8x32xbf16>
    %c0_87 = arith.constant 0 : index
    %c0_88 = arith.constant 0 : index
    %c0_89 = arith.constant 0 : index
    %207 = vector.load %arg21[%c0_87, %c0_88, %c0_89] : memref<1x32x64xbf16, #tpu.memory_space<vmem>>, vector<1x32x64xbf16>
    %208 = vector.shape_cast %207 : vector<1x32x64xbf16> to vector<32x64xbf16>
    %cst_90 = arith.constant dense<0.000000e+00> : vector<8x64xf32>
    %209 = tpu.matmul %206, %208, %cst_90 {dimension_numbers = #tpu.dot_dimension_numbers<[1], [0], [0], [1], [0, 0, 1, 1], [], []>} : vector<8x32xbf16>, vector<32x64xbf16>, vector<8x64xf32> -> vector<8x64xf32>
    %c0_91 = arith.constant 0 : index
    %c0_92 = arith.constant 0 : index
    %c0_93 = arith.constant 0 : index
    %210 = vector.load %arg22[%c0_91, %c0_92, %c0_93] : memref<1x1x64xf32, #tpu.memory_space<vmem>>, vector<1x1x64xf32>
    %211 = vector.shape_cast %210 : vector<1x1x64xf32> to vector<1x64xf32>
    %212 = vector.broadcast %211 : vector<1x64xf32> to vector<8x64xf32>
    %213 = arith.addf %209, %212 : vector<8x64xf32>
    %cst_94 = arith.constant 0.000000e+00 : f32
    %214 = vector.broadcast %cst_94 : f32 to vector<8x64xf32>
    %215 = arith.maximumf %213, %214 : vector<8x64xf32>
    %216 = arith.truncf %215 : vector<8x64xf32> to vector<8x64xbf16>
    %c0_95 = arith.constant 0 : index
    %c0_96 = arith.constant 0 : index
    %c0_97 = arith.constant 0 : index
    %217 = vector.load %arg23[%c0_95, %c0_96, %c0_97] : memref<1x64x32xbf16, #tpu.memory_space<vmem>>, vector<1x64x32xbf16>
    %218 = vector.shape_cast %217 : vector<1x64x32xbf16> to vector<64x32xbf16>
    %cst_98 = arith.constant dense<0.000000e+00> : vector<8x32xf32>
    %219 = tpu.matmul %216, %218, %cst_98 {dimension_numbers = #tpu.dot_dimension_numbers<[1], [0], [0], [1], [0, 0, 1, 1], [], []>} : vector<8x64xbf16>, vector<64x32xbf16>, vector<8x32xf32> -> vector<8x32xf32>
    %c0_99 = arith.constant 0 : index
    %c0_100 = arith.constant 0 : index
    %c0_101 = arith.constant 0 : index
    %220 = vector.load %arg24[%c0_99, %c0_100, %c0_101] : memref<1x1x32xf32, #tpu.memory_space<vmem>>, vector<1x1x32xf32>
    %221 = vector.shape_cast %220 : vector<1x1x32xf32> to vector<1x32xf32>
    %222 = vector.broadcast %221 : vector<1x32xf32> to vector<8x32xf32>
    %223 = arith.addf %219, %222 : vector<8x32xf32>
    %224 = vector.shape_cast %223 : vector<8x32xf32> to vector<1x8x32xf32>
    %225 = arith.addf %224, %204 : vector<1x8x32xf32>
    %c0_102 = arith.constant 0 : index
    %c0_103 = arith.constant 0 : index
    %c0_104 = arith.constant 0 : index
    %226 = vector.load %arg25[%c0_102, %c0_103, %c0_104] : memref<1x1x32xf32, #tpu.memory_space<vmem>>, vector<1x1x32xf32>
    %227 = vector.shape_cast %226 : vector<1x1x32xf32> to vector<1x32xf32>
    %c0_105 = arith.constant 0 : index
    %c0_106 = arith.constant 0 : index
    %c0_107 = arith.constant 0 : index
    %228 = vector.load %arg26[%c0_105, %c0_106, %c0_107] : memref<1x1x32xf32, #tpu.memory_space<vmem>>, vector<1x1x32xf32>
    %229 = vector.shape_cast %228 : vector<1x1x32xf32> to vector<1x32xf32>
    %cst_108 = arith.constant dense<0.000000e+00> : vector<1x8xf32>
    %230 = vector.multi_reduction <add>, %225, %cst_108 [2] : vector<1x8x32xf32> to vector<1x8xf32>
    %231 = vector.shape_cast %230 : vector<1x8xf32> to vector<1x8x1xf32>
    %cst_109 = arith.constant 3.200000e+01 : f32
    %232 = vector.broadcast %cst_109 : f32 to vector<1x8x1xf32>
    %233 = arith.divf %231, %232 : vector<1x8x1xf32>
    %234 = vector.broadcast %233 : vector<1x8x1xf32> to vector<1x8x32xf32>
    %235 = arith.subf %225, %234 : vector<1x8x32xf32>
    %236 = arith.mulf %235, %235 : vector<1x8x32xf32>
    %cst_110 = arith.constant dense<0.000000e+00> : vector<1x8xf32>
    %237 = vector.multi_reduction <add>, %236, %cst_110 [2] : vector<1x8x32xf32> to vector<1x8xf32>
    %238 = vector.shape_cast %237 : vector<1x8xf32> to vector<1x8x1xf32>
    %cst_111 = arith.constant 3.200000e+01 : f32
    %239 = vector.broadcast %cst_111 : f32 to vector<1x8x1xf32>
    %240 = arith.divf %238, %239 : vector<1x8x1xf32>
    %241 = vector.broadcast %233 : vector<1x8x1xf32> to vector<1x8x32xf32>
    %242 = arith.subf %225, %241 : vector<1x8x32xf32>
    %cst_112 = arith.constant 9.99999974E-6 : f32
    %243 = vector.broadcast %cst_112 : f32 to vector<1x8x1xf32>
    %244 = arith.addf %240, %243 : vector<1x8x1xf32>
    %245 = math.rsqrt %244 : vector<1x8x1xf32>
    %246 = vector.broadcast %245 : vector<1x8x1xf32> to vector<1x8x32xf32>
    %247 = arith.mulf %242, %246 : vector<1x8x32xf32>
    %248 = vector.shape_cast %227 : vector<1x32xf32> to vector<1x1x32xf32>
    %249 = vector.broadcast %248 : vector<1x1x32xf32> to vector<1x8x32xf32>
    %250 = arith.mulf %247, %249 : vector<1x8x32xf32>
    %251 = vector.shape_cast %229 : vector<1x32xf32> to vector<1x1x32xf32>
    %252 = vector.broadcast %251 : vector<1x1x32xf32> to vector<1x8x32xf32>
    %253 = arith.addf %250, %252 : vector<1x8x32xf32>
    %254 = vector.broadcast %4 : vector<1x8x1xf32> to vector<1x8x32xf32>
    %255 = arith.mulf %253, %254 : vector<1x8x32xf32>
    %c0_113 = arith.constant 0 : index
    %c0_114 = arith.constant 0 : index
    %c0_115 = arith.constant 0 : index
    %256 = vector.load %arg27[%c0_113, %c0_114, %c0_115] : memref<1x8x32xf32, #tpu.memory_space<vmem>>, vector<1x8x32xf32>
    tpu.vector_store %arg27[%c0_113, %c0_114, %c0_115], %255 {strides = array<i32>} : memref<1x8x32xf32, #tpu.memory_space<vmem>>, vector<1x8x32xf32>,
    return
  }
  func.func @transform_0(%arg0: i32, %arg1: i32) -> (i32, i32, i32) {
    %c0_i32 = arith.constant 0 : i32
    %c0_i32_0 = arith.constant 0 : i32
    %c0_i32_1 = arith.constant 0 : i32
    return %arg0, %c0_i32, %c0_i32_0 : i32, i32, i32
  }
  func.func @transform_1(%arg0: i32, %arg1: i32) -> (i32, i32, i32) {
    %c0_i32 = arith.constant 0 : i32
    %c0_i32_0 = arith.constant 0 : i32
    %c0_i32_1 = arith.constant 0 : i32
    return %arg0, %c0_i32, %c0_i32_0 : i32, i32, i32
  }
  func.func @transform_2(%arg0: i32, %arg1: i32) -> (i32, i32, i32) {
    %c0_i32 = arith.constant 0 : i32
    %c0_i32_0 = arith.constant 0 : i32
    %c0_i32_1 = arith.constant 0 : i32
    return %arg0, %c0_i32, %c0_i32_0 : i32, i32, i32
  }
  func.func @transform_3(%arg0: i32, %arg1: i32) -> (i32, i32, i32) {
    %c0_i32 = arith.constant 0 : i32
    %c0_i32_0 = arith.constant 0 : i32
    %c0_i32_1 = arith.constant 0 : i32
    return %arg0, %c0_i32, %c0_i32_0 : i32, i32, i32
  }
  func.func @transform_4(%arg0: i32, %arg1: i32) -> (i32, i32, i32) {
    %c0_i32 = arith.constant 0 : i32
    %c0_i32_0 = arith.constant 0 : i32
    %c0_i32_1 = arith.constant 0 : i32
    return %arg0, %c0_i32, %c0_i32_0 : i32, i32, i32
  }
  func.func @transform_5(%arg0: i32, %arg1: i32) -> (i32, i32, i32) {
    %c0_i32 = arith.constant 0 : i32
    %c0_i32_0 = arith.constant 0 : i32
    %c0_i32_1 = arith.constant 0 : i32
    return %arg1, %c0_i32, %c0_i32_0 : i32, i32, i32
  }
  func.func @transform_6(%arg0: i32, %arg1: i32) -> (i32, i32, i32) {
    %c0_i32 = arith.constant 0 : i32
    %c0_i32_0 = arith.constant 0 : i32
    %c0_i32_1 = arith.constant 0 : i32
    return %arg1, %c0_i32, %c0_i32_0 : i32, i32, i32
  }
  func.func @transform_7(%arg0: i32, %arg1: i32) -> (i32, i32, i32) {
    %c0_i32 = arith.constant 0 : i32
    %c0_i32_0 = arith.constant 0 : i32
    %c0_i32_1 = arith.constant 0 : i32
    return %arg1, %c0_i32, %c0_i32_0 : i32, i32, i32
  }
  func.func @transform_8(%arg0: i32, %arg1: i32) -> (i32, i32, i32) {
    %c0_i32 = arith.constant 0 : i32
    %c0_i32_0 = arith.constant 0 : i32
    %c0_i32_1 = arith.constant 0 : i32
    return %arg1, %c0_i32, %c0_i32_0 : i32, i32, i32
  }
  func.func @transform_9(%arg0: i32, %arg1: i32) -> (i32, i32, i32) {
    %c0_i32 = arith.constant 0 : i32
    %c0_i32_0 = arith.constant 0 : i32
    %c0_i32_1 = arith.constant 0 : i32
    return %arg1, %c0_i32, %c0_i32_0 : i32, i32, i32
  }
  func.func @transform_10(%arg0: i32, %arg1: i32) -> (i32, i32, i32) {
    %c0_i32 = arith.constant 0 : i32
    %c0_i32_0 = arith.constant 0 : i32
    %c0_i32_1 = arith.constant 0 : i32
    return %arg1, %c0_i32, %c0_i32_0 : i32, i32, i32
  }
  func.func @transform_11(%arg0: i32, %arg1: i32) -> (i32, i32, i32) {
    %c0_i32 = arith.constant 0 : i32
    %c0_i32_0 = arith.constant 0 : i32
    %c0_i32_1 = arith.constant 0 : i32
    return %arg1, %c0_i32, %c0_i32_0 : i32, i32, i32
  }
  func.func @transform_12(%arg0: i32, %arg1: i32) -> (i32, i32, i32) {
    %c0_i32 = arith.constant 0 : i32
    %c0_i32_0 = arith.constant 0 : i32
    %c0_i32_1 = arith.constant 0 : i32
    return %arg1, %c0_i32, %c0_i32_0 : i32, i32, i32
  }
  func.func @transform_13(%arg0: i32, %arg1: i32) -> (i32, i32, i32) {
    %c0_i32 = arith.constant 0 : i32
    %c0_i32_0 = arith.constant 0 : i32
    %c0_i32_1 = arith.constant 0 : i32
    return %arg1, %c0_i32, %c0_i32_0 : i32, i32, i32
  }
  func.func @transform_14(%arg0: i32, %arg1: i32) -> (i32, i32, i32) {
    %c0_i32 = arith.constant 0 : i32
    %c0_i32_0 = arith.constant 0 : i32
    %c0_i32_1 = arith.constant 0 : i32
    return %arg1, %c0_i32, %c0_i32_0 : i32, i32, i32
  }
  func.func @transform_15(%arg0: i32, %arg1: i32) -> (i32, i32, i32) {
    %c0_i32 = arith.constant 0 : i32
    %c0_i32_0 = arith.constant 0 : i32
    %c0_i32_1 = arith.constant 0 : i32
    return %arg1, %c0_i32, %c0_i32_0 : i32, i32, i32
  }
  func.func @transform_16(%arg0: i32, %arg1: i32) -> (i32, i32, i32) {
    %c0_i32 = arith.constant 0 : i32
    %c0_i32_0 = arith.constant 0 : i32
    %c0_i32_1 = arith.constant 0 : i32
    return %arg1, %c0_i32, %c0_i32_0 : i32, i32, i32
  }
  func.func @transform_17(%arg0: i32, %arg1: i32) -> (i32, i32, i32) {
    %c0_i32 = arith.constant 0 : i32
    %c0_i32_0 = arith.constant 0 : i32
    %c0_i32_1 = arith.constant 0 : i32
    return %arg1, %c0_i32, %c0_i32_0 : i32, i32, i32
  }
  func.func @transform_18(%arg0: i32, %arg1: i32) -> (i32, i32, i32) {
    %c0_i32 = arith.constant 0 : i32
    %c0_i32_0 = arith.constant 0 : i32
    %c0_i32_1 = arith.constant 0 : i32
    return %arg1, %c0_i32, %c0_i32_0 : i32, i32, i32
  }
  func.func @transform_19(%arg0: i32, %arg1: i32) -> (i32, i32, i32) {
    %c0_i32 = arith.constant 0 : i32
    %c0_i32_0 = arith.constant 0 : i32
    %c0_i32_1 = arith.constant 0 : i32
    return %arg1, %c0_i32, %c0_i32_0 : i32, i32, i32
  }
  func.func @transform_20(%arg0: i32, %arg1: i32) -> (i32, i32, i32) {
    %c0_i32 = arith.constant 0 : i32
    %c0_i32_0 = arith.constant 0 : i32
    %c0_i32_1 = arith.constant 0 : i32
    return %arg1, %c0_i32, %c0_i32_0 : i32, i32, i32
  }
  func.func @transform_21(%arg0: i32, %arg1: i32) -> (i32, i32, i32) {
    %c0_i32 = arith.constant 0 : i32
    %c0_i32_0 = arith.constant 0 : i32
    %c0_i32_1 = arith.constant 0 : i32
    return %arg1, %c0_i32, %c0_i32_0 : i32, i32, i32
  }
  func.func @transform_22(%arg0: i32, %arg1: i32) -> (i32, i32, i32) {
    %c0_i32 = arith.constant 0 : i32
    %c0_i32_0 = arith.constant 0 : i32
    %c0_i32_1 = arith.constant 0 : i32
    return %arg1, %c0_i32, %c0_i32_0 : i32, i32, i32
  }
  func.func @transform_23(%arg0: i32, %arg1: i32) -> (i32, i32, i32) {
    %c0_i32 = arith.constant 0 : i32
    %c0_i32_0 = arith.constant 0 : i32
    %c0_i32_1 = arith.constant 0 : i32
    return %arg1, %c0_i32, %c0_i32_0 : i32, i32, i32
  }
  func.func @transform_24(%arg0: i32, %arg1: i32) -> (i32, i32, i32) {
    %c0_i32 = arith.constant 0 : i32
    %c0_i32_0 = arith.constant 0 : i32
    %c0_i32_1 = arith.constant 0 : i32
    return %arg1, %c0_i32, %c0_i32_0 : i32, i32, i32
  }
  func.func @transform_25(%arg0: i32, %arg1: i32) -> (i32, i32, i32) {
    %c0_i32 = arith.constant 0 : i32
    %c0_i32_0 = arith.constant 0 : i32
    %c0_i32_1 = arith.constant 0 : i32
    return %arg0, %c0_i32, %c0_i32_0 : i32, i32, i32
  }
}

</mosaic_0001>

<llo_original>
// kernel: decoder_forward.1
$region0: #{decoder_forward.1}
  #allocation0 [shape = 'u32[]', space=smem, size = 0x4, offset = 0x4, fixed_abs, tag = 'smem constant byte address 0x4 - core index']
  #allocation1 [shape = 'u32[144,128]{1,0:T(1,128)}', space=vmem, size = 0x12000, scoped, tag = 'internal scratch']
  %s0 = inlined_call_operand.vmem [shape: f32[2,8,32], index: 0, kind: input, shape index: {}]
  %s1 = inlined_call_operand.vmem [shape: f32[2,16,32], index: 1, kind: input, shape index: {}]
  %s2 = inlined_call_operand.vmem [shape: f32[2,1,8], index: 2, kind: input, shape index: {}]
  %s3 = inlined_call_operand.vmem [shape: f32[2,1,16], index: 3, kind: input, shape index: {}]
  %s4 = inlined_call_operand.vmem [shape: f32[2,8,1], index: 4, kind: input, shape index: {}]
  %s5 = inlined_call_operand.vmem [shape: bf16[2,32,96], index: 5, kind: input, shape index: {}]
  %s6 = inlined_call_operand.vmem [shape: f32[2,1,96], index: 6, kind: input, shape index: {}]
  %s7 = inlined_call_operand.vmem [shape: bf16[2,32,32], index: 7, kind: input, shape index: {}]
  %s8 = inlined_call_operand.vmem [shape: f32[2,1,32], index: 8, kind: input, shape index: {}]
  %s9 = inlined_call_operand.vmem [shape: f32[2,1,32], index: 9, kind: input, shape index: {}]
  %s10 = inlined_call_operand.vmem [shape: f32[2,1,32], index: 10, kind: input, shape index: {}]
  %s11 = inlined_call_operand.vmem [shape: bf16[2,32,32], index: 11, kind: input, shape index: {}]
  %s12 = inlined_call_operand.vmem [shape: f32[2,1,32], index: 12, kind: input, shape index: {}]
  %s13 = inlined_call_operand.vmem [shape: bf16[2,32,64], index: 13, kind: input, shape index: {}]
  %s14 = inlined_call_operand.vmem [shape: f32[2,1,64], index: 14, kind: input, shape index: {}]
  %s15 = inlined_call_operand.vmem [shape: bf16[2,32,32], index: 15, kind: input, shape index: {}]
  %s16 = inlined_call_operand.vmem [shape: f32[2,1,32], index: 16, kind: input, shape index: {}]
  %s17 = inlined_call_operand.vmem [shape: f32[2,1,32], index: 17, kind: input, shape index: {}]
  %s18 = inlined_call_operand.vmem [shape: f32[2,1,32], index: 18, kind: input, shape index: {}]
  %s19 = inlined_call_operand.vmem [shape: bf16[2,32,64], index: 19, kind: input, shape index: {}]
  %s20 = inlined_call_operand.vmem [shape: f32[2,1,64], index: 20, kind: input, shape index: {}]
  %s21 = inlined_call_operand.vmem [shape: bf16[2,64,32], index: 21, kind: input, shape index: {}]
  %s22 = inlined_call_operand.vmem [shape: f32[2,1,32], index: 22, kind: input, shape index: {}]
  %s23 = inlined_call_operand.vmem [shape: f32[2,1,32], index: 23, kind: input, shape index: {}]
  %s24 = inlined_call_operand.vmem [shape: f32[2,1,32], index: 24, kind: input, shape index: {}]
  %s25 = inlined_call_operand.hbm [shape: f32[2,8,32], index: 25, kind: output, shape index: {}]
  %s26 = sld [smem:[#allocation0]]
  $region137: #{decoder_forward.1} parent=0
    _
  %s28 = ssub.s32 1, %s26
  %s29 = scalar_select 0, %s28, %s26
  $region1: #{decoder_forward.1} parent=0
    #allocation2 [shape = 'u8[8192]{0}', space=vmem, size = 0x2000, scoped, tag = 'output window, operand 0']
    #allocation3 [shape = 's32[2]{0}', space=sflag, size = 0x8, scoped, tag = 'scoped memory for decoder_forward.1']
    %30 = vsyncpa [#allocation3], 0
    %s31 = scalar_lea.sflag [#allocation3], 1
    %32 = vsyncpa %s31, 0
    loop: start=0, step=1, limit=6
    $region2: #{decoder_forward.1} parent=1 // loop_pre_header
      _
    $region3: #{decoder_forward.1} parent=1 // loop_header
      %s34 = sphi 0, %s38
      %p35 = scmp.ge.s32.totalorder %s34, 6
      %s41 = sphi 0, %s53
      %s42 = sphi 0, %s49
      %s43 = sphi 0, %s41
      %s44 = sphi 0, %s42
      %s45 = sphi 0, %s43
      %s46 = sphi 0, %s44
      %s56 = sphi 0, %s58
      %s59 = sphi 0, %s56
      %s60 = sphi 0, %s59
      %s76 = sphi 0, %s60
      %s82 = sphi 0, %s84
      %s85 = sphi 0, %s82
      %s86 = sphi 0, %s85
      %s102 = sphi 0, %s86
      %s108 = sphi 0, %s110
      %s111 = sphi 0, %s108
      %s112 = sphi 0, %s111
      %s128 = sphi 0, %s112
      %s134 = sphi 0, %s136
      %s137 = sphi 0, %s134
      %s138 = sphi 0, %s137
      %s154 = sphi 0, %s138
      %s160 = sphi 0, %s162
      %s163 = sphi 0, %s160
      %s164 = sphi 0, %s163
      %s180 = sphi 0, %s164
      %s186 = sphi 0, %s188
      %s189 = sphi 0, %s186
      %s190 = sphi 0, %s189
      %s206 = sphi 0, %s190
      %s212 = sphi 0, %s214
      %s215 = sphi 0, %s212
      %s216 = sphi 0, %s215
      %s232 = sphi 0, %s216
      %s238 = sphi 0, %s240
      %s241 = sphi 0, %s238
      %s242 = sphi 0, %s241
      %s258 = sphi 0, %s242
      %s264 = sphi 0, %s266
      %s267 = sphi 0, %s264
      %s268 = sphi 0, %s267
      %s284 = sphi 0, %s268
      %s290 = sphi 0, %s292
      %s293 = sphi 0, %s290
      %s294 = sphi 0, %s293
      %s310 = sphi 0, %s294
      %s316 = sphi 0, %s318
      %s319 = sphi 0, %s316
      %s320 = sphi 0, %s319
      %s336 = sphi 0, %s320
      %s342 = sphi 0, %s344
      %s345 = sphi 0, %s342
      %s346 = sphi 0, %s345
      %s362 = sphi 0, %s346
      %s368 = sphi 0, %s370
      %s371 = sphi 0, %s368
      %s372 = sphi 0, %s371
      %s388 = sphi 0, %s372
      %s394 = sphi 0, %s396
      %s397 = sphi 0, %s394
      %s398 = sphi 0, %s397
      %s414 = sphi 0, %s398
      %s420 = sphi 0, %s422
      %s423 = sphi 0, %s420
      %s424 = sphi 0, %s423
      %s440 = sphi 0, %s424
      %s446 = sphi 0, %s448
      %s449 = sphi 0, %s446
      %s450 = sphi 0, %s449
      %s466 = sphi 0, %s450
      %s472 = sphi 0, %s474
      %s475 = sphi 0, %s472
      %s476 = sphi 0, %s475
      %s492 = sphi 0, %s476
      %s498 = sphi 0, %s500
      %s501 = sphi 0, %s498
      %s502 = sphi 0, %s501
      %s518 = sphi 0, %s502
      %s524 = sphi 0, %s526
      %s527 = sphi 0, %s524
      %s528 = sphi 0, %s527
      %s544 = sphi 0, %s528
      %s550 = sphi 0, %s552
      %s553 = sphi 0, %s550
      %s554 = sphi 0, %s553
      %s570 = sphi 0, %s554
      %s576 = sphi 0, %s578
      %s579 = sphi 0, %s576
      %s580 = sphi 0, %s579
      %s596 = sphi 0, %s580
      %s602 = sphi 0, %s604
      %s605 = sphi 0, %s602
      %s606 = sphi 0, %s605
      %s622 = sphi 0, %s606
      %s628 = sphi 0, %s630
      %s631 = sphi 0, %s628
      %s632 = sphi 0, %s631
      %s648 = sphi 0, %s632
      %s654 = sphi 0, %s656
      %s657 = sphi 0, %s654
      %s658 = sphi 0, %s657
      %s674 = sphi 0, %s658
      %s680 = sphi 0, %s682
      %s683 = sphi 0, %s680
      %s684 = sphi 0, %s683
      %s700 = sphi 0, %s684
      %s706 = sphi 0, %s708
      %s709 = sphi 0, %s706
      %s710 = sphi 0, %s709
      %s726 = sphi 0, %s710
    $region4: #{decoder_forward.1} parent=1 // loop_header_branch
      %37 = sbr.rel (%p35) target = $region8
    $region5: #{decoder_forward.1} parent=1 // loop_body
      %s39 = ssub.s32 %s34, 1
      %s40 = ssub.s32 %s34, 2
      %s47 = sadd.s32 1, %s42
      %p48 = scmp.ge.s32.totalorder %s47, 2
      %s49 = scalar_select %p48, 0, %s47
      %s50 = sadd.s32 1, %s41
      %s51 = scalar_select %p48, %s50, %s41
      %p52 = scmp.ge.s32.totalorder %s51, 2
      %s53 = scalar_select %p52, 0, %s51
      %s54 = ssub.s32 %s41, %s53
      %p55 = scmp.eq.s32.totalorder %s54, 0
      %s57 = sadd.s32 %s56, 1
      %s58 = scalar_select %p55, %s56, %s57
      %p61 = pneg %p55
      %p62 = scmp.eq.s32.totalorder %s34, 3
      %p63 = por %p61, %p62
      %p64 = scmp.ne.s32.totalorder %s56, %s59
      %p65 = scmp.eq.s32.totalorder %s34, 0
      %p66 = por %p64, %p65
      %p67 = scmp.ne.s32.totalorder %s56, %s59
      %p68 = scmp.eq.s32.totalorder %s39, 3
      %p69 = por %p67, %p68
      %p70 = scmp.ne.s32.totalorder %s59, %s60
      %p71 = scmp.eq.s32.totalorder %s39, 0
      %p72 = por %p70, %p71
      %p73 = scmp.ne.s32.totalorder %s59, %s60
      %p74 = scmp.eq.s32.totalorder %s40, 3
      %p75 = por %p73, %p74
      %p77 = scmp.ne.s32.totalorder %s60, %s76
      %p78 = scmp.eq.s32.totalorder %s40, 0
      %p79 = por %p77, %p78
      %s80 = ssub.s32 %s41, %s53
      %p81 = scmp.eq.s32.totalorder %s80, 0
      %s83 = sadd.s32 %s82, 1
      %s84 = scalar_select %p81, %s82, %s83
      %p87 = pneg %p81
      %p88 = scmp.eq.s32.totalorder %s34, 3
      %p89 = por %p87, %p88
      %p90 = scmp.ne.s32.totalorder %s82, %s85
      %p91 = scmp.eq.s32.totalorder %s34, 0
      %p92 = por %p90, %p91
      %p93 = scmp.ne.s32.totalorder %s82, %s85
      %p94 = scmp.eq.s32.totalorder %s39, 3
      %p95 = por %p93, %p94
      %p96 = scmp.ne.s32.totalorder %s85, %s86
      %p97 = scmp.eq.s32.totalorder %s39, 0
      %p98 = por %p96, %p97
      %p99 = scmp.ne.s32.totalorder %s85, %s86
      %p100 = scmp.eq.s32.totalorder %s40, 3
      %p101 = por %p99, %p100
      %p103 = scmp.ne.s32.totalorder %s86, %s102
      %p104 = scmp.eq.s32.totalorder %s40, 0
      %p105 = por %p103, %p104
      %s106 = ssub.s32 %s41, %s53
      %p107 = scmp.eq.s32.totalorder %s106, 0
      %s109 = sadd.s32 %s108, 1
      %s110 = scalar_select %p107, %s108, %s109
      %p113 = pneg %p107
      %p114 = scmp.eq.s32.totalorder %s34, 3
      %p115 = por %p113, %p114
      %p116 = scmp.ne.s32.totalorder %s108, %s111
      %p117 = scmp.eq.s32.totalorder %s34, 0
      %p118 = por %p116, %p117
      %p119 = scmp.ne.s32.totalorder %s108, %s111
      %p120 = scmp.eq.s32.totalorder %s39, 3
      %p121 = por %p119, %p120
      %p122 = scmp.ne.s32.totalorder %s111, %s112
      %p123 = scmp.eq.s32.totalorder %s39, 0
      %p124 = por %p122, %p123
      %p125 = scmp.ne.s32.totalorder %s111, %s112
      %p126 = scmp.eq.s32.totalorder %s40, 3
      %p127 = por %p125, %p126
      %p129 = scmp.ne.s32.totalorder %s112, %s128
      %p130 = scmp.eq.s32.totalorder %s40, 0
      %p131 = por %p129, %p130
      %s132 = ssub.s32 %s41, %s53
      %p133 = scmp.eq.s32.totalorder %s132, 0
      %s135 = sadd.s32 %s134, 1
      %s136 = scalar_select %p133, %s134, %s135
      %p139 = pneg %p133
      %p140 = scmp.eq.s32.totalorder %s34, 3
      %p141 = por %p139, %p140
      %p142 = scmp.ne.s32.totalorder %s134, %s137
      %p143 = scmp.eq.s32.totalorder %s34, 0
      %p144 = por %p142, %p143
      %p145 = scmp.ne.s32.totalorder %s134, %s137
      %p146 = scmp.eq.s32.totalorder %s39, 3
      %p147 = por %p145, %p146
      %p148 = scmp.ne.s32.totalorder %s137, %s138
      %p149 = scmp.eq.s32.totalorder %s39, 0
      %p150 = por %p148, %p149
      %p151 = scmp.ne.s32.totalorder %s137, %s138
      %p152 = scmp.eq.s32.totalorder %s40, 3
      %p153 = por %p151, %p152
      %p155 = scmp.ne.s32.totalorder %s138, %s154
      %p156 = scmp.eq.s32.totalorder %s40, 0
      %p157 = por %p155, %p156
      %s158 = ssub.s32 %s41, %s53
      %p159 = scmp.eq.s32.totalorder %s158, 0
      %s161 = sadd.s32 %s160, 1
      %s162 = scalar_select %p159, %s160, %s161
      %p165 = pneg %p159
      %p166 = scmp.eq.s32.totalorder %s34, 3
      %p167 = por %p165, %p166
      %p168 = scmp.ne.s32.totalorder %s160, %s163
      %p169 = scmp.eq.s32.totalorder %s34, 0
      %p170 = por %p168, %p169
      %p171 = scmp.ne.s32.totalorder %s160, %s163
      %p172 = scmp.eq.s32.totalorder %s39, 3
      %p173 = por %p171, %p172
      %p174 = scmp.ne.s32.totalorder %s163, %s164
      %p175 = scmp.eq.s32.totalorder %s39, 0
      %p176 = por %p174, %p175
      %p177 = scmp.ne.s32.totalorder %s163, %s164
      %p178 = scmp.eq.s32.totalorder %s40, 3
      %p179 = por %p177, %p178
      %p181 = scmp.ne.s32.totalorder %s164, %s180
      %p182 = scmp.eq.s32.totalorder %s40, 0
      %p183 = por %p181, %p182
      %s184 = ssub.s32 %s42, %s49
      %p185 = scmp.eq.s32.totalorder %s184, 0
      %s187 = sadd.s32 %s186, 1
      %s188 = scalar_select %p185, %s186, %s187
      %p191 = pneg %p185
      %p192 = scmp.eq.s32.totalorder %s34, 3
      %p193 = por %p191, %p192
      %p194 = scmp.ne.s32.totalorder %s186, %s189
      %p195 = scmp.eq.s32.totalorder %s34, 0
      %p196 = por %p194, %p195
      %p197 = scmp.ne.s32.totalorder %s186, %s189
      %p198 = scmp.eq.s32.totalorder %s39, 3
      %p199 = por %p197, %p198
      %p200 = scmp.ne.s32.totalorder %s189, %s190
      %p201 = scmp.eq.s32.totalorder %s39, 0
      %p202 = por %p200, %p201
      %p203 = scmp.ne.s32.totalorder %s189, %s190
      %p204 = scmp.eq.s32.totalorder %s40, 3
      %p205 = por %p203, %p204
      %p207 = scmp.ne.s32.totalorder %s190, %s206
      %p208 = scmp.eq.s32.totalorder %s40, 0
      %p209 = por %p207, %p208
      %s210 = ssub.s32 %s42, %s49
      %p211 = scmp.eq.s32.totalorder %s210, 0
      %s213 = sadd.s32 %s212, 1
      %s214 = scalar_select %p211, %s212, %s213
      %p217 = pneg %p211
      %p218 = scmp.eq.s32.totalorder %s34, 3
      %p219 = por %p217, %p218
      %p220 = scmp.ne.s32.totalorder %s212, %s215
      %p221 = scmp.eq.s32.totalorder %s34, 0
      %p222 = por %p220, %p221
      %p223 = scmp.ne.s32.totalorder %s212, %s215
      %p224 = scmp.eq.s32.totalorder %s39, 3
      %p225 = por %p223, %p224
      %p226 = scmp.ne.s32.totalorder %s215, %s216
      %p227 = scmp.eq.s32.totalorder %s39, 0
      %p228 = por %p226, %p227
      %p229 = scmp.ne.s32.totalorder %s215, %s216
      %p230 = scmp.eq.s32.totalorder %s40, 3
      %p231 = por %p229, %p230
      %p233 = scmp.ne.s32.totalorder %s216, %s232
      %p234 = scmp.eq.s32.totalorder %s40, 0
      %p235 = por %p233, %p234
      %s236 = ssub.s32 %s42, %s49
      %p237 = scmp.eq.s32.totalorder %s236, 0
      %s239 = sadd.s32 %s238, 1
      %s240 = scalar_select %p237, %s238, %s239
      %p243 = pneg %p237
      %p244 = scmp.eq.s32.totalorder %s34, 3
      %p245 = por %p243, %p244
      %p246 = scmp.ne.s32.totalorder %s238, %s241
      %p247 = scmp.eq.s32.totalorder %s34, 0
      %p248 = por %p246, %p247
      %p249 = scmp.ne.s32.totalorder %s238, %s241
      %p250 = scmp.eq.s32.totalorder %s39, 3
      %p251 = por %p249, %p250
      %p252 = scmp.ne.s32.totalorder %s241, %s242
      %p253 = scmp.eq.s32.totalorder %s39, 0
      %p254 = por %p252, %p253
      %p255 = scmp.ne.s32.totalorder %s241, %s242
      %p256 = scmp.eq.s32.totalorder %s40, 3
      %p257 = por %p255, %p256
      %p259 = scmp.ne.s32.totalorder %s242, %s258
      %p260 = scmp.eq.s32.totalorder %s40, 0
      %p261 = por %p259, %p260
      %s262 = ssub.s32 %s42, %s49
      %p263 = scmp.eq.s32.totalorder %s262, 0
      %s265 = sadd.s32 %s264, 1
      %s266 = scalar_select %p263, %s264, %s265
      %p269 = pneg %p263
      %p270 = scmp.eq.s32.totalorder %s34, 3
      %p271 = por %p269, %p270
      %p272 = scmp.ne.s32.totalorder %s264, %s267
      %p273 = scmp.eq.s32.totalorder %s34, 0
      %p274 = por %p272, %p273
      %p275 = scmp.ne.s32.totalorder %s264, %s267
      %p276 = scmp.eq.s32.totalorder %s39, 3
      %p277 = por %p275, %p276
      %p278 = scmp.ne.s32.totalorder %s267, %s268
      %p279 = scmp.eq.s32.totalorder %s39, 0
      %p280 = por %p278, %p279
      %p281 = scmp.ne.s32.totalorder %s267, %s268
      %p282 = scmp.eq.s32.totalorder %s40, 3
      %p283 = por %p281, %p282
      %p285 = scmp.ne.s32.totalorder %s268, %s284
      %p286 = scmp.eq.s32.totalorder %s40, 0
      %p287 = por %p285, %p286
      %s288 = ssub.s32 %s42, %s49
      %p289 = scmp.eq.s32.totalorder %s288, 0
      %s291 = sadd.s32 %s290, 1
      %s292 = scalar_select %p289, %s290, %s291
      %p295 = pneg %p289
      %p296 = scmp.eq.s32.totalorder %s34, 3
      %p297 = por %p295, %p296
      %p298 = scmp.ne.s32.totalorder %s290, %s293
      %p299 = scmp.eq.s32.totalorder %s34, 0
      %p300 = por %p298, %p299
      %p301 = scmp.ne.s32.totalorder %s290, %s293
      %p302 = scmp.eq.s32.totalorder %s39, 3
      %p303 = por %p301, %p302
      %p304 = scmp.ne.s32.totalorder %s293, %s294
      %p305 = scmp.eq.s32.totalorder %s39, 0
      %p306 = por %p304, %p305
      %p307 = scmp.ne.s32.totalorder %s293, %s294
      %p308 = scmp.eq.s32.totalorder %s40, 3
      %p309 = por %p307, %p308
      %p311 = scmp.ne.s32.totalorder %s294, %s310
      %p312 = scmp.eq.s32.totalorder %s40, 0
      %p313 = por %p311, %p312
      %s314 = ssub.s32 %s42, %s49
      %p315 = scmp.eq.s32.totalorder %s314, 0
      %s317 = sadd.s32 %s316, 1
      %s318 = scalar_select %p315, %s316, %s317
      %p321 = pneg %p315
      %p322 = scmp.eq.s32.totalorder %s34, 3
      %p323 = por %p321, %p322
      %p324 = scmp.ne.s32.totalorder %s316, %s319
      %p325 = scmp.eq.s32.totalorder %s34, 0
      %p326 = por %p324, %p325
      %p327 = scmp.ne.s32.totalorder %s316, %s319
      %p328 = scmp.eq.s32.totalorder %s39, 3
      %p329 = por %p327, %p328
      %p330 = scmp.ne.s32.totalorder %s319, %s320
      %p331 = scmp.eq.s32.totalorder %s39, 0
      %p332 = por %p330, %p331
      %p333 = scmp.ne.s32.totalorder %s319, %s320
      %p334 = scmp.eq.s32.totalorder %s40, 3
      %p335 = por %p333, %p334
      %p337 = scmp.ne.s32.totalorder %s320, %s336
      %p338 = scmp.eq.s32.totalorder %s40, 0
      %p339 = por %p337, %p338
      %s340 = ssub.s32 %s42, %s49
      %p341 = scmp.eq.s32.totalorder %s340, 0
      %s343 = sadd.s32 %s342, 1
      %s344 = scalar_select %p341, %s342, %s343
      %p347 = pneg %p341
      %p348 = scmp.eq.s32.totalorder %s34, 3
      %p349 = por %p347, %p348
      %p350 = scmp.ne.s32.totalorder %s342, %s345
      %p351 = scmp.eq.s32.totalorder %s34, 0
      %p352 = por %p350, %p351
      %p353 = scmp.ne.s32.totalorder %s342, %s345
      %p354 = scmp.eq.s32.totalorder %s39, 3
      %p355 = por %p353, %p354
      %p356 = scmp.ne.s32.totalorder %s345, %s346
      %p357 = scmp.eq.s32.totalorder %s39, 0
      %p358 = por %p356, %p357
      %p359 = scmp.ne.s32.totalorder %s345, %s346
      %p360 = scmp.eq.s32.totalorder %s40, 3
      %p361 = por %p359, %p360
      %p363 = scmp.ne.s32.totalorder %s346, %s362
      %p364 = scmp.eq.s32.totalorder %s40, 0
      %p365 = por %p363, %p364
      %s366 = ssub.s32 %s42, %s49
      %p367 = scmp.eq.s32.totalorder %s366, 0
      %s369 = sadd.s32 %s368, 1
      %s370 = scalar_select %p367, %s368, %s369
      %p373 = pneg %p367
      %p374 = scmp.eq.s32.totalorder %s34, 3
      %p375 = por %p373, %p374
      %p376 = scmp.ne.s32.totalorder %s368, %s371
      %p377 = scmp.eq.s32.totalorder %s34, 0
      %p378 = por %p376, %p377
      %p379 = scmp.ne.s32.totalorder %s368, %s371
      %p380 = scmp.eq.s32.totalorder %s39, 3
      %p381 = por %p379, %p380
      %p382 = scmp.ne.s32.totalorder %s371, %s372
      %p383 = scmp.eq.s32.totalorder %s39, 0
      %p384 = por %p382, %p383
      %p385 = scmp.ne.s32.totalorder %s371, %s372
      %p386 = scmp.eq.s32.totalorder %s40, 3
      %p387 = por %p385, %p386
      %p389 = scmp.ne.s32.totalorder %s372, %s388
      %p390 = scmp.eq.s32.totalorder %s40, 0
      %p391 = por %p389, %p390
      %s392 = ssub.s32 %s42, %s49
      %p393 = scmp.eq.s32.totalorder %s392, 0
      %s395 = sadd.s32 %s394, 1
      %s396 = scalar_select %p393, %s394, %s395
      %p399 = pneg %p393
      %p400 = scmp.eq.s32.totalorder %s34, 3
      %p401 = por %p399, %p400
      %p402 = scmp.ne.s32.totalorder %s394, %s397
      %p403 = scmp.eq.s32.totalorder %s34, 0
      %p404 = por %p402, %p403
      %p405 = scmp.ne.s32.totalorder %s394, %s397
      %p406 = scmp.eq.s32.totalorder %s39, 3
      %p407 = por %p405, %p406
      %p408 = scmp.ne.s32.totalorder %s397, %s398
      %p409 = scmp.eq.s32.totalorder %s39, 0
      %p410 = por %p408, %p409
      %p411 = scmp.ne.s32.totalorder %s397, %s398
      %p412 = scmp.eq.s32.totalorder %s40, 3
      %p413 = por %p411, %p412
      %p415 = scmp.ne.s32.totalorder %s398, %s414
      %p416 = scmp.eq.s32.totalorder %s40, 0
      %p417 = por %p415, %p416
      %s418 = ssub.s32 %s42, %s49
      %p419 = scmp.eq.s32.totalorder %s418, 0
      %s421 = sadd.s32 %s420, 1
      %s422 = scalar_select %p419, %s420, %s421
      %p425 = pneg %p419
      %p426 = scmp.eq.s32.totalorder %s34, 3
      %p427 = por %p425, %p426
      %p428 = scmp.ne.s32.totalorder %s420, %s423
      %p429 = scmp.eq.s32.totalorder %s34, 0
      %p430 = por %p428, %p429
      %p431 = scmp.ne.s32.totalorder %s420, %s423
      %p432 = scmp.eq.s32.totalorder %s39, 3
      %p433 = por %p431, %p432
      %p434 = scmp.ne.s32.totalorder %s423, %s424
      %p435 = scmp.eq.s32.totalorder %s39, 0
      %p436 = por %p434, %p435
      %p437 = scmp.ne.s32.totalorder %s423, %s424
      %p438 = scmp.eq.s32.totalorder %s40, 3
      %p439 = por %p437, %p438
      %p441 = scmp.ne.s32.totalorder %s424, %s440
      %p442 = scmp.eq.s32.totalorder %s40, 0
      %p443 = por %p441, %p442
      %s444 = ssub.s32 %s42, %s49
      %p445 = scmp.eq.s32.totalorder %s444, 0
      %s447 = sadd.s32 %s446, 1
      %s448 = scalar_select %p445, %s446, %s447
      %p451 = pneg %p445
      %p452 = scmp.eq.s32.totalorder %s34, 3
      %p453 = por %p451, %p452
      %p454 = scmp.ne.s32.totalorder %s446, %s449
      %p455 = scmp.eq.s32.totalorder %s34, 0
      %p456 = por %p454, %p455
      %p457 = scmp.ne.s32.totalorder %s446, %s449
      %p458 = scmp.eq.s32.totalorder %s39, 3
      %p459 = por %p457, %p458
      %p460 = scmp.ne.s32.totalorder %s449, %s450
      %p461 = scmp.eq.s32.totalorder %s39, 0
      %p462 = por %p460, %p461
      %p463 = scmp.ne.s32.totalorder %s449, %s450
      %p464 = scmp.eq.s32.totalorder %s40, 3
      %p465 = por %p463, %p464
      %p467 = scmp.ne.s32.totalorder %s450, %s466
      %p468 = scmp.eq.s32.totalorder %s40, 0
      %p469 = por %p467, %p468
      %s470 = ssub.s32 %s42, %s49
      %p471 = scmp.eq.s32.totalorder %s470, 0
      %s473 = sadd.s32 %s472, 1
      %s474 = scalar_select %p471, %s472, %s473
      %p477 = pneg %p471
      %p478 = scmp.eq.s32.totalorder %s34, 3
      %p479 = por %p477, %p478
      %p480 = scmp.ne.s32.totalorder %s472, %s475
      %p481 = scmp.eq.s32.totalorder %s34, 0
      %p482 = por %p480, %p481
      %p483 = scmp.ne.s32.totalorder %s472, %s475
      %p484 = scmp.eq.s32.totalorder %s39, 3
      %p485 = por %p483, %p484
      %p486 = scmp.ne.s32.totalorder %s475, %s476
      %p487 = scmp.eq.s32.totalorder %s39, 0
      %p488 = por %p486, %p487
      %p489 = scmp.ne.s32.totalorder %s475, %s476
      %p490 = scmp.eq.s32.totalorder %s40, 3
      %p491 = por %p489, %p490
      %p493 = scmp.ne.s32.totalorder %s476, %s492
      %p494 = scmp.eq.s32.totalorder %s40, 0
      %p495 = por %p493, %p494
      %s496 = ssub.s32 %s42, %s49
      %p497 = scmp.eq.s32.totalorder %s496, 0
      %s499 = sadd.s32 %s498, 1
      %s500 = scalar_select %p497, %s498, %s499
      %p503 = pneg %p497
      %p504 = scmp.eq.s32.totalorder %s34, 3
      %p505 = por %p503, %p504
      %p506 = scmp.ne.s32.totalorder %s498, %s501
      %p507 = scmp.eq.s32.totalorder %s34, 0
      %p508 = por %p506, %p507
      %p509 = scmp.ne.s32.totalorder %s498, %s501
      %p510 = scmp.eq.s32.totalorder %s39, 3
      %p511 = por %p509, %p510
      %p512 = scmp.ne.s32.totalorder %s501, %s502
      %p513 = scmp.eq.s32.totalorder %s39, 0
      %p514 = por %p512, %p513
      %p515 = scmp.ne.s32.totalorder %s501, %s502
      %p516 = scmp.eq.s32.totalorder %s40, 3
      %p517 = por %p515, %p516
      %p519 = scmp.ne.s32.totalorder %s502, %s518
      %p520 = scmp.eq.s32.totalorder %s40, 0
      %p521 = por %p519, %p520
      %s522 = ssub.s32 %s42, %s49
      %p523 = scmp.eq.s32.totalorder %s522, 0
      %s525 = sadd.s32 %s524, 1
      %s526 = scalar_select %p523, %s524, %s525
      %p529 = pneg %p523
      %p530 = scmp.eq.s32.totalorder %s34, 3
      %p531 = por %p529, %p530
      %p532 = scmp.ne.s32.totalorder %s524, %s527
      %p533 = scmp.eq.s32.totalorder %s34, 0
      %p534 = por %p532, %p533
      %p535 = scmp.ne.s32.totalorder %s524, %s527
      %p536 = scmp.eq.s32.totalorder %s39, 3
      %p537 = por %p535, %p536
      %p538 = scmp.ne.s32.totalorder %s527, %s528
      %p539 = scmp.eq.s32.totalorder %s39, 0
      %p540 = por %p538, %p539
      %p541 = scmp.ne.s32.totalorder %s527, %s528
      %p542 = scmp.eq.s32.totalorder %s40, 3
      %p543 = por %p541, %p542
      %p545 = scmp.ne.s32.totalorder %s528, %s544
      %p546 = scmp.eq.s32.totalorder %s40, 0
      %p547 = por %p545, %p546
      %s548 = ssub.s32 %s42, %s49
      %p549 = scmp.eq.s32.totalorder %s548, 0
      %s551 = sadd.s32 %s550, 1
      %s552 = scalar_select %p549, %s550, %s551
      %p555 = pneg %p549
      %p556 = scmp.eq.s32.totalorder %s34, 3
      %p557 = por %p555, %p556
      %p558 = scmp.ne.s32.totalorder %s550, %s553
      %p559 = scmp.eq.s32.totalorder %s34, 0
      %p560 = por %p558, %p559
      %p561 = scmp.ne.s32.totalorder %s550, %s553
      %p562 = scmp.eq.s32.totalorder %s39, 3
      %p563 = por %p561, %p562
      %p564 = scmp.ne.s32.totalorder %s553, %s554
      %p565 = scmp.eq.s32.totalorder %s39, 0
      %p566 = por %p564, %p565
      %p567 = scmp.ne.s32.totalorder %s553, %s554
      %p568 = scmp.eq.s32.totalorder %s40, 3
      %p569 = por %p567, %p568
      %p571 = scmp.ne.s32.totalorder %s554, %s570
      %p572 = scmp.eq.s32.totalorder %s40, 0
      %p573 = por %p571, %p572
      %s574 = ssub.s32 %s42, %s49
      %p575 = scmp.eq.s32.totalorder %s574, 0
      %s577 = sadd.s32 %s576, 1
      %s578 = scalar_select %p575, %s576, %s577
      %p581 = pneg %p575
      %p582 = scmp.eq.s32.totalorder %s34, 3
      %p583 = por %p581, %p582
      %p584 = scmp.ne.s32.totalorder %s576, %s579
      %p585 = scmp.eq.s32.totalorder %s34, 0
      %p586 = por %p584, %p585
      %p587 = scmp.ne.s32.totalorder %s576, %s579
      %p588 = scmp.eq.s32.totalorder %s39, 3
      %p589 = por %p587, %p588
      %p590 = scmp.ne.s32.totalorder %s579, %s580
      %p591 = scmp.eq.s32.totalorder %s39, 0
      %p592 = por %p590, %p591
      %p593 = scmp.ne.s32.totalorder %s579, %s580
      %p594 = scmp.eq.s32.totalorder %s40, 3
      %p595 = por %p593, %p594
      %p597 = scmp.ne.s32.totalorder %s580, %s596
      %p598 = scmp.eq.s32.totalorder %s40, 0
      %p599 = por %p597, %p598
      %s600 = ssub.s32 %s42, %s49
      %p601 = scmp.eq.s32.totalorder %s600, 0
      %s603 = sadd.s32 %s602, 1
      %s604 = scalar_select %p601, %s602, %s603
      %p607 = pneg %p601
      %p608 = scmp.eq.s32.totalorder %s34, 3
      %p609 = por %p607, %p608
      %p610 = scmp.ne.s32.totalorder %s602, %s605
      %p611 = scmp.eq.s32.totalorder %s34, 0
      %p612 = por %p610, %p611
      %p613 = scmp.ne.s32.totalorder %s602, %s605
      %p614 = scmp.eq.s32.totalorder %s39, 3
      %p615 = por %p613, %p614
      %p616 = scmp.ne.s32.totalorder %s605, %s606
      %p617 = scmp.eq.s32.totalorder %s39, 0
      %p618 = por %p616, %p617
      %p619 = scmp.ne.s32.totalorder %s605, %s606
      %p620 = scmp.eq.s32.totalorder %s40, 3
      %p621 = por %p619, %p620
      %p623 = scmp.ne.s32.totalorder %s606, %s622
      %p624 = scmp.eq.s32.totalorder %s40, 0
      %p625 = por %p623, %p624
      %s626 = ssub.s32 %s42, %s49
      %p627 = scmp.eq.s32.totalorder %s626, 0
      %s629 = sadd.s32 %s628, 1
      %s630 = scalar_select %p627, %s628, %s629
      %p633 = pneg %p627
      %p634 = scmp.eq.s32.totalorder %s34, 3
      %p635 = por %p633, %p634
      %p636 = scmp.ne.s32.totalorder %s628, %s631
      %p637 = scmp.eq.s32.totalorder %s34, 0
      %p638 = por %p636, %p637
      %p639 = scmp.ne.s32.totalorder %s628, %s631
      %p640 = scmp.eq.s32.totalorder %s39, 3
      %p641 = por %p639, %p640
      %p642 = scmp.ne.s32.totalorder %s631, %s632
      %p643 = scmp.eq.s32.totalorder %s39, 0
      %p644 = por %p642, %p643
      %p645 = scmp.ne.s32.totalorder %s631, %s632
      %p646 = scmp.eq.s32.totalorder %s40, 3
      %p647 = por %p645, %p646
      %p649 = scmp.ne.s32.totalorder %s632, %s648
      %p650 = scmp.eq.s32.totalorder %s40, 0
      %p651 = por %p649, %p650
      %s652 = ssub.s32 %s42, %s49
      %p653 = scmp.eq.s32.totalorder %s652, 0
      %s655 = sadd.s32 %s654, 1
      %s656 = scalar_select %p653, %s654, %s655
      %p659 = pneg %p653
      %p660 = scmp.eq.s32.totalorder %s34, 3
      %p661 = por %p659, %p660
      %p662 = scmp.ne.s32.totalorder %s654, %s657
      %p663 = scmp.eq.s32.totalorder %s34, 0
      %p664 = por %p662, %p663
      %p665 = scmp.ne.s32.totalorder %s654, %s657
      %p666 = scmp.eq.s32.totalorder %s39, 3
      %p667 = por %p665, %p666
      %p668 = scmp.ne.s32.totalorder %s657, %s658
      %p669 = scmp.eq.s32.totalorder %s39, 0
      %p670 = por %p668, %p669
      %p671 = scmp.ne.s32.totalorder %s657, %s658
      %p672 = scmp.eq.s32.totalorder %s40, 3
      %p673 = por %p671, %p672
      %p675 = scmp.ne.s32.totalorder %s658, %s674
      %p676 = scmp.eq.s32.totalorder %s40, 0
      %p677 = por %p675, %p676
      %s678 = ssub.s32 %s42, %s49
      %p679 = scmp.eq.s32.totalorder %s678, 0
      %s681 = sadd.s32 %s680, 1
      %s682 = scalar_select %p679, %s680, %s681
      %p685 = pneg %p679
      %p686 = scmp.eq.s32.totalorder %s34, 3
      %p687 = por %p685, %p686
      %p688 = scmp.ne.s32.totalorder %s680, %s683
      %p689 = scmp.eq.s32.totalorder %s34, 0
      %p690 = por %p688, %p689
      %p691 = scmp.ne.s32.totalorder %s680, %s683
      %p692 = scmp.eq.s32.totalorder %s39, 3
      %p693 = por %p691, %p692
      %p694 = scmp.ne.s32.totalorder %s683, %s684
      %p695 = scmp.eq.s32.totalorder %s39, 0
      %p696 = por %p694, %p695
      %p697 = scmp.ne.s32.totalorder %s683, %s684
      %p698 = scmp.eq.s32.totalorder %s40, 3
      %p699 = por %p697, %p698
      %p701 = scmp.ne.s32.totalorder %s684, %s700
      %p702 = scmp.eq.s32.totalorder %s40, 0
      %p703 = por %p701, %p702
      %s704 = ssub.s32 %s41, %s53
      %p705 = scmp.eq.s32.totalorder %s704, 0
      %s707 = sadd.s32 %s706, 1
      %s708 = scalar_select %p705, %s706, %s707
      %p711 = pneg %p705
      %p712 = scmp.eq.s32.totalorder %s34, 3
      %p713 = por %p711, %p712
      %p714 = scmp.ne.s32.totalorder %s706, %s709
      %p715 = scmp.eq.s32.totalorder %s34, 0
      %p716 = por %p714, %p715
      %p717 = scmp.ne.s32.totalorder %s706, %s709
      %p718 = scmp.eq.s32.totalorder %s39, 3
      %p719 = por %p717, %p718
      %p720 = scmp.ne.s32.totalorder %s709, %s710
      %p721 = scmp.eq.s32.totalorder %s39, 0
      %p722 = por %p720, %p721
      %p723 = scmp.ne.s32.totalorder %s709, %s710
      %p724 = scmp.eq.s32.totalorder %s40, 3
      %p725 = por %p723, %p724
      %p727 = scmp.ne.s32.totalorder %s710, %s726
      %p728 = scmp.eq.s32.totalorder %s40, 0
      %p729 = por %p727, %p728
      %p730 = scmp.le.s32.totalorder 1, %s34
      %p731 = scmp.lt.s32.totalorder %s34, 5
      %p732 = pnand %p730, %p731
      %p733 = pneg %p732
      // Predicated region
      $region9: #{decoder_forward.1} parent=5 // pred_check
        _
      $region10: #{decoder_forward.1} parent=5 // pred_check_branch
        %735 = sbr.rel (%p732) target = $region12
      $region11: #{decoder_forward.1} parent=5 // pred_region
        %s736 = ssub.s32 %s34, 1
      $region12: #{decoder_forward.1} parent=5 // pred_fallthru
        _
      %p737 = scmp.lt.s32.totalorder %s34, 4
      // Predicated region
      $region13: #{decoder_forward.1} parent=5 // pred_check
        %p738 = pneg %p737
      $region14: #{decoder_forward.1} parent=5 // pred_check_branch
        %740 = sbr.rel (%p738) target = $region16
      $region15: #{decoder_forward.1} parent=5 // pred_region
        // Predicated region
        $region17: #{decoder_forward.1} parent=15 // pred_check
          %p741 = pneg %p66
        $region18: #{decoder_forward.1} parent=15 // pred_check_branch
          %743 = sbr.rel (%p741) target = $region20
        $region19: #{decoder_forward.1} parent=15 // pred_region
          %p744 = scmp.lt.s32.totalorder %s41, 1
          %s745 = scalar_select %p744, %s41, 1
          %s746 = smul.addr %s745, 8
          %s747 = scalar_lea.vmem %s0, %s746
        $region20: #{decoder_forward.1} parent=15 // pred_fallthru
          _
        // Predicated region
        $region21: #{decoder_forward.1} parent=15 // pred_check
          %p748 = pneg %p92
        $region22: #{decoder_forward.1} parent=15 // pred_check_branch
          %750 = sbr.rel (%p748) target = $region24
        $region23: #{decoder_forward.1} parent=15 // pred_region
          %p751 = scmp.lt.s32.totalorder %s41, 1
          %s752 = scalar_select %p751, %s41, 1
          %s753 = smul.addr %s752, 2
          %s754 = smul.addr %s753, 8
          %s755 = scalar_lea.vmem %s1, %s754
        $region24: #{decoder_forward.1} parent=15 // pred_fallthru
          _
        // Predicated region
        $region25: #{decoder_forward.1} parent=15 // pred_check
          %p756 = pneg %p118
        $region26: #{decoder_forward.1} parent=15 // pred_check_branch
          %758 = sbr.rel (%p756) target = $region28
        $region27: #{decoder_forward.1} parent=15 // pred_region
          %p759 = scmp.lt.s32.totalorder %s41, 1
          %s760 = scalar_select %p759, %s41, 1
          %s761 = scalar_lea.vmem %s2, %s760
        $region28: #{decoder_forward.1} parent=15 // pred_fallthru
          _
        // Predicated region
        $region29: #{decoder_forward.1} parent=15 // pred_check
          %p762 = pneg %p144
        $region30: #{decoder_forward.1} parent=15 // pred_check_branch
          %764 = sbr.rel (%p762) target = $region32
        $region31: #{decoder_forward.1} parent=15 // pred_region
          %p765 = scmp.lt.s32.totalorder %s41, 1
          %s766 = scalar_select %p765, %s41, 1
          %s767 = scalar_lea.vmem %s3, %s766
        $region32: #{decoder_forward.1} parent=15 // pred_fallthru
          _
        // Predicated region
        $region33: #{decoder_forward.1} parent=15 // pred_check
          %p768 = pneg %p170
        $region34: #{decoder_forward.1} parent=15 // pred_check_branch
          %770 = sbr.rel (%p768) target = $region36
        $region35: #{decoder_forward.1} parent=15 // pred_region
          %p771 = scmp.lt.s32.totalorder %s41, 1
          %s772 = scalar_select %p771, %s41, 1
          %s773 = smul.addr %s772, 8
          %s774 = scalar_lea.vmem %s4, %s773
        $region36: #{decoder_forward.1} parent=15 // pred_fallthru
          _
        // Predicated region
        $region37: #{decoder_forward.1} parent=15 // pred_check
          %p775 = pneg %p196
        $region38: #{decoder_forward.1} parent=15 // pred_check_branch
          %777 = sbr.rel (%p775) target = $region40
        $region39: #{decoder_forward.1} parent=15 // pred_region
          %p778 = scmp.lt.s32.totalorder %s42, 1
          %s779 = scalar_select %p778, %s42, 1
          %s780 = smul.addr %s779, 4
          %s781 = smul.addr %s780, 4
          %s782 = scalar_lea.vmem %s5, %s781
        $region40: #{decoder_forward.1} parent=15 // pred_fallthru
          _
        // Predicated region
        $region41: #{decoder_forward.1} parent=15 // pred_check
          %p783 = pneg %p222
        $region42: #{decoder_forward.1} parent=15 // pred_check_branch
          %785 = sbr.rel (%p783) target = $region44
        $region43: #{decoder_forward.1} parent=15 // pred_region
          %p786 = scmp.lt.s32.totalorder %s42, 1
          %s787 = scalar_select %p786, %s42, 1
          %s788 = scalar_lea.vmem %s6, %s787
        $region44: #{decoder_forward.1} parent=15 // pred_fallthru
          _
        // Predicated region
        $region45: #{decoder_forward.1} parent=15 // pred_check
          %p789 = pneg %p248
        $region46: #{decoder_forward.1} parent=15 // pred_check_branch
          %791 = sbr.rel (%p789) target = $region48
        $region47: #{decoder_forward.1} parent=15 // pred_region
          %p792 = scmp.lt.s32.totalorder %s42, 1
          %s793 = scalar_select %p792, %s42, 1
          %s794 = smul.addr %s793, 4
          %s795 = smul.addr %s794, 4
          %s796 = scalar_lea.vmem %s7, %s795
        $region48: #{decoder_forward.1} parent=15 // pred_fallthru
          _
        // Predicated region
        $region49: #{decoder_forward.1} parent=15 // pred_check
          %p797 = pneg %p274
        $region50: #{decoder_forward.1} parent=15 // pred_check_branch
          %799 = sbr.rel (%p797) target = $region52
        $region51: #{decoder_forward.1} parent=15 // pred_region
          %p800 = scmp.lt.s32.totalorder %s42, 1
          %s801 = scalar_select %p800, %s42, 1
          %s802 = scalar_lea.vmem %s8, %s801
        $region52: #{decoder_forward.1} parent=15 // pred_fallthru
          _
        // Predicated region
        $region53: #{decoder_forward.1} parent=15 // pred_check
          %p803 = pneg %p300
        $region54: #{decoder_forward.1} parent=15 // pred_check_branch
          %805 = sbr.rel (%p803) target = $region56
        $region55: #{decoder_forward.1} parent=15 // pred_region
          %p806 = scmp.lt.s32.totalorder %s42, 1
          %s807 = scalar_select %p806, %s42, 1
          %s808 = scalar_lea.vmem %s9, %s807
        $region56: #{decoder_forward.1} parent=15 // pred_fallthru
          _
        // Predicated region
        $region57: #{decoder_forward.1} parent=15 // pred_check
          %p809 = pneg %p326
        $region58: #{decoder_forward.1} parent=15 // pred_check_branch
          %811 = sbr.rel (%p809) target = $region60
        $region59: #{decoder_forward.1} parent=15 // pred_region
          %p812 = scmp.lt.s32.totalorder %s42, 1
          %s813 = scalar_select %p812, %s42, 1
          %s814 = scalar_lea.vmem %s10, %s813
        $region60: #{decoder_forward.1} parent=15 // pred_fallthru
          _
        // Predicated region
        $region61: #{decoder_forward.1} parent=15 // pred_check
          %p815 = pneg %p352
        $region62: #{decoder_forward.1} parent=15 // pred_check_branch
          %817 = sbr.rel (%p815) target = $region64
        $region63: #{decoder_forward.1} parent=15 // pred_region
          %p818 = scmp.lt.s32.totalorder %s42, 1
          %s819 = scalar_select %p818, %s42, 1
          %s820 = smul.addr %s819, 4
          %s821 = smul.addr %s820, 4
          %s822 = scalar_lea.vmem %s11, %s821
        $region64: #{decoder_forward.1} parent=15 // pred_fallthru
          _
        // Predicated region
        $region65: #{decoder_forward.1} parent=15 // pred_check
          %p823 = pneg %p378
        $region66: #{decoder_forward.1} parent=15 // pred_check_branch
          %825 = sbr.rel (%p823) target = $region68
        $region67: #{decoder_forward.1} parent=15 // pred_region
          %p826 = scmp.lt.s32.totalorder %s42, 1
          %s827 = scalar_select %p826, %s42, 1
          %s828 = scalar_lea.vmem %s12, %s827
        $region68: #{decoder_forward.1} parent=15 // pred_fallthru
          _
        // Predicated region
        $region69: #{decoder_forward.1} parent=15 // pred_check
          %p829 = pneg %p404
        $region70: #{decoder_forward.1} parent=15 // pred_check_branch
          %831 = sbr.rel (%p829) target = $region72
        $region71: #{decoder_forward.1} parent=15 // pred_region
          %p832 = scmp.lt.s32.totalorder %s42, 1
          %s833 = scalar_select %p832, %s42, 1
          %s834 = smul.addr %s833, 4
          %s835 = smul.addr %s834, 4
          %s836 = scalar_lea.vmem %s13, %s835
        $region72: #{decoder_forward.1} parent=15 // pred_fallthru
          _
        // Predicated region
        $region73: #{decoder_forward.1} parent=15 // pred_check
          %p837 = pneg %p430
        $region74: #{decoder_forward.1} parent=15 // pred_check_branch
          %839 = sbr.rel (%p837) target = $region76
        $region75: #{decoder_forward.1} parent=15 // pred_region
          %p840 = scmp.lt.s32.totalorder %s42, 1
          %s841 = scalar_select %p840, %s42, 1
          %s842 = scalar_lea.vmem %s14, %s841
        $region76: #{decoder_forward.1} parent=15 // pred_fallthru
          _
        // Predicated region
        $region77: #{decoder_forward.1} parent=15 // pred_check
          %p843 = pneg %p456
        $region78: #{decoder_forward.1} parent=15 // pred_check_branch
          %845 = sbr.rel (%p843) target = $region80
        $region79: #{decoder_forward.1} parent=15 // pred_region
          %p846 = scmp.lt.s32.totalorder %s42, 1
          %s847 = scalar_select %p846, %s42, 1
          %s848 = smul.addr %s847, 4
          %s849 = smul.addr %s848, 4
          %s850 = scalar_lea.vmem %s15, %s849
        $region80: #{decoder_forward.1} parent=15 // pred_fallthru
          _
        // Predicated region
        $region81: #{decoder_forward.1} parent=15 // pred_check
          %p851 = pneg %p482
        $region82: #{decoder_forward.1} parent=15 // pred_check_branch
          %853 = sbr.rel (%p851) target = $region84
        $region83: #{decoder_forward.1} parent=15 // pred_region
          %p854 = scmp.lt.s32.totalorder %s42, 1
          %s855 = scalar_select %p854, %s42, 1
          %s856 = scalar_lea.vmem %s16, %s855
        $region84: #{decoder_forward.1} parent=15 // pred_fallthru
          _
        // Predicated region
        $region85: #{decoder_forward.1} parent=15 // pred_check
          %p857 = pneg %p508
        $region86: #{decoder_forward.1} parent=15 // pred_check_branch
          %859 = sbr.rel (%p857) target = $region88
        $region87: #{decoder_forward.1} parent=15 // pred_region
          %p860 = scmp.lt.s32.totalorder %s42, 1
          %s861 = scalar_select %p860, %s42, 1
          %s862 = scalar_lea.vmem %s17, %s861
        $region88: #{decoder_forward.1} parent=15 // pred_fallthru
          _
        // Predicated region
        $region89: #{decoder_forward.1} parent=15 // pred_check
          %p863 = pneg %p534
        $region90: #{decoder_forward.1} parent=15 // pred_check_branch
          %865 = sbr.rel (%p863) target = $region92
        $region91: #{decoder_forward.1} parent=15 // pred_region
          %p866 = scmp.lt.s32.totalorder %s42, 1
          %s867 = scalar_select %p866, %s42, 1
          %s868 = scalar_lea.vmem %s18, %s867
        $region92: #{decoder_forward.1} parent=15 // pred_fallthru
          _
        // Predicated region
        $region93: #{decoder_forward.1} parent=15 // pred_check
          %p869 = pneg %p560
        $region94: #{decoder_forward.1} parent=15 // pred_check_branch
          %871 = sbr.rel (%p869) target = $region96
        $region95: #{decoder_forward.1} parent=15 // pred_region
          %p872 = scmp.lt.s32.totalorder %s42, 1
          %s873 = scalar_select %p872, %s42, 1
          %s874 = smul.addr %s873, 4
          %s875 = smul.addr %s874, 4
          %s876 = scalar_lea.vmem %s19, %s875
        $region96: #{decoder_forward.1} parent=15 // pred_fallthru
          _
        // Predicated region
        $region97: #{decoder_forward.1} parent=15 // pred_check
          %p877 = pneg %p586
        $region98: #{decoder_forward.1} parent=15 // pred_check_branch
          %879 = sbr.rel (%p877) target = $region100
        $region99: #{decoder_forward.1} parent=15 // pred_region
          %p880 = scmp.lt.s32.totalorder %s42, 1
          %s881 = scalar_select %p880, %s42, 1
          %s882 = scalar_lea.vmem %s20, %s881
        $region100: #{decoder_forward.1} parent=15 // pred_fallthru
          _
        // Predicated region
        $region101: #{decoder_forward.1} parent=15 // pred_check
          %p883 = pneg %p612
        $region102: #{decoder_forward.1} parent=15 // pred_check_branch
          %885 = sbr.rel (%p883) target = $region104
        $region103: #{decoder_forward.1} parent=15 // pred_region
          %p886 = scmp.lt.s32.totalorder %s42, 1
          %s887 = scalar_select %p886, %s42, 1
          %s888 = smul.addr %s887, 8
          %s889 = smul.addr %s888, 4
          %s890 = scalar_lea.vmem %s21, %s889
        $region104: #{decoder_forward.1} parent=15 // pred_fallthru
          _
        // Predicated region
        $region105: #{decoder_forward.1} parent=15 // pred_check
          %p891 = pneg %p638
        $region106: #{decoder_forward.1} parent=15 // pred_check_branch
          %893 = sbr.rel (%p891) target = $region108
        $region107: #{decoder_forward.1} parent=15 // pred_region
          %p894 = scmp.lt.s32.totalorder %s42, 1
          %s895 = scalar_select %p894, %s42, 1
          %s896 = scalar_lea.vmem %s22, %s895
        $region108: #{decoder_forward.1} parent=15 // pred_fallthru
          _
        // Predicated region
        $region109: #{decoder_forward.1} parent=15 // pred_check
          %p897 = pneg %p664
        $region110: #{decoder_forward.1} parent=15 // pred_check_branch
          %899 = sbr.rel (%p897) target = $region112
        $region111: #{decoder_forward.1} parent=15 // pred_region
          %p900 = scmp.lt.s32.totalorder %s42, 1
          %s901 = scalar_select %p900, %s42, 1
          %s902 = scalar_lea.vmem %s23, %s901
        $region112: #{decoder_forward.1} parent=15 // pred_fallthru
          _
        // Predicated region
        $region113: #{decoder_forward.1} parent=15 // pred_check
          %p903 = pneg %p690
        $region114: #{decoder_forward.1} parent=15 // pred_check_branch
          %905 = sbr.rel (%p903) target = $region116
        $region115: #{decoder_forward.1} parent=15 // pred_region
          %p906 = scmp.lt.s32.totalorder %s42, 1
          %s907 = scalar_select %p906, %s42, 1
          %s908 = scalar_lea.vmem %s24, %s907
        $region116: #{decoder_forward.1} parent=15 // pred_fallthru
          _
      $region16: #{decoder_forward.1} parent=5 // pred_fallthru
        _
      %p909 = scmp.le.s32.totalorder 1, %s34
      %p910 = scmp.lt.s32.totalorder %s34, 5
      %p911 = pnand %p909, %p910
      %p912 = pneg %p911
      // Predicated region
      $region117: #{decoder_forward.1} parent=5 // pred_check
        _
      $region118: #{decoder_forward.1} parent=5 // pred_check_branch
        %914 = sbr.rel (%p911) target = $region120
      $region119: #{decoder_forward.1} parent=5 // pred_region
        %s915 = ssub.s32 %s34, 1
        %p916 = scmp.lt.s32.totalorder %s43, 1
        %s917 = scalar_select %p916, %s43, 1
        %s918 = smul.addr %s917, 8
        %s919 = scalar_lea.vmem %s0, %s918
        %p920 = pneg %p72
        %p921 = pneg %p69
        %p922 = scmp.lt.s32.totalorder %s43, 1
        %s923 = scalar_select %p922, %s43, 1
        %s924 = smul.addr %s923, 2
        %s925 = smul.addr %s924, 8
        %s926 = scalar_lea.vmem %s1, %s925
        %p927 = pneg %p98
        %p928 = pneg %p95
        %p929 = scmp.lt.s32.totalorder %s43, 1
        %s930 = scalar_select %p929, %s43, 1
        %s931 = scalar_lea.vmem %s2, %s930
        %p932 = pneg %p124
        %p933 = pneg %p121
        %p934 = scmp.lt.s32.totalorder %s43, 1
        %s935 = scalar_select %p934, %s43, 1
        %s936 = scalar_lea.vmem %s3, %s935
        %p937 = pneg %p150
        %p938 = pneg %p147
        %p939 = scmp.lt.s32.totalorder %s43, 1
        %s940 = scalar_select %p939, %s43, 1
        %s941 = smul.addr %s940, 8
        %s942 = scalar_lea.vmem %s4, %s941
        %p943 = pneg %p176
        %p944 = pneg %p173
        %p945 = scmp.lt.s32.totalorder %s44, 1
        %s946 = scalar_select %p945, %s44, 1
        %s947 = smul.addr %s946, 4
        %s948 = smul.addr %s947, 4
        %s949 = scalar_lea.vmem %s5, %s948
        %p950 = pneg %p202
        %p951 = pneg %p199
        %p952 = scmp.lt.s32.totalorder %s44, 1
        %s953 = scalar_select %p952, %s44, 1
        %s954 = scalar_lea.vmem %s6, %s953
        %p955 = pneg %p228
        %p956 = pneg %p225
        %p957 = scmp.lt.s32.totalorder %s44, 1
        %s958 = scalar_select %p957, %s44, 1
        %s959 = smul.addr %s958, 4
        %s960 = smul.addr %s959, 4
        %s961 = scalar_lea.vmem %s7, %s960
        %p962 = pneg %p254
        %p963 = pneg %p251
        %p964 = scmp.lt.s32.totalorder %s44, 1
        %s965 = scalar_select %p964, %s44, 1
        %s966 = scalar_lea.vmem %s8, %s965
        %p967 = pneg %p280
        %p968 = pneg %p277
        %p969 = scmp.lt.s32.totalorder %s44, 1
        %s970 = scalar_select %p969, %s44, 1
        %s971 = scalar_lea.vmem %s9, %s970
        %p972 = pneg %p306
        %p973 = pneg %p303
        %p974 = scmp.lt.s32.totalorder %s44, 1
        %s975 = scalar_select %p974, %s44, 1
        %s976 = scalar_lea.vmem %s10, %s975
        %p977 = pneg %p332
        %p978 = pneg %p329
        %p979 = scmp.lt.s32.totalorder %s44, 1
        %s980 = scalar_select %p979, %s44, 1
        %s981 = smul.addr %s980, 4
        %s982 = smul.addr %s981, 4
        %s983 = scalar_lea.vmem %s11, %s982
        %p984 = pneg %p358
        %p985 = pneg %p355
        %p986 = scmp.lt.s32.totalorder %s44, 1
        %s987 = scalar_select %p986, %s44, 1
        %s988 = scalar_lea.vmem %s12, %s987
        %p989 = pneg %p384
        %p990 = pneg %p381
        %p991 = scmp.lt.s32.totalorder %s44, 1
        %s992 = scalar_select %p991, %s44, 1
        %s993 = smul.addr %s992, 4
        %s994 = smul.addr %s993, 4
        %s995 = scalar_lea.vmem %s13, %s994
        %p996 = pneg %p410
        %p997 = pneg %p407
        %p998 = scmp.lt.s32.totalorder %s44, 1
        %s999 = scalar_select %p998, %s44, 1
        %s1000 = scalar_lea.vmem %s14, %s999
        %p1001 = pneg %p436
        %p1002 = pneg %p433
        %p1003 = scmp.lt.s32.totalorder %s44, 1
        %s1004 = scalar_select %p1003, %s44, 1
        %s1005 = smul.addr %s1004, 4
        %s1006 = smul.addr %s1005, 4
        %s1007 = scalar_lea.vmem %s15, %s1006
        %p1008 = pneg %p462
        %p1009 = pneg %p459
        %p1010 = scmp.lt.s32.totalorder %s44, 1
        %s1011 = scalar_select %p1010, %s44, 1
        %s1012 = scalar_lea.vmem %s16, %s1011
        %p1013 = pneg %p488
        %p1014 = pneg %p485
        %p1015 = scmp.lt.s32.totalorder %s44, 1
        %s1016 = scalar_select %p1015, %s44, 1
        %s1017 = scalar_lea.vmem %s17, %s1016
        %p1018 = pneg %p514
        %p1019 = pneg %p511
        %p1020 = scmp.lt.s32.totalorder %s44, 1
        %s1021 = scalar_select %p1020, %s44, 1
        %s1022 = scalar_lea.vmem %s18, %s1021
        %p1023 = pneg %p540
        %p1024 = pneg %p537
        %p1025 = scmp.lt.s32.totalorder %s44, 1
        %s1026 = scalar_select %p1025, %s44, 1
        %s1027 = smul.addr %s1026, 4
        %s1028 = smul.addr %s1027, 4
        %s1029 = scalar_lea.vmem %s19, %s1028
        %p1030 = pneg %p566
        %p1031 = pneg %p563
        %p1032 = scmp.lt.s32.totalorder %s44, 1
        %s1033 = scalar_select %p1032, %s44, 1
        %s1034 = scalar_lea.vmem %s20, %s1033
        %p1035 = pneg %p592
        %p1036 = pneg %p589
        %p1037 = scmp.lt.s32.totalorder %s44, 1
        %s1038 = scalar_select %p1037, %s44, 1
        %s1039 = smul.addr %s1038, 8
        %s1040 = smul.addr %s1039, 4
        %s1041 = scalar_lea.vmem %s21, %s1040
        %p1042 = pneg %p618
        %p1043 = pneg %p615
        %p1044 = scmp.lt.s32.totalorder %s44, 1
        %s1045 = scalar_select %p1044, %s44, 1
        %s1046 = scalar_lea.vmem %s22, %s1045
        %p1047 = pneg %p644
        %p1048 = pneg %p641
        %p1049 = scmp.lt.s32.totalorder %s44, 1
        %s1050 = scalar_select %p1049, %s44, 1
        %s1051 = scalar_lea.vmem %s23, %s1050
        %p1052 = pneg %p670
        %p1053 = pneg %p667
        %p1054 = scmp.lt.s32.totalorder %s44, 1
        %s1055 = scalar_select %p1054, %s44, 1
        %s1056 = scalar_lea.vmem %s24, %s1055
        %p1057 = pneg %p696
        %p1058 = pneg %p693
        %p1059 = pneg %p722
        %p1060 = pneg %p719
        %s1061 = sand.u32 %s709, 1
        %s1062 = scalar_lea.sflag [#allocation3], %s1061
        %s1063 = sand.u32 %s709, 1
        %s1064 = smul.addr %s1063, 8
        %s1065 = scalar_lea.vmem [#allocation2], %s1064
        %p1066 = scmp.lt.s32.totalorder %s43, 1
        %s1067 = scalar_select %p1066, %s43, 1
        %s1068 = smul.addr %s1067, 8
        %s1069 = scalar_lea.vmem %s0, %s1068
        %p1070 = scmp.lt.s32.totalorder %s43, 1
        %s1071 = scalar_select %p1070, %s43, 1
        %s1072 = smul.addr %s1071, 2
        %s1073 = smul.addr %s1072, 8
        %s1074 = scalar_lea.vmem %s1, %s1073
        %p1075 = scmp.lt.s32.totalorder %s43, 1
        %s1076 = scalar_select %p1075, %s43, 1
        %s1077 = scalar_lea.vmem %s2, %s1076
        %p1078 = scmp.lt.s32.totalorder %s43, 1
        %s1079 = scalar_select %p1078, %s43, 1
        %s1080 = scalar_lea.vmem %s3, %s1079
        %p1081 = scmp.lt.s32.totalorder %s43, 1
        %s1082 = scalar_select %p1081, %s43, 1
        %s1083 = smul.addr %s1082, 8
        %s1084 = scalar_lea.vmem %s4, %s1083
        %p1085 = scmp.lt.s32.totalorder %s44, 1
        %s1086 = scalar_select %p1085, %s44, 1
        %s1087 = smul.addr %s1086, 4
        %s1088 = smul.addr %s1087, 4
        %s1089 = scalar_lea.vmem %s5, %s1088
        %p1090 = scmp.lt.s32.totalorder %s44, 1
        %s1091 = scalar_select %p1090, %s44, 1
        %s1092 = scalar_lea.vmem %s6, %s1091
        %p1093 = scmp.lt.s32.totalorder %s44, 1
        %s1094 = scalar_select %p1093, %s44, 1
        %s1095 = smul.addr %s1094, 4
        %s1096 = smul.addr %s1095, 4
        %s1097 = scalar_lea.vmem %s7, %s1096
        %p1098 = scmp.lt.s32.totalorder %s44, 1
        %s1099 = scalar_select %p1098, %s44, 1
        %s1100 = scalar_lea.vmem %s8, %s1099
        %p1101 = scmp.lt.s32.totalorder %s44, 1
        %s1102 = scalar_select %p1101, %s44, 1
        %s1103 = scalar_lea.vmem %s9, %s1102
        %p1104 = scmp.lt.s32.totalorder %s44, 1
        %s1105 = scalar_select %p1104, %s44, 1
        %s1106 = scalar_lea.vmem %s10, %s1105
        %p1107 = scmp.lt.s32.totalorder %s44, 1
        %s1108 = scalar_select %p1107, %s44, 1
        %s1109 = smul.addr %s1108, 4
        %s1110 = smul.addr %s1109, 4
        %s1111 = scalar_lea.vmem %s11, %s1110
        %p1112 = scmp.lt.s32.totalorder %s44, 1
        %s1113 = scalar_select %p1112, %s44, 1
        %s1114 = scalar_lea.vmem %s12, %s1113
        %p1115 = scmp.lt.s32.totalorder %s44, 1
        %s1116 = scalar_select %p1115, %s44, 1
        %s1117 = smul.addr %s1116, 4
        %s1118 = smul.addr %s1117, 4
        %s1119 = scalar_lea.vmem %s13, %s1118
        %p1120 = scmp.lt.s32.totalorder %s44, 1
        %s1121 = scalar_select %p1120, %s44, 1
        %s1122 = scalar_lea.vmem %s14, %s1121
        %p1123 = scmp.lt.s32.totalorder %s44, 1
        %s1124 = scalar_select %p1123, %s44, 1
        %s1125 = smul.addr %s1124, 4
        %s1126 = smul.addr %s1125, 4
        %s1127 = scalar_lea.vmem %s15, %s1126
        %p1128 = scmp.lt.s32.totalorder %s44, 1
        %s1129 = scalar_select %p1128, %s44, 1
        %s1130 = scalar_lea.vmem %s16, %s1129
        %p1131 = scmp.lt.s32.totalorder %s44, 1
        %s1132 = scalar_select %p1131, %s44, 1
        %s1133 = scalar_lea.vmem %s17, %s1132
        %p1134 = scmp.lt.s32.totalorder %s44, 1
        %s1135 = scalar_select %p1134, %s44, 1
        %s1136 = scalar_lea.vmem %s18, %s1135
        %p1137 = scmp.lt.s32.totalorder %s44, 1
        %s1138 = scalar_select %p1137, %s44, 1
        %s1139 = smul.addr %s1138, 4
        %s1140 = smul.addr %s1139, 4
        %s1141 = scalar_lea.vmem %s19, %s1140
        %p1142 = scmp.lt.s32.totalorder %s44, 1
        %s1143 = scalar_select %p1142, %s44, 1
        %s1144 = scalar_lea.vmem %s20, %s1143
        %p1145 = scmp.lt.s32.totalorder %s44, 1
        %s1146 = scalar_select %p1145, %s44, 1
        %s1147 = smul.addr %s1146, 8
        %s1148 = smul.addr %s1147, 4
        %s1149 = scalar_lea.vmem %s21, %s1148
        %p1150 = scmp.lt.s32.totalorder %s44, 1
        %s1151 = scalar_select %p1150, %s44, 1
        %s1152 = scalar_lea.vmem %s22, %s1151
        %p1153 = scmp.lt.s32.totalorder %s44, 1
        %s1154 = scalar_select %p1153, %s44, 1
        %s1155 = scalar_lea.vmem %s23, %s1154
        %p1156 = scmp.lt.s32.totalorder %s44, 1
        %s1157 = scalar_select %p1156, %s44, 1
        %s1158 = scalar_lea.vmem %s24, %s1157
        %p1160 = scmp.eq.s32.totalorder %s44, 0
        // Predicated region
        $region121: #{decoder_forward.1} parent=119 // pred_check
          %p1161 = pneg %p1160
        $region122: #{decoder_forward.1} parent=119 // pred_check_branch
          %1163 = sbr.rel (%p1161) target = $region124
        $region123: #{decoder_forward.1} parent=119 // pred_region
          %v1164 = vld [vmem:[%s1069] sm:$0xff]
          %vm1165 = vcmask 261120
          %1166 = vst.msk [vmem:[%s1065] sm:$0xff] %vm1165, %v1164
        $region124: #{decoder_forward.1} parent=119 // pred_fallthru
          _
        %v1167 = vld [vmem:[%s1065] sm:$0xff]
        %v1168 = vld [vmem:[%s1084] sm:$0xff]
        %v1169 = vld [vmem:[%s1077] sm:$0x1]
        %v1170 = vld [vmem:[%s1080] sm:$0x1]
        %v1171 = vpack.c.bf16 %v1167, %v1167
        %v1172 = vld [vmem:[%s1089] sm:$0xf]
        %v1173 = vld [vmem:[%s1089 + $0x4] sm:$0xf]
        %v1174 = vld [vmem:[%s1089 + $0x8] sm:$0xf]
        %v1175 = vld [vmem:[%s1089 + $0xc] sm:$0xf]
        %v1176 = vld [vmem:[%s1092] sm:$0x1]
        %v1178 = vlaneseq
        %v1179 = vshrl.u32 %v1178, 7
        %v1180 = vsub.s32 0, %v1179
        %v1181 = vrot.slane %v1176, %v1180
        %v1187 = vunpack.c.l.b16 %v1172
        %v1188 = vunpack.c.l.b16 %v1173
        %v1189 = vunpack.c.l.b16 %v1174
        %v1190 = vunpack.c.l.b16 %v1175
        %v1191 = vpack.c.b16 %v1188, %v1187
        %v1192 = vpack.c.b16 %v1190, %v1189
        %vm1195 = vcmask 261120
        %v1197 = vsel %vm1195, %v1171, 0
        %1199 = vmatprep.subr.bf16.mxu0 0
        %1200 = vmatpush1.bf16.msra.mxu0 %v1191
        %1201 = vmatprep.subr.bf16.mxu0 0
        %1202 = vmatpush1.bf16.msra.mxu0 %v1192
        %1203 = vmatprep.subr.bf16.mxu0 0
        %1204 = vmatpush1.bf16.msra.mxu0 0
        %1205 = vmatprep.subr.bf16.mxu0 0
        %1206 = vmatpush1.bf16.msra.mxu0 0
        %1207 = vmatprep.subr.bf16.mxu0 0
        %1208 = vmatpush1.bf16.msra.mxu0 0
        %1209 = vmatprep.subr.bf16.mxu0 0
        %1210 = vmatpush1.bf16.msra.mxu0 0
        %1211 = vmatprep.subr.bf16.mxu0 0
        %1212 = vmatpush1.bf16.msra.mxu0 0
        %1213 = vmatprep.subr.bf16.mxu0 0
        %1214 = vmatpush1.bf16.msra.mxu0 0
        %1215 = vmatprep.subr.bf16.mxu0 0
        %1216 = vmatpush1.bf16.msra.mxu0 0
        %1217 = vmatprep.subr.bf16.mxu0 0
        %1218 = vmatpush1.bf16.msra.mxu0 0
        %1219 = vmatprep.subr.bf16.mxu0 0
        %1220 = vmatpush1.bf16.msra.mxu0 0
        %1221 = vmatprep.subr.bf16.mxu0 0
        %1222 = vmatpush1.bf16.msra.mxu0 0
        %1223 = vmatprep.subr.bf16.mxu0 0
        %1224 = vmatpush1.bf16.msra.mxu0 0
        %1225 = vmatprep.subr.bf16.mxu0 0
        %1226 = vmatpush1.bf16.msra.mxu0 0
        %1227 = vmatprep.subr.bf16.mxu0 0
        %1228 = vmatpush1.bf16.msra.mxu0 0
        %1229 = vmatprep.subr.bf16.mxu0 0
        %1230 = vmatpush1.bf16.msra.mxu0 0
        %1231 = vmatprep.mubr.bf16.mxu0 0
        %1232 = vmatmul.mubr.bf16.gmra.mrb[0].mxu0 %v1197
        %v1233 = vpop.f32.mrb[0].mxu0
        %v1234 = vadd.f32 %v1181, %v1233
        %v1235 = vpop.f32.mrb[0].mxu0
        %v1236 = vpop.f32.mrb[0].mxu0
        %v1237 = vpop.f32.mrb[0].mxu0
        %1238 = vdwg.mxu0
        %v1239 = vld [vmem:[%s1097] sm:$0xf]
        %v1240 = vld [vmem:[%s1097 + $0x4] sm:$0xf]
        %v1241 = vld [vmem:[%s1097 + $0x8] sm:$0xf]
        %v1242 = vld [vmem:[%s1097 + $0xc] sm:$0xf]
        %v1243 = vld [vmem:[%s1100] sm:$0x1]
        %v1244 = vld [vmem:[%s1103] sm:$0x1]
        %v1245 = vld [vmem:[%s1106] sm:$0x1]
        %v1246 = vpack.c.bf16 %v1234, %v1234
        %v1248 = vlaneseq
        %v1249 = vshrl.u32 %v1248, 7
        %v1250 = vsub.s32 0, %v1249
        %v1251 = vrot.slane %v1169, %v1250
        %1254 = vrot.lane.b32.xlu0 %v1246, 96
        %v1255 = vpop.permute.xlu0 %1254
        %vm1256 = vcmask 130048
        %v1258 = vsel %vm1256, %v1246, 0
        %v1261 = vsel %vm1256, %v1255, 0
        %1263 = vmatprep.subr.bf16.mxu0 0
        %1264 = vmatpush1.bf16.xpose.msra.mxu0 %v1261
        %1265 = vmatprep.subr.bf16.mxu0 0
        %1266 = vmatpush1.bf16.xpose.msra.mxu0 0
        %1267 = vmatprep.subr.bf16.mxu0 0
        %1268 = vmatpush1.bf16.xpose.msra.mxu0 0
        %1269 = vmatprep.subr.bf16.mxu0 0
        %1270 = vmatpush1.bf16.xpose.msra.mxu0 0
        %1271 = vmatprep.subr.bf16.mxu0 0
        %1272 = vmatpush1.bf16.xpose.msra.mxu0 0
        %1273 = vmatprep.subr.bf16.mxu0 0
        %1274 = vmatpush1.bf16.xpose.msra.mxu0 0
        %1275 = vmatprep.subr.bf16.mxu0 0
        %1276 = vmatpush1.bf16.xpose.msra.mxu0 0
        %1277 = vmatprep.subr.bf16.mxu0 0
        %1278 = vmatpush1.bf16.xpose.msra.mxu0 0
        %1279 = vmatprep.subr.bf16.mxu0 0
        %1280 = vmatpush1.bf16.xpose.msra.mxu0 0
        %1281 = vmatprep.subr.bf16.mxu0 0
        %1282 = vmatpush1.bf16.xpose.msra.mxu0 0
        %1283 = vmatprep.subr.bf16.mxu0 0
        %1284 = vmatpush1.bf16.xpose.msra.mxu0 0
        %1285 = vmatprep.subr.bf16.mxu0 0
        %1286 = vmatpush1.bf16.xpose.msra.mxu0 0
        %1287 = vmatprep.subr.bf16.mxu0 0
        %1288 = vmatpush1.bf16.xpose.msra.mxu0 0
        %1289 = vmatprep.subr.bf16.mxu0 0
        %1290 = vmatpush1.bf16.xpose.msra.mxu0 0
        %1291 = vmatprep.subr.bf16.mxu0 0
        %1292 = vmatpush1.bf16.xpose.msra.mxu0 0
        %1293 = vmatprep.subr.bf16.mxu0 0
        %1294 = vmatpush1.bf16.xpose.msra.mxu0 0
        %1295 = vmatprep.mubr.bf16.mxu0 0
        %1296 = vmatmul.mubr.bf16.gmra.mrb[0].mxu0 %v1258
        %v1297 = vpop.f32.mrb[0].mxu0
        %v1298 = vadd.f32 %v1251, %v1297
        %v1299 = vpop.f32.mrb[0].mxu0
        %v1300 = vpop.f32.mrb[0].mxu0
        %v1301 = vpop.f32.mrb[0].mxu0
        %1302 = vdwg.mxu0
        %vm1303 = vcmask 64512
        %v1304 = vsel %vm1303, %v1298, -inf
        %1305 = vmax.xlane.f32.xlu0 %v1304
        %v1306 = vpop.xlane.xlu0 %1305
        %v1307 = vsub.f32 %v1298, %v1306
        %v1308 = vmul.f32 %v1307, 1.442695
        %v1309 = vpow.pop %v1308
        %v1310 = vsel %vm1303, %v1309, 0.0
        %1311 = vadd.xlane.f32.xlu0 %v1310
        %v1312 = vpop.xlane.xlu0 %1311
        %v1313 = vrcp.pop %v1312
        %v1314 = vmul.f32 %v1309, %v1313
        %v1315 = vpack.c.bf16 %v1314, %v1314
        %1316 = vrot.lane.b32.xlu0 %v1246, 64
        %v1317 = vpop.permute.xlu0 %1316
        %v1319 = vsel %vm1303, %v1315, 0
        %vm1321 = vcmask 1043456
        %v1323 = vsel %vm1321, %v1317, 0
        %1325 = vmatprep.subr.bf16.mxu0 0
        %1326 = vmatpush1.bf16.msra.mxu0 %v1323
        %1327 = vmatprep.subr.bf16.mxu0 0
        %1328 = vmatpush1.bf16.msra.mxu0 0
        %1329 = vmatprep.subr.bf16.mxu0 0
        %1330 = vmatpush1.bf16.msra.mxu0 0
        %1331 = vmatprep.subr.bf16.mxu0 0
        %1332 = vmatpush1.bf16.msra.mxu0 0
        %1333 = vmatprep.subr.bf16.mxu0 0
        %1334 = vmatpush1.bf16.msra.mxu0 0
        %1335 = vmatprep.subr.bf16.mxu0 0
        %1336 = vmatpush1.bf16.msra.mxu0 0
        %1337 = vmatprep.subr.bf16.mxu0 0
        %1338 = vmatpush1.bf16.msra.mxu0 0
        %1339 = vmatprep.subr.bf16.mxu0 0
        %1340 = vmatpush1.bf16.msra.mxu0 0
        %1341 = vmatprep.subr.bf16.mxu0 0
        %1342 = vmatpush1.bf16.msra.mxu0 0
        %1343 = vmatprep.subr.bf16.mxu0 0
        %1344 = vmatpush1.bf16.msra.mxu0 0
        %1345 = vmatprep.subr.bf16.mxu0 0
        %1346 = vmatpush1.bf16.msra.mxu0 0
        %1347 = vmatprep.subr.bf16.mxu0 0
        %1348 = vmatpush1.bf16.msra.mxu0 0
        %1349 = vmatprep.subr.bf16.mxu0 0
        %1350 = vmatpush1.bf16.msra.mxu0 0
        %1351 = vmatprep.subr.bf16.mxu0 0
        %1352 = vmatpush1.bf16.msra.mxu0 0
        %1353 = vmatprep.subr.bf16.mxu0 0
        %1354 = vmatpush1.bf16.msra.mxu0 0
        %1355 = vmatprep.subr.bf16.mxu0 0
        %1356 = vmatpush1.bf16.msra.mxu0 0
        %1357 = vmatprep.mubr.bf16.mxu0 0
        %1358 = vmatmul.mubr.bf16.gmra.mrb[0].mxu0 %v1319
        %v1359 = vpop.f32.mrb[0].mxu0
        %v1360 = vadd.f32 0.0, %v1359
        %v1361 = vpop.f32.mrb[0].mxu0
        %v1362 = vpop.f32.mrb[0].mxu0
        %v1363 = vpop.f32.mrb[0].mxu0
        %1364 = vdwg.mxu0
        %1365 = vrot.lane.b32.xlu0 %v1246, 112
        %v1366 = vpop.permute.xlu0 %1365
        %1367 = vrot.lane.b32.xlu0 %v1246, 80
        %v1368 = vpop.permute.xlu0 %1367
        %v1370 = vsel %vm1256, %v1366, 0
        %v1373 = vsel %vm1256, %v1368, 0
        %1375 = vmatprep.subr.bf16.mxu0 0
        %1376 = vmatpush1.bf16.xpose.msra.mxu0 %v1373
        %1377 = vmatprep.subr.bf16.mxu0 0
        %1378 = vmatpush1.bf16.xpose.msra.mxu0 0
        %1379 = vmatprep.subr.bf16.mxu0 0
        %1380 = vmatpush1.bf16.xpose.msra.mxu0 0
        %1381 = vmatprep.subr.bf16.mxu0 0
        %1382 = vmatpush1.bf16.xpose.msra.mxu0 0
        %1383 = vmatprep.subr.bf16.mxu0 0
        %1384 = vmatpush1.bf16.xpose.msra.mxu0 0
        %1385 = vmatprep.subr.bf16.mxu0 0
        %1386 = vmatpush1.bf16.xpose.msra.mxu0 0
        %1387 = vmatprep.subr.bf16.mxu0 0
        %1388 = vmatpush1.bf16.xpose.msra.mxu0 0
        %1389 = vmatprep.subr.bf16.mxu0 0
        %1390 = vmatpush1.bf16.xpose.msra.mxu0 0
        %1391 = vmatprep.subr.bf16.mxu0 0
        %1392 = vmatpush1.bf16.xpose.msra.mxu0 0
        %1393 = vmatprep.subr.bf16.mxu0 0
        %1394 = vmatpush1.bf16.xpose.msra.mxu0 0
        %1395 = vmatprep.subr.bf16.mxu0 0
        %1396 = vmatpush1.bf16.xpose.msra.mxu0 0
        %1397 = vmatprep.subr.bf16.mxu0 0
        %1398 = vmatpush1.bf16.xpose.msra.mxu0 0
        %1399 = vmatprep.subr.bf16.mxu0 0
        %1400 = vmatpush1.bf16.xpose.msra.mxu0 0
        %1401 = vmatprep.subr.bf16.mxu0 0
        %1402 = vmatpush1.bf16.xpose.msra.mxu0 0
        %1403 = vmatprep.subr.bf16.mxu0 0
        %1404 = vmatpush1.bf16.xpose.msra.mxu0 0
        %1405 = vmatprep.subr.bf16.mxu0 0
        %1406 = vmatpush1.bf16.xpose.msra.mxu0 0
        %1407 = vmatprep.mubr.bf16.mxu0 0
        %1408 = vmatmul.mubr.bf16.gmra.mrb[0].mxu0 %v1370
        %v1409 = vpop.f32.mrb[0].mxu0
        %v1410 = vadd.f32 %v1251, %v1409
        %v1411 = vpop.f32.mrb[0].mxu0
        %v1412 = vpop.f32.mrb[0].mxu0
        %v1413 = vpop.f32.mrb[0].mxu0
        %1414 = vdwg.mxu0
        %v1415 = vsel %vm1303, %v1410, -inf
        %1416 = vmax.xlane.f32.xlu0 %v1415
        %v1417 = vpop.xlane.xlu0 %1416
        %v1418 = vsub.f32 %v1410, %v1417
        %v1419 = vmul.f32 %v1418, 1.442695
        %v1420 = vpow.pop %v1419
        %v1421 = vsel %vm1303, %v1420, 0.0
        %1422 = vadd.xlane.f32.xlu0 %v1421
        %v1423 = vpop.xlane.xlu0 %1422
        %v1424 = vrcp.pop %v1423
        %v1425 = vmul.f32 %v1420, %v1424
        %v1426 = vpack.c.bf16 %v1425, %v1425
        %1427 = vrot.lane.b32.xlu0 %v1246, 48
        %v1428 = vpop.permute.xlu0 %1427
        %v1430 = vsel %vm1303, %v1426, 0
        %v1433 = vsel %vm1321, %v1428, 0
        %1435 = vmatprep.subr.bf16.mxu0 0
        %1436 = vmatpush1.bf16.msra.mxu0 %v1433
        %1437 = vmatprep.subr.bf16.mxu0 0
        %1438 = vmatpush1.bf16.msra.mxu0 0
        %1439 = vmatprep.subr.bf16.mxu0 0
        %1440 = vmatpush1.bf16.msra.mxu0 0
        %1441 = vmatprep.subr.bf16.mxu0 0
        %1442 = vmatpush1.bf16.msra.mxu0 0
        %1443 = vmatprep.subr.bf16.mxu0 0
        %1444 = vmatpush1.bf16.msra.mxu0 0
        %1445 = vmatprep.subr.bf16.mxu0 0
        %1446 = vmatpush1.bf16.msra.mxu0 0
        %1447 = vmatprep.subr.bf16.mxu0 0
        %1448 = vmatpush1.bf16.msra.mxu0 0
        %1449 = vmatprep.subr.bf16.mxu0 0
        %1450 = vmatpush1.bf16.msra.mxu0 0
        %1451 = vmatprep.subr.bf16.mxu0 0
        %1452 = vmatpush1.bf16.msra.mxu0 0
        %1453 = vmatprep.subr.bf16.mxu0 0
        %1454 = vmatpush1.bf16.msra.mxu0 0
        %1455 = vmatprep.subr.bf16.mxu0 0
        %1456 = vmatpush1.bf16.msra.mxu0 0
        %1457 = vmatprep.subr.bf16.mxu0 0
        %1458 = vmatpush1.bf16.msra.mxu0 0
        %1459 = vmatprep.subr.bf16.mxu0 0
        %1460 = vmatpush1.bf16.msra.mxu0 0
        %1461 = vmatprep.subr.bf16.mxu0 0
        %1462 = vmatpush1.bf16.msra.mxu0 0
        %1463 = vmatprep.subr.bf16.mxu0 0
        %1464 = vmatpush1.bf16.msra.mxu0 0
        %1465 = vmatprep.subr.bf16.mxu0 0
        %1466 = vmatpush1.bf16.msra.mxu0 0
        %1467 = vmatprep.mubr.bf16.mxu0 0
        %1468 = vmatmul.mubr.bf16.gmra.mrb[0].mxu0 %v1430
        %v1469 = vpop.f32.mrb[0].mxu0
        %v1470 = vadd.f32 0.0, %v1469
        %v1471 = vpop.f32.mrb[0].mxu0
        %v1472 = vpop.f32.mrb[0].mxu0
        %v1473 = vpop.f32.mrb[0].mxu0
        %1474 = vdwg.mxu0
        %1476 = vrot.lane.b32.xlu0 %v1470, 16
        %v1477 = vpop.permute.xlu0 %1476
        %v1479 = vsel %vm1256, %v1360, %v1477
        %v1480 = vpack.c.bf16 %v1479, %v1479
        %v1482 = vlaneseq
        %v1483 = vshrl.u32 %v1482, 7
        %v1484 = vsub.s32 0, %v1483
        %v1485 = vrot.slane %v1243, %v1484
        %v1491 = vunpack.c.l.b16 %v1239
        %v1492 = vunpack.c.l.b16 %v1240
        %v1493 = vunpack.c.l.b16 %v1241
        %v1494 = vunpack.c.l.b16 %v1242
        %v1495 = vpack.c.b16 %v1492, %v1491
        %v1496 = vpack.c.b16 %v1494, %v1493
        %v1500 = vsel %vm1195, %v1480, 0
        %1502 = vmatprep.subr.bf16.mxu0 0
        %1503 = vmatpush1.bf16.msra.mxu0 %v1495
        %1504 = vmatprep.subr.bf16.mxu0 0
        %1505 = vmatpush1.bf16.msra.mxu0 %v1496
        %1506 = vmatprep.subr.bf16.mxu0 0
        %1507 = vmatpush1.bf16.msra.mxu0 0
        %1508 = vmatprep.subr.bf16.mxu0 0
        %1509 = vmatpush1.bf16.msra.mxu0 0
        %1510 = vmatprep.subr.bf16.mxu0 0
        %1511 = vmatpush1.bf16.msra.mxu0 0
        %1512 = vmatprep.subr.bf16.mxu0 0
        %1513 = vmatpush1.bf16.msra.mxu0 0
        %1514 = vmatprep.subr.bf16.mxu0 0
        %1515 = vmatpush1.bf16.msra.mxu0 0
        %1516 = vmatprep.subr.bf16.mxu0 0
        %1517 = vmatpush1.bf16.msra.mxu0 0
        %1518 = vmatprep.subr.bf16.mxu0 0
        %1519 = vmatpush1.bf16.msra.mxu0 0
        %1520 = vmatprep.subr.bf16.mxu0 0
        %1521 = vmatpush1.bf16.msra.mxu0 0
        %1522 = vmatprep.subr.bf16.mxu0 0
        %1523 = vmatpush1.bf16.msra.mxu0 0
        %1524 = vmatprep.subr.bf16.mxu0 0
        %1525 = vmatpush1.bf16.msra.mxu0 0
        %1526 = vmatprep.subr.bf16.mxu0 0
        %1527 = vmatpush1.bf16.msra.mxu0 0
        %1528 = vmatprep.subr.bf16.mxu0 0
        %1529 = vmatpush1.bf16.msra.mxu0 0
        %1530 = vmatprep.subr.bf16.mxu0 0
        %1531 = vmatpush1.bf16.msra.mxu0 0
        %1532 = vmatprep.subr.bf16.mxu0 0
        %1533 = vmatpush1.bf16.msra.mxu0 0
        %1534 = vmatprep.mubr.bf16.mxu0 0
        %1535 = vmatmul.mubr.bf16.gmra.mrb[0].mxu0 %v1500
        %v1536 = vpop.f32.mrb[0].mxu0
        %v1537 = vadd.f32 %v1485, %v1536
        %v1538 = vpop.f32.mrb[0].mxu0
        %v1539 = vpop.f32.mrb[0].mxu0
        %v1540 = vpop.f32.mrb[0].mxu0
        %1541 = vdwg.mxu0
        %v1542 = vadd.f32 %v1537, %v1167
        %v1543 = vsel %vm1195, %v1542, 0.0
        %1544 = vadd.xlane.f32.xlu0 %v1543
        %v1545 = vpop.xlane.xlu0 %1544
        %v1546 = vrcp.pop 32.0
        %v1547 = vmul.f32 %v1545, %v1546
        %v1548 = vsub.f32 %v1542, %v1547
        %v1549 = vmul.f32 %v1548, %v1548
        %v1550 = vsel %vm1195, %v1549, 0.0
        %1551 = vadd.xlane.f32.xlu0 %v1550
        %v1552 = vpop.xlane.xlu0 %1551
        %v1553 = vmul.f32 %v1552, %v1546
        %v1554 = vadd.f32 %v1553, 1e-05
        %v1555 = vrsqrt.pop %v1554
        %v1556 = vmul.f32 %v1548, %v1555
        %v1558 = vlaneseq
        %v1559 = vshrl.u32 %v1558, 7
        %v1560 = vsub.s32 0, %v1559
        %v1561 = vrot.slane %v1244, %v1560
        %v1563 = vmul.f32 %v1556, %v1561
        %v1565 = vlaneseq
        %v1566 = vshrl.u32 %v1565, 7
        %v1567 = vsub.s32 0, %v1566
        %v1568 = vrot.slane %v1245, %v1567
        %v1570 = vadd.f32 %v1563, %v1568
        %1572 = vset.pattern.permute.xlu0 0
        %1573 = vperm.xlu0 %1572, %v1168
        %v1574 = vpop.permute.xlu0 %1573
        %v1576 = vmul.f32 %v1570, %v1574
        %v1577 = vpack.c.bf16 %v1576, %v1576
        %v1578 = vld [vmem:[%s1111] sm:$0xf]
        %v1579 = vld [vmem:[%s1111 + $0x4] sm:$0xf]
        %v1580 = vld [vmem:[%s1111 + $0x8] sm:$0xf]
        %v1581 = vld [vmem:[%s1111 + $0xc] sm:$0xf]
        %v1582 = vld [vmem:[%s1114] sm:$0x1]
        %v1584 = vlaneseq
        %v1585 = vshrl.u32 %v1584, 7
        %v1586 = vsub.s32 0, %v1585
        %v1587 = vrot.slane %v1582, %v1586
        %v1593 = vunpack.c.l.b16 %v1578
        %v1594 = vunpack.c.l.b16 %v1579
        %v1595 = vunpack.c.l.b16 %v1580
        %v1596 = vunpack.c.l.b16 %v1581
        %v1597 = vpack.c.b16 %v1594, %v1593
        %v1598 = vpack.c.b16 %v1596, %v1595
        %v1602 = vsel %vm1195, %v1577, 0
        %1604 = vmatprep.subr.bf16.mxu0 0
        %1605 = vmatpush1.bf16.msra.mxu0 %v1597
        %1606 = vmatprep.subr.bf16.mxu0 0
        %1607 = vmatpush1.bf16.msra.mxu0 %v1598
        %1608 = vmatprep.subr.bf16.mxu0 0
        %1609 = vmatpush1.bf16.msra.mxu0 0
        %1610 = vmatprep.subr.bf16.mxu0 0
        %1611 = vmatpush1.bf16.msra.mxu0 0
        %1612 = vmatprep.subr.bf16.mxu0 0
        %1613 = vmatpush1.bf16.msra.mxu0 0
        %1614 = vmatprep.subr.bf16.mxu0 0
        %1615 = vmatpush1.bf16.msra.mxu0 0
        %1616 = vmatprep.subr.bf16.mxu0 0
        %1617 = vmatpush1.bf16.msra.mxu0 0
        %1618 = vmatprep.subr.bf16.mxu0 0
        %1619 = vmatpush1.bf16.msra.mxu0 0
        %1620 = vmatprep.subr.bf16.mxu0 0
        %1621 = vmatpush1.bf16.msra.mxu0 0
        %1622 = vmatprep.subr.bf16.mxu0 0
        %1623 = vmatpush1.bf16.msra.mxu0 0
        %1624 = vmatprep.subr.bf16.mxu0 0
        %1625 = vmatpush1.bf16.msra.mxu0 0
        %1626 = vmatprep.subr.bf16.mxu0 0
        %1627 = vmatpush1.bf16.msra.mxu0 0
        %1628 = vmatprep.subr.bf16.mxu0 0
        %1629 = vmatpush1.bf16.msra.mxu0 0
        %1630 = vmatprep.subr.bf16.mxu0 0
        %1631 = vmatpush1.bf16.msra.mxu0 0
        %1632 = vmatprep.subr.bf16.mxu0 0
        %1633 = vmatpush1.bf16.msra.mxu0 0
        %1634 = vmatprep.subr.bf16.mxu0 0
        %1635 = vmatpush1.bf16.msra.mxu0 0
        %1636 = vmatprep.mubr.bf16.mxu0 0
        %1637 = vmatmul.mubr.bf16.gmra.mrb[0].mxu0 %v1602
        %v1638 = vpop.f32.mrb[0].mxu0
        %v1639 = vadd.f32 %v1587, %v1638
        %v1640 = vpop.f32.mrb[0].mxu0
        %v1641 = vpop.f32.mrb[0].mxu0
        %v1642 = vpop.f32.mrb[0].mxu0
        %1643 = vdwg.mxu0
        %v1644 = vld [vmem:[%s1074] sm:$0xff]
        %v1645 = vld [vmem:[%s1074 + $0x8] sm:$0xff]
        %v1646 = vpack.c.bf16 %v1645, %v1644
        %v1647 = vld [vmem:[%s1119] sm:$0xf]
        %v1648 = vld [vmem:[%s1119 + $0x4] sm:$0xf]
        %v1649 = vld [vmem:[%s1119 + $0x8] sm:$0xf]
        %v1650 = vld [vmem:[%s1119 + $0xc] sm:$0xf]
        %v1651 = vld [vmem:[%s1122] sm:$0x1]
        %v1653 = vlaneseq
        %v1654 = vshrl.u32 %v1653, 7
        %v1655 = vsub.s32 0, %v1654
        %v1656 = vrot.slane %v1651, %v1655
        %v1662 = vunpack.c.l.b16 %v1647
        %v1663 = vunpack.c.l.b16 %v1648
        %v1664 = vunpack.c.l.b16 %v1649
        %v1665 = vunpack.c.l.b16 %v1650
        %v1666 = vpack.c.b16 %v1663, %v1662
        %v1667 = vpack.c.b16 %v1665, %v1664
        %v1671 = vsel %vm1195, %v1646, 0
        %1673 = vmatprep.subr.bf16.mxu0 0
        %1674 = vmatpush1.bf16.msra.mxu0 %v1666
        %1675 = vmatprep.subr.bf16.mxu0 0
        %1676 = vmatpush1.bf16.msra.mxu0 %v1667
        %1677 = vmatprep.subr.bf16.mxu0 0
        %1678 = vmatpush1.bf16.msra.mxu0 0
        %1679 = vmatprep.subr.bf16.mxu0 0
        %1680 = vmatpush1.bf16.msra.mxu0 0
        %1681 = vmatprep.subr.bf16.mxu0 0
        %1682 = vmatpush1.bf16.msra.mxu0 0
        %1683 = vmatprep.subr.bf16.mxu0 0
        %1684 = vmatpush1.bf16.msra.mxu0 0
        %1685 = vmatprep.subr.bf16.mxu0 0
        %1686 = vmatpush1.bf16.msra.mxu0 0
        %1687 = vmatprep.subr.bf16.mxu0 0
        %1688 = vmatpush1.bf16.msra.mxu0 0
        %1689 = vmatprep.subr.bf16.mxu0 0
        %1690 = vmatpush1.bf16.msra.mxu0 0
        %1691 = vmatprep.subr.bf16.mxu0 0
        %1692 = vmatpush1.bf16.msra.mxu0 0
        %1693 = vmatprep.subr.bf16.mxu0 0
        %1694 = vmatpush1.bf16.msra.mxu0 0
        %1695 = vmatprep.subr.bf16.mxu0 0
        %1696 = vmatpush1.bf16.msra.mxu0 0
        %1697 = vmatprep.subr.bf16.mxu0 0
        %1698 = vmatpush1.bf16.msra.mxu0 0
        %1699 = vmatprep.subr.bf16.mxu0 0
        %1700 = vmatpush1.bf16.msra.mxu0 0
        %1701 = vmatprep.subr.bf16.mxu0 0
        %1702 = vmatpush1.bf16.msra.mxu0 0
        %1703 = vmatprep.subr.bf16.mxu0 0
        %1704 = vmatpush1.bf16.msra.mxu0 0
        %1705 = vmatprep.mubr.bf16.mxu0 0
        %1706 = vmatmul.mubr.bf16.gmra.mrb[0].mxu0 %v1671
        %v1707 = vpop.f32.mrb[0].mxu0
        %v1708 = vadd.f32 %v1656, %v1707
        %v1709 = vpop.f32.mrb[0].mxu0
        %v1710 = vpop.f32.mrb[0].mxu0
        %v1711 = vadd.f32 %v1656, %v1710
        %v1712 = vpop.f32.mrb[0].mxu0
        %1713 = vdwg.mxu0
        %v1714 = vld [vmem:[%s1127] sm:$0xf]
        %v1715 = vld [vmem:[%s1127 + $0x4] sm:$0xf]
        %v1716 = vld [vmem:[%s1127 + $0x8] sm:$0xf]
        %v1717 = vld [vmem:[%s1127 + $0xc] sm:$0xf]
        %v1718 = vld [vmem:[%s1130] sm:$0x1]
        %v1719 = vld [vmem:[%s1133] sm:$0x1]
        %v1720 = vld [vmem:[%s1136] sm:$0x1]
        %v1721 = vpack.c.bf16 %v1639, %v1639
        %v1722 = vpack.c.bf16 %v1711, %v1708
        %v1724 = vlaneseq
        %v1725 = vshrl.u32 %v1724, 7
        %v1726 = vsub.s32 0, %v1725
        %v1727 = vrot.slane %v1170, %v1726
        %v1730 = vsel %vm1256, %v1721, 0
        %v1733 = vsel %vm1256, %v1722, 0
        %1735 = vmatprep.subr.bf16.mxu0 0
        %1736 = vmatpush1.bf16.xpose.msra.mxu0 %v1733
        %1737 = vmatprep.subr.bf16.mxu0 0
        %1738 = vmatpush1.bf16.xpose.msra.mxu0 0
        %1739 = vmatprep.subr.bf16.mxu0 0
        %1740 = vmatpush1.bf16.xpose.msra.mxu0 0
        %1741 = vmatprep.subr.bf16.mxu0 0
        %1742 = vmatpush1.bf16.xpose.msra.mxu0 0
        %1743 = vmatprep.subr.bf16.mxu0 0
        %1744 = vmatpush1.bf16.xpose.msra.mxu0 0
        %1745 = vmatprep.subr.bf16.mxu0 0
        %1746 = vmatpush1.bf16.xpose.msra.mxu0 0
        %1747 = vmatprep.subr.bf16.mxu0 0
        %1748 = vmatpush1.bf16.xpose.msra.mxu0 0
        %1749 = vmatprep.subr.bf16.mxu0 0
        %1750 = vmatpush1.bf16.xpose.msra.mxu0 0
        %1751 = vmatprep.subr.bf16.mxu0 0
        %1752 = vmatpush1.bf16.xpose.msra.mxu0 0
        %1753 = vmatprep.subr.bf16.mxu0 0
        %1754 = vmatpush1.bf16.xpose.msra.mxu0 0
        %1755 = vmatprep.subr.bf16.mxu0 0
        %1756 = vmatpush1.bf16.xpose.msra.mxu0 0
        %1757 = vmatprep.subr.bf16.mxu0 0
        %1758 = vmatpush1.bf16.xpose.msra.mxu0 0
        %1759 = vmatprep.subr.bf16.mxu0 0
        %1760 = vmatpush1.bf16.xpose.msra.mxu0 0
        %1761 = vmatprep.subr.bf16.mxu0 0
        %1762 = vmatpush1.bf16.xpose.msra.mxu0 0
        %1763 = vmatprep.subr.bf16.mxu0 0
        %1764 = vmatpush1.bf16.xpose.msra.mxu0 0
        %1765 = vmatprep.subr.bf16.mxu0 0
        %1766 = vmatpush1.bf16.xpose.msra.mxu0 0
        %1767 = vmatprep.mubr.bf16.mxu0 0
        %1768 = vmatmul.mubr.bf16.gmra.mrb[0].mxu0 %v1730
        %v1769 = vpop.f32.mrb[0].mxu0
        %v1770 = vadd.f32 %v1727, %v1769
        %v1771 = vpop.f32.mrb[0].mxu0
        %v1772 = vpop.f32.mrb[0].mxu0
        %v1773 = vpop.f32.mrb[0].mxu0
        %1774 = vdwg.mxu0
        %v1775 = vsel %vm1256, %v1770, -inf
        %1776 = vmax.xlane.f32.xlu0 %v1775
        %v1777 = vpop.xlane.xlu0 %1776
        %v1778 = vsub.f32 %v1770, %v1777
        %v1779 = vmul.f32 %v1778, 1.442695
        %v1780 = vpow.pop %v1779
        %v1781 = vsel %vm1256, %v1780, 0.0
        %1782 = vadd.xlane.f32.xlu0 %v1781
        %v1783 = vpop.xlane.xlu0 %1782
        %v1784 = vrcp.pop %v1783
        %v1785 = vmul.f32 %v1780, %v1784
        %v1786 = vpack.c.bf16 %v1785, %v1785
        %1788 = vrot.lane.b32.xlu0 %v1722, 96
        %v1789 = vpop.permute.xlu0 %1788
        %v1792 = vsel %vm1256, %v1786, 0
        %1794 = vmatprep.subr.bf16.mxu0 0
        %1795 = vmatpush1.bf16.msra.mxu0 %v1789
        %1796 = vmatprep.subr.bf16.mxu0 0
        %1797 = vmatpush1.bf16.msra.mxu0 0
        %1798 = vmatprep.subr.bf16.mxu0 0
        %1799 = vmatpush1.bf16.msra.mxu0 0
        %1800 = vmatprep.subr.bf16.mxu0 0
        %1801 = vmatpush1.bf16.msra.mxu0 0
        %1802 = vmatprep.subr.bf16.mxu0 0
        %1803 = vmatpush1.bf16.msra.mxu0 0
        %1804 = vmatprep.subr.bf16.mxu0 0
        %1805 = vmatpush1.bf16.msra.mxu0 0
        %1806 = vmatprep.subr.bf16.mxu0 0
        %1807 = vmatpush1.bf16.msra.mxu0 0
        %1808 = vmatprep.subr.bf16.mxu0 0
        %1809 = vmatpush1.bf16.msra.mxu0 0
        %1810 = vmatprep.subr.bf16.mxu0 0
        %1811 = vmatpush1.bf16.msra.mxu0 0
        %1812 = vmatprep.subr.bf16.mxu0 0
        %1813 = vmatpush1.bf16.msra.mxu0 0
        %1814 = vmatprep.subr.bf16.mxu0 0
        %1815 = vmatpush1.bf16.msra.mxu0 0
        %1816 = vmatprep.subr.bf16.mxu0 0
        %1817 = vmatpush1.bf16.msra.mxu0 0
        %1818 = vmatprep.subr.bf16.mxu0 0
        %1819 = vmatpush1.bf16.msra.mxu0 0
        %1820 = vmatprep.subr.bf16.mxu0 0
        %1821 = vmatpush1.bf16.msra.mxu0 0
        %1822 = vmatprep.subr.bf16.mxu0 0
        %1823 = vmatpush1.bf16.msra.mxu0 0
        %1824 = vmatprep.subr.bf16.mxu0 0
        %1825 = vmatpush1.bf16.msra.mxu0 0
        %1826 = vmatprep.mubr.bf16.mxu0 0
        %1827 = vmatmul.mubr.bf16.gmra.mrb[0].mxu0 %v1792
        %v1828 = vpop.f32.mrb[0].mxu0
        %v1829 = vadd.f32 0.0, %v1828
        %v1830 = vpop.f32.mrb[0].mxu0
        %v1831 = vpop.f32.mrb[0].mxu0
        %v1832 = vpop.f32.mrb[0].mxu0
        %1833 = vdwg.mxu0
        %1835 = vrot.lane.b32.xlu0 %v1721, 112
        %v1836 = vpop.permute.xlu0 %1835
        %1837 = vrot.lane.b32.xlu0 %v1722, 112
        %v1838 = vpop.permute.xlu0 %1837
        %v1840 = vsel %vm1256, %v1836, 0
        %v1843 = vsel %vm1256, %v1838, 0
        %1845 = vmatprep.subr.bf16.mxu0 0
        %1846 = vmatpush1.bf16.xpose.msra.mxu0 %v1843
        %1847 = vmatprep.subr.bf16.mxu0 0
        %1848 = vmatpush1.bf16.xpose.msra.mxu0 0
        %1849 = vmatprep.subr.bf16.mxu0 0
        %1850 = vmatpush1.bf16.xpose.msra.mxu0 0
        %1851 = vmatprep.subr.bf16.mxu0 0
        %1852 = vmatpush1.bf16.xpose.msra.mxu0 0
        %1853 = vmatprep.subr.bf16.mxu0 0
        %1854 = vmatpush1.bf16.xpose.msra.mxu0 0
        %1855 = vmatprep.subr.bf16.mxu0 0
        %1856 = vmatpush1.bf16.xpose.msra.mxu0 0
        %1857 = vmatprep.subr.bf16.mxu0 0
        %1858 = vmatpush1.bf16.xpose.msra.mxu0 0
        %1859 = vmatprep.subr.bf16.mxu0 0
        %1860 = vmatpush1.bf16.xpose.msra.mxu0 0
        %1861 = vmatprep.subr.bf16.mxu0 0
        %1862 = vmatpush1.bf16.xpose.msra.mxu0 0
        %1863 = vmatprep.subr.bf16.mxu0 0
        %1864 = vmatpush1.bf16.xpose.msra.mxu0 0
        %1865 = vmatprep.subr.bf16.mxu0 0
        %1866 = vmatpush1.bf16.xpose.msra.mxu0 0
        %1867 = vmatprep.subr.bf16.mxu0 0
        %1868 = vmatpush1.bf16.xpose.msra.mxu0 0
        %1869 = vmatprep.subr.bf16.mxu0 0
        %1870 = vmatpush1.bf16.xpose.msra.mxu0 0
        %1871 = vmatprep.subr.bf16.mxu0 0
        %1872 = vmatpush1.bf16.xpose.msra.mxu0 0
        %1873 = vmatprep.subr.bf16.mxu0 0
        %1874 = vmatpush1.bf16.xpose.msra.mxu0 0
        %1875 = vmatprep.subr.bf16.mxu0 0
        %1876 = vmatpush1.bf16.xpose.msra.mxu0 0
        %1877 = vmatprep.mubr.bf16.mxu0 0
        %1878 = vmatmul.mubr.bf16.gmra.mrb[0].mxu0 %v1840
        %v1879 = vpop.f32.mrb[0].mxu0
        %v1880 = vadd.f32 %v1727, %v1879
        %v1881 = vpop.f32.mrb[0].mxu0
        %v1882 = vpop.f32.mrb[0].mxu0
        %v1883 = vpop.f32.mrb[0].mxu0
        %1884 = vdwg.mxu0
        %v1885 = vsel %vm1256, %v1880, -inf
        %1886 = vmax.xlane.f32.xlu0 %v1885
        %v1887 = vpop.xlane.xlu0 %1886
        %v1888 = vsub.f32 %v1880, %v1887
        %v1889 = vmul.f32 %v1888, 1.442695
        %v1890 = vpow.pop %v1889
        %v1891 = vsel %vm1256, %v1890, 0.0
        %1892 = vadd.xlane.f32.xlu0 %v1891
        %v1893 = vpop.xlane.xlu0 %1892
        %v1894 = vrcp.pop %v1893
        %v1895 = vmul.f32 %v1890, %v1894
        %v1896 = vpack.c.bf16 %v1895, %v1895
        %1897 = vrot.lane.b32.xlu0 %v1722, 80
        %v1898 = vpop.permute.xlu0 %1897
        %v1901 = vsel %vm1256, %v1896, 0
        %1903 = vmatprep.subr.bf16.mxu0 0
        %1904 = vmatpush1.bf16.msra.mxu0 %v1898
        %1905 = vmatprep.subr.bf16.mxu0 0
        %1906 = vmatpush1.bf16.msra.mxu0 0
        %1907 = vmatprep.subr.bf16.mxu0 0
        %1908 = vmatpush1.bf16.msra.mxu0 0
        %1909 = vmatprep.subr.bf16.mxu0 0
        %1910 = vmatpush1.bf16.msra.mxu0 0
        %1911 = vmatprep.subr.bf16.mxu0 0
        %1912 = vmatpush1.bf16.msra.mxu0 0
        %1913 = vmatprep.subr.bf16.mxu0 0
        %1914 = vmatpush1.bf16.msra.mxu0 0
        %1915 = vmatprep.subr.bf16.mxu0 0
        %1916 = vmatpush1.bf16.msra.mxu0 0
        %1917 = vmatprep.subr.bf16.mxu0 0
        %1918 = vmatpush1.bf16.msra.mxu0 0
        %1919 = vmatprep.subr.bf16.mxu0 0
        %1920 = vmatpush1.bf16.msra.mxu0 0
        %1921 = vmatprep.subr.bf16.mxu0 0
        %1922 = vmatpush1.bf16.msra.mxu0 0
        %1923 = vmatprep.subr.bf16.mxu0 0
        %1924 = vmatpush1.bf16.msra.mxu0 0
        %1925 = vmatprep.subr.bf16.mxu0 0
        %1926 = vmatpush1.bf16.msra.mxu0 0
        %1927 = vmatprep.subr.bf16.mxu0 0
        %1928 = vmatpush1.bf16.msra.mxu0 0
        %1929 = vmatprep.subr.bf16.mxu0 0
        %1930 = vmatpush1.bf16.msra.mxu0 0
        %1931 = vmatprep.subr.bf16.mxu0 0
        %1932 = vmatpush1.bf16.msra.mxu0 0
        %1933 = vmatprep.subr.bf16.mxu0 0
        %1934 = vmatpush1.bf16.msra.mxu0 0
        %1935 = vmatprep.mubr.bf16.mxu0 0
        %1936 = vmatmul.mubr.bf16.gmra.mrb[0].mxu0 %v1901
        %v1937 = vpop.f32.mrb[0].mxu0
        %v1938 = vadd.f32 0.0, %v1937
        %v1939 = vpop.f32.mrb[0].mxu0
        %v1940 = vpop.f32.mrb[0].mxu0
        %v1941 = vpop.f32.mrb[0].mxu0
        %1942 = vdwg.mxu0
        %1944 = vrot.lane.b32.xlu0 %v1938, 16
        %v1945 = vpop.permute.xlu0 %1944
        %v1947 = vsel %vm1256, %v1829, %v1945
        %v1948 = vpack.c.bf16 %v1947, %v1947
        %v1950 = vlaneseq
        %v1951 = vshrl.u32 %v1950, 7
        %v1952 = vsub.s32 0, %v1951
        %v1953 = vrot.slane %v1718, %v1952
        %v1959 = vunpack.c.l.b16 %v1714
        %v1960 = vunpack.c.l.b16 %v1715
        %v1961 = vunpack.c.l.b16 %v1716
        %v1962 = vunpack.c.l.b16 %v1717
        %v1963 = vpack.c.b16 %v1960, %v1959
        %v1964 = vpack.c.b16 %v1962, %v1961
        %v1968 = vsel %vm1195, %v1948, 0
        %1970 = vmatprep.subr.bf16.mxu0 0
        %1971 = vmatpush1.bf16.msra.mxu0 %v1963
        %1972 = vmatprep.subr.bf16.mxu0 0
        %1973 = vmatpush1.bf16.msra.mxu0 %v1964
        %1974 = vmatprep.subr.bf16.mxu0 0
        %1975 = vmatpush1.bf16.msra.mxu0 0
        %1976 = vmatprep.subr.bf16.mxu0 0
        %1977 = vmatpush1.bf16.msra.mxu0 0
        %1978 = vmatprep.subr.bf16.mxu0 0
        %1979 = vmatpush1.bf16.msra.mxu0 0
        %1980 = vmatprep.subr.bf16.mxu0 0
        %1981 = vmatpush1.bf16.msra.mxu0 0
        %1982 = vmatprep.subr.bf16.mxu0 0
        %1983 = vmatpush1.bf16.msra.mxu0 0
        %1984 = vmatprep.subr.bf16.mxu0 0
        %1985 = vmatpush1.bf16.msra.mxu0 0
        %1986 = vmatprep.subr.bf16.mxu0 0
        %1987 = vmatpush1.bf16.msra.mxu0 0
        %1988 = vmatprep.subr.bf16.mxu0 0
        %1989 = vmatpush1.bf16.msra.mxu0 0
        %1990 = vmatprep.subr.bf16.mxu0 0
        %1991 = vmatpush1.bf16.msra.mxu0 0
        %1992 = vmatprep.subr.bf16.mxu0 0
        %1993 = vmatpush1.bf16.msra.mxu0 0
        %1994 = vmatprep.subr.bf16.mxu0 0
        %1995 = vmatpush1.bf16.msra.mxu0 0
        %1996 = vmatprep.subr.bf16.mxu0 0
        %1997 = vmatpush1.bf16.msra.mxu0 0
        %1998 = vmatprep.subr.bf16.mxu0 0
        %1999 = vmatpush1.bf16.msra.mxu0 0
        %2000 = vmatprep.subr.bf16.mxu0 0
        %2001 = vmatpush1.bf16.msra.mxu0 0
        %2002 = vmatprep.mubr.bf16.mxu0 0
        %2003 = vmatmul.mubr.bf16.gmra.mrb[0].mxu0 %v1968
        %v2004 = vpop.f32.mrb[0].mxu0
        %v2005 = vadd.f32 %v1953, %v2004
        %v2006 = vpop.f32.mrb[0].mxu0
        %v2007 = vpop.f32.mrb[0].mxu0
        %v2008 = vpop.f32.mrb[0].mxu0
        %2009 = vdwg.mxu0
        %v2010 = vadd.f32 %v2005, %v1576
        %v2011 = vsel %vm1195, %v2010, 0.0
        %2012 = vadd.xlane.f32.xlu0 %v2011
        %v2013 = vpop.xlane.xlu0 %2012
        %v2014 = vmul.f32 %v2013, %v1546
        %v2015 = vsub.f32 %v2010, %v2014
        %v2016 = vmul.f32 %v2015, %v2015
        %v2017 = vsel %vm1195, %v2016, 0.0
        %2018 = vadd.xlane.f32.xlu0 %v2017
        %v2019 = vpop.xlane.xlu0 %2018
        %v2020 = vmul.f32 %v2019, %v1546
        %v2021 = vadd.f32 %v2020, 1e-05
        %v2022 = vrsqrt.pop %v2021
        %v2023 = vmul.f32 %v2015, %v2022
        %v2025 = vlaneseq
        %v2026 = vshrl.u32 %v2025, 7
        %v2027 = vsub.s32 0, %v2026
        %v2028 = vrot.slane %v1719, %v2027
        %v2030 = vmul.f32 %v2023, %v2028
        %v2032 = vlaneseq
        %v2033 = vshrl.u32 %v2032, 7
        %v2034 = vsub.s32 0, %v2033
        %v2035 = vrot.slane %v1720, %v2034
        %v2037 = vadd.f32 %v2030, %v2035
        %v2038 = vmul.f32 %v2037, %v1574
        %v2039 = vpack.c.bf16 %v2038, %v2038
        %v2040 = vld [vmem:[%s1141] sm:$0xf]
        %v2041 = vld [vmem:[%s1141 + $0x4] sm:$0xf]
        %v2042 = vld [vmem:[%s1141 + $0x8] sm:$0xf]
        %v2043 = vld [vmem:[%s1141 + $0xc] sm:$0xf]
        %v2044 = vld [vmem:[%s1144] sm:$0x1]
        %v2046 = vlaneseq
        %v2047 = vshrl.u32 %v2046, 7
        %v2048 = vsub.s32 0, %v2047
        %v2049 = vrot.slane %v2044, %v2048
        %v2055 = vunpack.c.l.b16 %v2040
        %v2056 = vunpack.c.l.b16 %v2041
        %v2057 = vunpack.c.l.b16 %v2042
        %v2058 = vunpack.c.l.b16 %v2043
        %v2059 = vpack.c.b16 %v2056, %v2055
        %v2060 = vpack.c.b16 %v2058, %v2057
        %v2064 = vsel %vm1195, %v2039, 0
        %2066 = vmatprep.subr.bf16.mxu0 0
        %2067 = vmatpush1.bf16.msra.mxu0 %v2059
        %2068 = vmatprep.subr.bf16.mxu0 0
        %2069 = vmatpush1.bf16.msra.mxu0 %v2060
        %2070 = vmatprep.subr.bf16.mxu0 0
        %2071 = vmatpush1.bf16.msra.mxu0 0
        %2072 = vmatprep.subr.bf16.mxu0 0
        %2073 = vmatpush1.bf16.msra.mxu0 0
        %2074 = vmatprep.subr.bf16.mxu0 0
        %2075 = vmatpush1.bf16.msra.mxu0 0
        %2076 = vmatprep.subr.bf16.mxu0 0
        %2077 = vmatpush1.bf16.msra.mxu0 0
        %2078 = vmatprep.subr.bf16.mxu0 0
        %2079 = vmatpush1.bf16.msra.mxu0 0
        %2080 = vmatprep.subr.bf16.mxu0 0
        %2081 = vmatpush1.bf16.msra.mxu0 0
        %2082 = vmatprep.subr.bf16.mxu0 0
        %2083 = vmatpush1.bf16.msra.mxu0 0
        %2084 = vmatprep.subr.bf16.mxu0 0
        %2085 = vmatpush1.bf16.msra.mxu0 0
        %2086 = vmatprep.subr.bf16.mxu0 0
        %2087 = vmatpush1.bf16.msra.mxu0 0
        %2088 = vmatprep.subr.bf16.mxu0 0
        %2089 = vmatpush1.bf16.msra.mxu0 0
        %2090 = vmatprep.subr.bf16.mxu0 0
        %2091 = vmatpush1.bf16.msra.mxu0 0
        %2092 = vmatprep.subr.bf16.mxu0 0
        %2093 = vmatpush1.bf16.msra.mxu0 0
        %2094 = vmatprep.subr.bf16.mxu0 0
        %2095 = vmatpush1.bf16.msra.mxu0 0
        %2096 = vmatprep.subr.bf16.mxu0 0
        %2097 = vmatpush1.bf16.msra.mxu0 0
        %2098 = vmatprep.mubr.bf16.mxu0 0
        %2099 = vmatmul.mubr.bf16.gmra.mrb[0].mxu0 %v2064
        %v2100 = vpop.f32.mrb[0].mxu0
        %v2101 = vadd.f32 %v2049, %v2100
        %v2102 = vpop.f32.mrb[0].mxu0
        %v2103 = vpop.f32.mrb[0].mxu0
        %v2104 = vpop.f32.mrb[0].mxu0
        %2105 = vdwg.mxu0
        %v2106 = vmax.f32 %v2101, 0.0
        %v2107 = vpack.c.bf16 %v2106, %v2106
        %v2108 = vld [vmem:[%s1149] sm:$0xf]
        %v2109 = vld [vmem:[%s1149 + $0x4] sm:$0xf]
        %v2110 = vld [vmem:[%s1149 + $0x8] sm:$0xf]
        %v2111 = vld [vmem:[%s1149 + $0xc] sm:$0xf]
        %v2112 = vld [vmem:[%s1149 + $0x10] sm:$0xf]
        %v2113 = vld [vmem:[%s1149 + $0x14] sm:$0xf]
        %v2114 = vld [vmem:[%s1149 + $0x18] sm:$0xf]
        %v2115 = vld [vmem:[%s1149 + $0x1c] sm:$0xf]
        %v2116 = vld [vmem:[%s1152] sm:$0x1]
        %v2118 = vlaneseq
        %v2119 = vshrl.u32 %v2118, 7
        %v2120 = vsub.s32 0, %v2119
        %v2121 = vrot.slane %v2116, %v2120
        %v2131 = vunpack.c.l.b16 %v2108
        %v2132 = vunpack.c.l.b16 %v2109
        %v2133 = vunpack.c.l.b16 %v2110
        %v2134 = vunpack.c.l.b16 %v2111
        %v2135 = vunpack.c.l.b16 %v2112
        %v2136 = vunpack.c.l.b16 %v2113
        %v2137 = vunpack.c.l.b16 %v2114
        %v2138 = vunpack.c.l.b16 %v2115
        %v2139 = vpack.c.b16 %v2132, %v2131
        %v2140 = vpack.c.b16 %v2134, %v2133
        %v2141 = vpack.c.b16 %v2136, %v2135
        %v2142 = vpack.c.b16 %v2138, %v2137
        %vm2147 = vcmask 523264
        %v2149 = vsel %vm2147, %v2107, 0
        %2151 = vmatprep.subr.bf16.mxu0 0
        %2152 = vmatpush1.bf16.msra.mxu0 %v2139
        %2153 = vmatprep.subr.bf16.mxu0 0
        %2154 = vmatpush1.bf16.msra.mxu0 %v2140
        %2155 = vmatprep.subr.bf16.mxu0 0
        %2156 = vmatpush1.bf16.msra.mxu0 %v2141
        %2157 = vmatprep.subr.bf16.mxu0 0
        %2158 = vmatpush1.bf16.msra.mxu0 %v2142
        %2159 = vmatprep.subr.bf16.mxu0 0
        %2160 = vmatpush1.bf16.msra.mxu0 0
        %2161 = vmatprep.subr.bf16.mxu0 0
        %2162 = vmatpush1.bf16.msra.mxu0 0
        %2163 = vmatprep.subr.bf16.mxu0 0
        %2164 = vmatpush1.bf16.msra.mxu0 0
        %2165 = vmatprep.subr.bf16.mxu0 0
        %2166 = vmatpush1.bf16.msra.mxu0 0
        %2167 = vmatprep.subr.bf16.mxu0 0
        %2168 = vmatpush1.bf16.msra.mxu0 0
        %2169 = vmatprep.subr.bf16.mxu0 0
        %2170 = vmatpush1.bf16.msra.mxu0 0
        %2171 = vmatprep.subr.bf16.mxu0 0
        %2172 = vmatpush1.bf16.msra.mxu0 0
        %2173 = vmatprep.subr.bf16.mxu0 0
        %2174 = vmatpush1.bf16.msra.mxu0 0
        %2175 = vmatprep.subr.bf16.mxu0 0
        %2176 = vmatpush1.bf16.msra.mxu0 0
        %2177 = vmatprep.subr.bf16.mxu0 0
        %2178 = vmatpush1.bf16.msra.mxu0 0
        %2179 = vmatprep.subr.bf16.mxu0 0
        %2180 = vmatpush1.bf16.msra.mxu0 0
        %2181 = vmatprep.subr.bf16.mxu0 0
        %2182 = vmatpush1.bf16.msra.mxu0 0
        %2183 = vmatprep.mubr.bf16.mxu0 0
        %2184 = vmatmul.mubr.bf16.gmra.mrb[0].mxu0 %v2149
        %v2185 = vpop.f32.mrb[0].mxu0
        %v2186 = vadd.f32 %v2121, %v2185
        %v2187 = vpop.f32.mrb[0].mxu0
        %v2188 = vpop.f32.mrb[0].mxu0
        %v2189 = vpop.f32.mrb[0].mxu0
        %2190 = vdwg.mxu0
        %v2191 = vadd.f32 %v2186, %v2038
        %v2192 = vld [vmem:[%s1155] sm:$0x1]
        %v2193 = vld [vmem:[%s1158] sm:$0x1]
        %v2194 = vsel %vm1195, %v2191, 0.0
        %2195 = vadd.xlane.f32.xlu0 %v2194
        %v2196 = vpop.xlane.xlu0 %2195
        %v2197 = vmul.f32 %v2196, %v1546
        %v2198 = vsub.f32 %v2191, %v2197
        %v2199 = vmul.f32 %v2198, %v2198
        %v2200 = vsel %vm1195, %v2199, 0.0
        %2201 = vadd.xlane.f32.xlu0 %v2200
        %v2202 = vpop.xlane.xlu0 %2201
        %v2203 = vmul.f32 %v2202, %v1546
        %v2204 = vadd.f32 %v2203, 1e-05
        %v2205 = vrsqrt.pop %v2204
        %v2206 = vmul.f32 %v2198, %v2205
        %v2208 = vlaneseq
        %v2209 = vshrl.u32 %v2208, 7
        %v2210 = vsub.s32 0, %v2209
        %v2211 = vrot.slane %v2192, %v2210
        %v2213 = vmul.f32 %v2206, %v2211
        %v2215 = vlaneseq
        %v2216 = vshrl.u32 %v2215, 7
        %v2217 = vsub.s32 0, %v2216
        %v2218 = vrot.slane %v2193, %v2217
        %v2220 = vadd.f32 %v2213, %v2218
        %v2221 = vmul.f32 %v2220, %v1574
        %2222 = vst.msk [vmem:[%s1065] sm:$0xff] %vm1195, %v2221
        %s2223 = sand.u32 %s709, 1
        %s2224 = scalar_lea.sflag [#allocation3], %s2223
        %s2225 = sand.u32 %s709, 1
        %s2226 = smul.addr %s2225, 8
        %s2227 = scalar_lea.vmem [#allocation2], %s2226
        // Predicated region
        $region125: #{decoder_forward.1} parent=119 // pred_check
          %p2228 = pneg %p719
        $region126: #{decoder_forward.1} parent=119 // pred_check_branch
          %2230 = sbr.rel (%p2228) target = $region128
        $region127: #{decoder_forward.1} parent=119 // pred_region
          %s2232 = ssub.s32 128, 128
          %2233 = vsyncadd %s2224, %s2232
          %s2234 = smul.addr %s43, 128
          %s2235 = scalar_lea.hbm %s25, %s2234
          %s2237 = sshll.u32 %s2227, 4
          %s2238 = int_to_ptr.vmem [resolvable:$true] %s2237
          %2240 = dma.vmem_to_hbm [thread:$0]  %s2238, 128, %s2235, %s2224
        $region128: #{decoder_forward.1} parent=119 // pred_fallthru
          _
      $region120: #{decoder_forward.1} parent=5 // pred_fallthru
        _
      %p2241 = scmp.le.s32.totalorder 2, %s34
      // Predicated region
      $region129: #{decoder_forward.1} parent=5 // pred_check
        %p2242 = pneg %p2241
      $region130: #{decoder_forward.1} parent=5 // pred_check_branch
        %2244 = sbr.rel (%p2242) target = $region132
      $region131: #{decoder_forward.1} parent=5 // pred_region
        %s2245 = ssub.s32 %s34, 2
        // Predicated region
        $region133: #{decoder_forward.1} parent=131 // pred_check
          %p2246 = pneg %p725
        $region134: #{decoder_forward.1} parent=131 // pred_check_branch
          %2248 = sbr.rel (%p2246) target = $region136
        $region135: #{decoder_forward.1} parent=131 // pred_region
          %s2249 = sand.u32 %s710, 1
          %s2250 = scalar_lea.sflag [#allocation3], %s2249
          %s2251 = sand.u32 %s710, 1
          %s2252 = smul.addr %s2251, 8
          %s2253 = scalar_lea.vmem [#allocation2], %s2252
          %2254 = dma.done %s2250, 128
        $region136: #{decoder_forward.1} parent=131 // pred_fallthru
          _
      $region132: #{decoder_forward.1} parent=5 // pred_fallthru
        _
    $region6: #{decoder_forward.1} parent=1 // loop_footer
      %s38 = sadd.s32 1, %s34
    $region7: #{decoder_forward.1} parent=1 // loop_footer_branch
      %33 = sbr.rel target = $region3
    $region8: #{decoder_forward.1} parent=1 // loop_exit
      _
    %2255 = vsyncpa [#allocation3], 1
    %s2256 = scalar_lea.sflag [#allocation3], 1
    %2257 = vsyncpa %s2256, 1

</llo_original>
